<compile_context>
chip_gen: v7x
topology: tpu7x:2x2x1
jax: 0.10.0
libtpu: 0.0.40
codegen_flags: <defaults>
</compile_context>

<pallas_src>
import jax
import jax.numpy as jnp
from jax.experimental import pallas as pl
from jax.experimental.pallas import tpu as pltpu

LANE = 128          # lane width: last dims padded to a multiple of this
TB = 8              # batch tile (sublane-aligned)
H1, H2, H3 = 1024, 1024, 512


def _round_up(x, m):
    return (x + m - 1) // m * m


def _mlp_kernel(x_ref,
                w1_ref, b1_ref,
                w2_ref, b2_ref,
                w3_ref, b3_ref,
                w4_ref, b4_ref,
                o_ref):
    """Whole MLP hot path: 4 bf16 MXU matmuls with f32 accumulation + bias + ReLU."""
    h = x_ref[...]                                                          # bf16 (TB, IN_PAD)

    h = jnp.dot(h, w1_ref[...], preferred_element_type=jnp.float32) + b1_ref[...]
    h = jnp.maximum(h, 0.0).astype(jnp.bfloat16)

    h = jnp.dot(h, w2_ref[...], preferred_element_type=jnp.float32) + b2_ref[...]
    h = jnp.maximum(h, 0.0).astype(jnp.bfloat16)

    h = jnp.dot(h, w3_ref[...], preferred_element_type=jnp.float32) + b3_ref[...]
    h = jnp.maximum(h, 0.0).astype(jnp.bfloat16)

    h = jnp.dot(h, w4_ref[...], preferred_element_type=jnp.float32) + b4_ref[...]
    h = jnp.maximum(h, 0.0)   # final ReLU is part of the module's nn.Sequential

    o_ref[...] = h.astype(o_ref.dtype)


def _run_mlp(x, kp):
    """One forward pass of the shared MLP over a (possibly fused) batch."""
    (w1, b1), (w2, b2), (w3, b3), (w4, b4) = kp["layers"]
    in_pad = w1.shape[0]
    out_pad = w4.shape[1]
    batch = x.shape[0]
    batch_pad = _round_up(max(batch, TB), TB)

    # Zero-pad batch to a multiple of TB and features to the lane-padded width; cast to bf16.
    xp = jnp.zeros((batch_pad, in_pad), jnp.bfloat16)
    xp = xp.at[:batch, : x.shape[1]].set(x.astype(jnp.bfloat16))

    grid = (batch_pad // TB,)

    flops = 2 * batch_pad * (in_pad * H1 + H1 * H2 + H2 * H3 + H3 * out_pad)
    bytes_accessed = (
        xp.size * 2                                                   # bf16 activations in
        + sum(w.size * 2 + b.size * 4 for (w, b) in kp["layers"])     # bf16 weights + f32 biases
        + batch_pad * out_pad * 4                                     # f32 output
    )

    def batch_map(i):
        return (i, 0)

    def const_map(i):
        return (0, 0)     # weights/biases: same block every iteration -> stay VMEM-resident

    out = pl.pallas_call(
        _mlp_kernel,
        out_shape=jax.ShapeDtypeStruct((batch_pad, out_pad), jnp.float32),
        grid=grid,
        in_specs=[
            pl.BlockSpec((TB, in_pad), batch_map),
            pl.BlockSpec((in_pad, H1), const_map),
            pl.BlockSpec((1, H1), const_map),
            pl.BlockSpec((H1, H2), const_map),
            pl.BlockSpec((1, H2), const_map),
            pl.BlockSpec((H2, H3), const_map),
            pl.BlockSpec((1, H3), const_map),
            pl.BlockSpec((H3, out_pad), const_map),
            pl.BlockSpec((1, out_pad), const_map),
        ],
        out_specs=pl.BlockSpec((TB, out_pad), batch_map),
        compiler_params=pltpu.CompilerParams(
            dimension_semantics=("parallel",),     # batch tiles shard across TCs on v7x
            vmem_limit_bytes=32 << 20,             # ~8 MiB used; explicit budget safe on v5e/v6e/v7x
        ),
        cost_estimate=pl.CostEstimate(
            flops=flops, transcendentals=0, bytes_accessed=bytes_accessed),
    )(xp, w1, b1, w2, b2, w3, b3, w4, b4)

    return out[:batch, : kp["output_size"]]


def siamese_net_forward(kp, x1, x2=None):
    """Mirrors SiameseNet.forward. Two-input path is fused into ONE kernel call."""
    if x2 is None:
        return _run_mlp(x1, kp)
    b1 = x1.shape[0]
    x = jnp.concatenate([x1, x2], axis=0)     # weights streamed HBM->VMEM once for both inputs
    z = _run_mlp(x, kp)
    return z[:b1], z[b1:]


def init_params(key, input_size, output_size):
    """Deterministic parameter init matching the nn.Linear shapes of the module (f32)."""
    dims = [(input_size, H1), (H1, H2), (H2, H3), (H3, output_size)]
    layers = []
    for i, (din, dout) in enumerate(dims):
        kw, kb = jax.random.split(jax.random.fold_in(key, i))
        scale = 1.0 / jnp.sqrt(jnp.float32(din))
        w = jax.random.uniform(kw, (din, dout), jnp.float32, -scale, scale)
        b = jax.random.uniform(kb, (1, dout), jnp.float32, -scale, scale)  # 2D bias for broadcast
        layers.append((w, b))
    return layers


def prepare_kernel_params(layers, input_size, output_size):
    """Lane-pad w1 rows / w4 cols to 128 and cast weights to bf16 (biases stay f32)."""
    in_pad = _round_up(input_size, LANE)
    out_pad = _round_up(output_size, LANE)
    (w1, b1), (w2, b2), (w3, b3), (w4, b4) = layers

    w1p = jnp.zeros((in_pad, H1), jnp.bfloat16).at[:input_size, :].set(w1.astype(jnp.bfloat16))
    w4p = jnp.zeros((H3, out_pad), jnp.bfloat16).at[:, :output_size].set(w4.astype(jnp.bfloat16))
    b4p = jnp.zeros((1, out_pad), jnp.float32).at[:, :output_size].set(b4)

    return {
        "layers": [
            (w1p, b1.astype(jnp.float32)),
            (w2.astype(jnp.bfloat16), b2.astype(jnp.float32)),
            (w3.astype(jnp.bfloat16), b3.astype(jnp.float32)),
            (w4p, b4p),
        ],
        "output_size": output_size,
    }


def reference_forward(layers, x):
    """Pure-JAX reference mirroring the kernel numerics (bf16 operands, f32 accumulate)."""
    h = x
    for (w, b) in layers:
        h = jnp.dot(h.astype(jnp.bfloat16), w.astype(jnp.bfloat16),
                    preferred_element_type=jnp.float32) + b
        h = jnp.maximum(h, 0.0)
    return h


if __name__ == "__main__":
    key = jax.random.PRNGKey(0)
    k_params, k_x1, k_x2 = jax.random.split(key, 3)

    batch = 8
    input_size = 32
    output_size = 32

    layers = init_params(k_params, input_size, output_size)
    kp = prepare_kernel_params(layers, input_size, output_size)

    x1 = jax.random.normal(k_x1, (batch, input_size), jnp.float32)
    x2 = jax.random.normal(k_x2, (batch, input_size), jnp.float32)

    # two-input (siamese) path: ONE fused kernel call
    z1, z2 = jax.block_until_ready(siamese_net_forward(kp, x1, x2))

    # single-input path
    z_single = jax.block_until_ready(siamese_net_forward(kp, x1))

    # sanity check vs pure-JAX reference (same bf16 weight quantization)
    ref1 = reference_forward(layers, x1)
    ref2 = reference_forward(layers, x2)
    assert jnp.allclose(z1, ref1, atol=5e-2, rtol=5e-2)
    assert jnp.allclose(z2, ref2, atol=5e-2, rtol=5e-2)
    assert jnp.allclose(z_single, ref1, atol=5e-2, rtol=5e-2)

    print("KERNEL_OK")
</pallas_src>

<mosaic_0001>
module attributes {stable_mosaic.version = 11 : i64} {
  func.func @_mlp_kernel(%arg0: i32, %arg1: memref<8x128xbf16, #tpu.memory_space<vmem>>, %arg2: memref<128x1024xbf16, #tpu.memory_space<vmem>>, %arg3: memref<1x1024xf32, #tpu.memory_space<vmem>>, %arg4: memref<1024x1024xbf16, #tpu.memory_space<vmem>>, %arg5: memref<1x1024xf32, #tpu.memory_space<vmem>>, %arg6: memref<1024x512xbf16, #tpu.memory_space<vmem>>, %arg7: memref<1x512xf32, #tpu.memory_space<vmem>>, %arg8: memref<512x128xbf16, #tpu.memory_space<vmem>>, %arg9: memref<1x128xf32, #tpu.memory_space<vmem>>, %arg10: memref<8x128xf32, #tpu.memory_space<vmem>>) attributes {dimension_semantics = [#tpu.dimension_semantics<parallel>], iteration_bounds = array<i64: 2>, scalar_prefetch = 0 : i64, scratch_operands = 0 : i64, tpu.core_type = #tpu.core_type<tc>, window_params = [{transform_indices = @transform_0, window_bounds = array<i64: 8, 128>}, {pipeline_mode = #tpu.pipeline_mode<synchronous>, transform_indices = @transform_1, window_bounds = array<i64: 128, 1024>}, {pipeline_mode = #tpu.pipeline_mode<synchronous>, transform_indices = @transform_2, window_bounds = array<i64: 1, 1024>}, {pipeline_mode = #tpu.pipeline_mode<synchronous>, transform_indices = @transform_3, window_bounds = array<i64: 1024, 1024>}, {pipeline_mode = #tpu.pipeline_mode<synchronous>, transform_indices = @transform_4, window_bounds = array<i64: 1, 1024>}, {pipeline_mode = #tpu.pipeline_mode<synchronous>, transform_indices = @transform_5, window_bounds = array<i64: 1024, 512>}, {pipeline_mode = #tpu.pipeline_mode<synchronous>, transform_indices = @transform_6, window_bounds = array<i64: 1, 512>}, {pipeline_mode = #tpu.pipeline_mode<synchronous>, transform_indices = @transform_7, window_bounds = array<i64: 512, 128>}, {pipeline_mode = #tpu.pipeline_mode<synchronous>, transform_indices = @transform_8, window_bounds = array<i64: 1, 128>}, {transform_indices = @transform_9, window_bounds = array<i64: 8, 128>}]} {
    %c0 = arith.constant 0 : index
    %c0_0 = arith.constant 0 : index
    %0 = vector.load %arg1[%c0, %c0_0] : memref<8x128xbf16, #tpu.memory_space<vmem>>, vector<8x128xbf16>
    %c0_1 = arith.constant 0 : index
    %c0_2 = arith.constant 0 : index
    %1 = vector.load %arg2[%c0_1, %c0_2] : memref<128x1024xbf16, #tpu.memory_space<vmem>>, vector<128x1024xbf16>
    %cst = arith.constant dense<0.000000e+00> : vector<8x1024xf32>
    %2 = tpu.matmul %0, %1, %cst {dimension_numbers = #tpu.dot_dimension_numbers<[1], [0], [0], [1], [0, 0, 1, 1], [], []>} : vector<8x128xbf16>, vector<128x1024xbf16>, vector<8x1024xf32> -> vector<8x1024xf32>
    %c0_3 = arith.constant 0 : index
    %c0_4 = arith.constant 0 : index
    %3 = vector.load %arg3[%c0_3, %c0_4] : memref<1x1024xf32, #tpu.memory_space<vmem>>, vector<1x1024xf32>
    %4 = vector.broadcast %3 : vector<1x1024xf32> to vector<8x1024xf32>
    %5 = arith.addf %2, %4 : vector<8x1024xf32>
    %cst_5 = arith.constant 0.000000e+00 : f32
    %6 = vector.broadcast %cst_5 : f32 to vector<8x1024xf32>
    %7 = arith.maximumf %5, %6 : vector<8x1024xf32>
    %8 = arith.truncf %7 : vector<8x1024xf32> to vector<8x1024xbf16>
    %c0_6 = arith.constant 0 : index
    %c0_7 = arith.constant 0 : index
    %9 = vector.load %arg4[%c0_6, %c0_7] : memref<1024x1024xbf16, #tpu.memory_space<vmem>>, vector<1024x1024xbf16>
    %cst_8 = arith.constant dense<0.000000e+00> : vector<8x1024xf32>
    %10 = tpu.matmul %8, %9, %cst_8 {dimension_numbers = #tpu.dot_dimension_numbers<[1], [0], [0], [1], [0, 0, 1, 1], [], []>} : vector<8x1024xbf16>, vector<1024x1024xbf16>, vector<8x1024xf32> -> vector<8x1024xf32>
    %c0_9 = arith.constant 0 : index
    %c0_10 = arith.constant 0 : index
    %11 = vector.load %arg5[%c0_9, %c0_10] : memref<1x1024xf32, #tpu.memory_space<vmem>>, vector<1x1024xf32>
    %12 = vector.broadcast %11 : vector<1x1024xf32> to vector<8x1024xf32>
    %13 = arith.addf %10, %12 : vector<8x1024xf32>
    %cst_11 = arith.constant 0.000000e+00 : f32
    %14 = vector.broadcast %cst_11 : f32 to vector<8x1024xf32>
    %15 = arith.maximumf %13, %14 : vector<8x1024xf32>
    %16 = arith.truncf %15 : vector<8x1024xf32> to vector<8x1024xbf16>
    %c0_12 = arith.constant 0 : index
    %c0_13 = arith.constant 0 : index
    %17 = vector.load %arg6[%c0_12, %c0_13] : memref<1024x512xbf16, #tpu.memory_space<vmem>>, vector<1024x512xbf16>
    %cst_14 = arith.constant dense<0.000000e+00> : vector<8x512xf32>
    %18 = tpu.matmul %16, %17, %cst_14 {dimension_numbers = #tpu.dot_dimension_numbers<[1], [0], [0], [1], [0, 0, 1, 1], [], []>} : vector<8x1024xbf16>, vector<1024x512xbf16>, vector<8x512xf32> -> vector<8x512xf32>
    %c0_15 = arith.constant 0 : index
    %c0_16 = arith.constant 0 : index
    %19 = vector.load %arg7[%c0_15, %c0_16] : memref<1x512xf32, #tpu.memory_space<vmem>>, vector<1x512xf32>
    %20 = vector.broadcast %19 : vector<1x512xf32> to vector<8x512xf32>
    %21 = arith.addf %18, %20 : vector<8x512xf32>
    %cst_17 = arith.constant 0.000000e+00 : f32
    %22 = vector.broadcast %cst_17 : f32 to vector<8x512xf32>
    %23 = arith.maximumf %21, %22 : vector<8x512xf32>
    %24 = arith.truncf %23 : vector<8x512xf32> to vector<8x512xbf16>
    %c0_18 = arith.constant 0 : index
    %c0_19 = arith.constant 0 : index
    %25 = vector.load %arg8[%c0_18, %c0_19] : memref<512x128xbf16, #tpu.memory_space<vmem>>, vector<512x128xbf16>
    %cst_20 = arith.constant dense<0.000000e+00> : vector<8x128xf32>
    %26 = tpu.matmul %24, %25, %cst_20 {dimension_numbers = #tpu.dot_dimension_numbers<[1], [0], [0], [1], [0, 0, 1, 1], [], []>} : vector<8x512xbf16>, vector<512x128xbf16>, vector<8x128xf32> -> vector<8x128xf32>
    %c0_21 = arith.constant 0 : index
    %c0_22 = arith.constant 0 : index
    %27 = vector.load %arg9[%c0_21, %c0_22] : memref<1x128xf32, #tpu.memory_space<vmem>>, vector<1x128xf32>
    %28 = vector.broadcast %27 : vector<1x128xf32> to vector<8x128xf32>
    %29 = arith.addf %26, %28 : vector<8x128xf32>
    %cst_23 = arith.constant 0.000000e+00 : f32
    %30 = vector.broadcast %cst_23 : f32 to vector<8x128xf32>
    %31 = arith.maximumf %29, %30 : vector<8x128xf32>
    %c0_24 = arith.constant 0 : index
    %c0_25 = arith.constant 0 : index
    %32 = vector.load %arg10[%c0_24, %c0_25] : memref<8x128xf32, #tpu.memory_space<vmem>>, vector<8x128xf32>
    tpu.vector_store %arg10[%c0_24, %c0_25], %31 {strides = array<i32>} : memref<8x128xf32, #tpu.memory_space<vmem>>, vector<8x128xf32>,
    return
  }
  func.func @transform_0(%arg0: i32) -> (i32, i32) {
    %c0_i32 = arith.constant 0 : i32
    %c0_i32_0 = arith.constant 0 : i32
    return %arg0, %c0_i32 : i32, i32
  }
  func.func @transform_1(%arg0: i32) -> (i32, i32) {
    %c0_i32 = arith.constant 0 : i32
    %c0_i32_0 = arith.constant 0 : i32
    %c0_i32_1 = arith.constant 0 : i32
    return %c0_i32, %c0_i32_0 : i32, i32
  }
  func.func @transform_2(%arg0: i32) -> (i32, i32) {
    %c0_i32 = arith.constant 0 : i32
    %c0_i32_0 = arith.constant 0 : i32
    %c0_i32_1 = arith.constant 0 : i32
    return %c0_i32, %c0_i32_0 : i32, i32
  }
  func.func @transform_3(%arg0: i32) -> (i32, i32) {
    %c0_i32 = arith.constant 0 : i32
    %c0_i32_0 = arith.constant 0 : i32
    %c0_i32_1 = arith.constant 0 : i32
    return %c0_i32, %c0_i32_0 : i32, i32
  }
  func.func @transform_4(%arg0: i32) -> (i32, i32) {
    %c0_i32 = arith.constant 0 : i32
    %c0_i32_0 = arith.constant 0 : i32
    %c0_i32_1 = arith.constant 0 : i32
    return %c0_i32, %c0_i32_0 : i32, i32
  }
  func.func @transform_5(%arg0: i32) -> (i32, i32) {
    %c0_i32 = arith.constant 0 : i32
    %c0_i32_0 = arith.constant 0 : i32
    %c0_i32_1 = arith.constant 0 : i32
    return %c0_i32, %c0_i32_0 : i32, i32
  }
  func.func @transform_6(%arg0: i32) -> (i32, i32) {
    %c0_i32 = arith.constant 0 : i32
    %c0_i32_0 = arith.constant 0 : i32
    %c0_i32_1 = arith.constant 0 : i32
    return %c0_i32, %c0_i32_0 : i32, i32
  }
  func.func @transform_7(%arg0: i32) -> (i32, i32) {
    %c0_i32 = arith.constant 0 : i32
    %c0_i32_0 = arith.constant 0 : i32
    %c0_i32_1 = arith.constant 0 : i32
    return %c0_i32, %c0_i32_0 : i32, i32
  }
  func.func @transform_8(%arg0: i32) -> (i32, i32) {
    %c0_i32 = arith.constant 0 : i32
    %c0_i32_0 = arith.constant 0 : i32
    %c0_i32_1 = arith.constant 0 : i32
    return %c0_i32, %c0_i32_0 : i32, i32
  }
  func.func @transform_9(%arg0: i32) -> (i32, i32) {
    %c0_i32 = arith.constant 0 : i32
    %c0_i32_0 = arith.constant 0 : i32
    return %arg0, %c0_i32 : i32, i32
  }
}

</mosaic_0001>

<llo_original>
// kernel: tpu_custom_call.1
$region0: #{tpu_custom_call.1}
  #allocation0 [shape = 'u32[]', space=smem, size = 0x4, offset = 0x4, fixed_abs, tag = 'smem constant byte address 0x4 - core index']
  #allocation1 [shape = 'u32[144,128]{1,0:T(1,128)}', space=vmem, size = 0x12000, scoped, tag = 'internal scratch']
  %s0 = inlined_call_operand.hbm [shape: bf16[16,128], index: 0, kind: input, shape index: {}]
  %s1 = inlined_call_operand.hbm [shape: bf16[128,1024], index: 1, kind: input, shape index: {}]
  %s2 = inlined_call_operand.hbm [shape: f32[1,1024], index: 2, kind: input, shape index: {}]
  %s3 = inlined_call_operand.hbm [shape: bf16[1024,1024], index: 3, kind: input, shape index: {}]
  %s4 = inlined_call_operand.hbm [shape: f32[1,1024], index: 4, kind: input, shape index: {}]
  %s5 = inlined_call_operand.hbm [shape: bf16[1024,512], index: 5, kind: input, shape index: {}]
  %s6 = inlined_call_operand.hbm [shape: f32[1,512], index: 6, kind: input, shape index: {}]
  %s7 = inlined_call_operand.hbm [shape: bf16[512,128], index: 7, kind: input, shape index: {}]
  %s8 = inlined_call_operand.hbm [shape: f32[1,128], index: 8, kind: input, shape index: {}]
  %s9 = inlined_call_operand.hbm [shape: f32[16,128], index: 9, kind: output, shape index: {}]
  %s10 = sld [smem:[#allocation0]]
  $region105: #{tpu_custom_call.1} parent=0
    _
  %s12 = ssub.s32 1, %s10
  %s13 = scalar_select 0, %s12, %s10
  $region1: #{tpu_custom_call.1} parent=0
    #allocation2 [shape = 'u8[4096]{0}', space=vmem, size = 0x1000, scoped, tag = 'input window, operand 0']
    #allocation3 [shape = 's32[2]{0}', space=sflag, size = 0x8, scoped, tag = 'scoped memory for tpu_custom_call.1']
    #allocation4 [shape = 's32[2]{0}', space=sflag, size = 0x8, scoped, tag = 'scoped memory for tpu_custom_call.1']
    #allocation5 [shape = 'u8[262144]{0}', space=vmem, size = 0x40000, scoped, tag = 'input window, operand 1, single buffered']
    #allocation6 [shape = 's32[1]{0}', space=sflag, size = 0x4, scoped, tag = 'scoped memory for tpu_custom_call.1']
    #allocation7 [shape = 'u8[4096]{0}', space=vmem, size = 0x1000, scoped, tag = 'input window, operand 2, single buffered']
    #allocation8 [shape = 'u8[2097152]{0}', space=vmem, size = 0x200000, scoped, tag = 'input window, operand 3, single buffered']
    #allocation9 [shape = 's32[1]{0}', space=sflag, size = 0x4, scoped, tag = 'scoped memory for tpu_custom_call.1']
    #allocation10 [shape = 'u8[4096]{0}', space=vmem, size = 0x1000, scoped, tag = 'input window, operand 4, single buffered']
    #allocation11 [shape = 'u8[1048576]{0}', space=vmem, size = 0x100000, scoped, tag = 'input window, operand 5, single buffered']
    #allocation12 [shape = 's32[1]{0}', space=sflag, size = 0x4, scoped, tag = 'scoped memory for tpu_custom_call.1']
    #allocation13 [shape = 'u8[2048]{0}', space=vmem, size = 0x800, scoped, tag = 'input window, operand 6, single buffered']
    #allocation14 [shape = 'u8[131072]{0}', space=vmem, size = 0x20000, scoped, tag = 'input window, operand 7, single buffered']
    #allocation15 [shape = 's32[1]{0}', space=sflag, size = 0x4, scoped, tag = 'scoped memory for tpu_custom_call.1']
    #allocation16 [shape = 'u8[512]{0}', space=vmem, size = 0x400, scoped, tag = 'input window, operand 8, single buffered']
    #allocation17 [shape = 'u8[8192]{0}', space=vmem, size = 0x2000, scoped, tag = 'output window, operand 0']
    %14 = vsyncpa [#allocation3], 0
    %s15 = scalar_lea.sflag [#allocation3], 1
    %16 = vsyncpa %s15, 0
    %17 = vsyncpa [#allocation6], 0
    %18 = vsyncpa [#allocation9], 0
    %19 = vsyncpa [#allocation12], 0
    %20 = vsyncpa [#allocation15], 0
    %21 = vsyncpa [#allocation4], 0
    %s22 = scalar_lea.sflag [#allocation4], 1
    %23 = vsyncpa %s22, 0
    loop: start=0, step=1, limit=4
    $region2: #{tpu_custom_call.1} parent=1 // loop_pre_header
      _
    $region3: #{tpu_custom_call.1} parent=1 // loop_header
      %s25 = sphi 0, %s29
      %p26 = scmp.ge.s32.totalorder %s25, 4
      %s35 = sphi 0, %s37
      %s38 = sphi 0, %s35
      %s39 = sphi 0, %s38
      %s55 = sphi 0, %s39
      %s59 = sphi 0, %s59
      %s61 = sphi 0, %s59
      %s62 = sphi 0, %s61
      %s76 = sphi 0, %s62
      %s80 = sphi 0, %s80
      %s82 = sphi 0, %s80
      %s83 = sphi 0, %s82
      %s97 = sphi 0, %s83
      %s101 = sphi 0, %s101
      %s103 = sphi 0, %s101
      %s104 = sphi 0, %s103
      %s118 = sphi 0, %s104
      %s122 = sphi 0, %s122
      %s124 = sphi 0, %s122
      %s125 = sphi 0, %s124
      %s139 = sphi 0, %s125
      %s143 = sphi 0, %s143
      %s145 = sphi 0, %s143
      %s146 = sphi 0, %s145
      %s160 = sphi 0, %s146
      %s164 = sphi 0, %s164
      %s166 = sphi 0, %s164
      %s167 = sphi 0, %s166
      %s181 = sphi 0, %s167
      %s185 = sphi 0, %s185
      %s187 = sphi 0, %s185
      %s188 = sphi 0, %s187
      %s202 = sphi 0, %s188
      %s206 = sphi 0, %s206
      %s208 = sphi 0, %s206
      %s209 = sphi 0, %s208
      %s223 = sphi 0, %s209
      %s229 = sphi 0, %s231
      %s232 = sphi 0, %s229
      %s233 = sphi 0, %s232
      %s249 = sphi 0, %s233
    $region4: #{tpu_custom_call.1} parent=1 // loop_header_branch
      %28 = sbr.rel (%p26) target = $region8
    $region5: #{tpu_custom_call.1} parent=1 // loop_body
      %s30 = ssub.s32 %s25, 1
      %s31 = ssub.s32 %s25, 2
      %s32 = sadd.s32 %s25, 1
      %s33 = ssub.s32 %s25, %s32
      %p34 = scmp.eq.s32.totalorder %s33, 0
      %s36 = sadd.s32 %s35, 1
      %s37 = scalar_select %p34, %s35, %s36
      %p40 = pneg %p34
      %p41 = scmp.eq.s32.totalorder %s25, 1
      %p42 = por %p40, %p41
      %p43 = scmp.ne.s32.totalorder %s35, %s38
      %p44 = scmp.eq.s32.totalorder %s25, 0
      %p45 = por %p43, %p44
      %p46 = scmp.ne.s32.totalorder %s35, %s38
      %p47 = scmp.eq.s32.totalorder %s30, 1
      %p48 = por %p46, %p47
      %p49 = scmp.ne.s32.totalorder %s38, %s39
      %p50 = scmp.eq.s32.totalorder %s30, 0
      %p51 = por %p49, %p50
      %p52 = scmp.ne.s32.totalorder %s38, %s39
      %p53 = scmp.eq.s32.totalorder %s31, 1
      %p54 = por %p52, %p53
      %p56 = scmp.ne.s32.totalorder %s39, %s55
      %p57 = scmp.eq.s32.totalorder %s31, 0
      %p58 = por %p56, %p57
      %s60 = sadd.s32 %s59, 1
      %p63 = scmp.eq.s32.totalorder %s25, 1
      %p64 = scmp.ne.s32.totalorder %s59, %s61
      %p65 = scmp.eq.s32.totalorder %s25, 0
      %p66 = por %p64, %p65
      %p67 = scmp.ne.s32.totalorder %s59, %s61
      %p68 = scmp.eq.s32.totalorder %s30, 1
      %p69 = por %p67, %p68
      %p70 = scmp.ne.s32.totalorder %s61, %s62
      %p71 = scmp.eq.s32.totalorder %s30, 0
      %p72 = por %p70, %p71
      %p73 = scmp.ne.s32.totalorder %s61, %s62
      %p74 = scmp.eq.s32.totalorder %s31, 1
      %p75 = por %p73, %p74
      %p77 = scmp.ne.s32.totalorder %s62, %s76
      %p78 = scmp.eq.s32.totalorder %s31, 0
      %p79 = por %p77, %p78
      %s81 = sadd.s32 %s80, 1
      %p84 = scmp.eq.s32.totalorder %s25, 1
      %p85 = scmp.ne.s32.totalorder %s80, %s82
      %p86 = scmp.eq.s32.totalorder %s25, 0
      %p87 = por %p85, %p86
      %p88 = scmp.ne.s32.totalorder %s80, %s82
      %p89 = scmp.eq.s32.totalorder %s30, 1
      %p90 = por %p88, %p89
      %p91 = scmp.ne.s32.totalorder %s82, %s83
      %p92 = scmp.eq.s32.totalorder %s30, 0
      %p93 = por %p91, %p92
      %p94 = scmp.ne.s32.totalorder %s82, %s83
      %p95 = scmp.eq.s32.totalorder %s31, 1
      %p96 = por %p94, %p95
      %p98 = scmp.ne.s32.totalorder %s83, %s97
      %p99 = scmp.eq.s32.totalorder %s31, 0
      %p100 = por %p98, %p99
      %s102 = sadd.s32 %s101, 1
      %p105 = scmp.eq.s32.totalorder %s25, 1
      %p106 = scmp.ne.s32.totalorder %s101, %s103
      %p107 = scmp.eq.s32.totalorder %s25, 0
      %p108 = por %p106, %p107
      %p109 = scmp.ne.s32.totalorder %s101, %s103
      %p110 = scmp.eq.s32.totalorder %s30, 1
      %p111 = por %p109, %p110
      %p112 = scmp.ne.s32.totalorder %s103, %s104
      %p113 = scmp.eq.s32.totalorder %s30, 0
      %p114 = por %p112, %p113
      %p115 = scmp.ne.s32.totalorder %s103, %s104
      %p116 = scmp.eq.s32.totalorder %s31, 1
      %p117 = por %p115, %p116
      %p119 = scmp.ne.s32.totalorder %s104, %s118
      %p120 = scmp.eq.s32.totalorder %s31, 0
      %p121 = por %p119, %p120
      %s123 = sadd.s32 %s122, 1
      %p126 = scmp.eq.s32.totalorder %s25, 1
      %p127 = scmp.ne.s32.totalorder %s122, %s124
      %p128 = scmp.eq.s32.totalorder %s25, 0
      %p129 = por %p127, %p128
      %p130 = scmp.ne.s32.totalorder %s122, %s124
      %p131 = scmp.eq.s32.totalorder %s30, 1
      %p132 = por %p130, %p131
      %p133 = scmp.ne.s32.totalorder %s124, %s125
      %p134 = scmp.eq.s32.totalorder %s30, 0
      %p135 = por %p133, %p134
      %p136 = scmp.ne.s32.totalorder %s124, %s125
      %p137 = scmp.eq.s32.totalorder %s31, 1
      %p138 = por %p136, %p137
      %p140 = scmp.ne.s32.totalorder %s125, %s139
      %p141 = scmp.eq.s32.totalorder %s31, 0
      %p142 = por %p140, %p141
      %s144 = sadd.s32 %s143, 1
      %p147 = scmp.eq.s32.totalorder %s25, 1
      %p148 = scmp.ne.s32.totalorder %s143, %s145
      %p149 = scmp.eq.s32.totalorder %s25, 0
      %p150 = por %p148, %p149
      %p151 = scmp.ne.s32.totalorder %s143, %s145
      %p152 = scmp.eq.s32.totalorder %s30, 1
      %p153 = por %p151, %p152
      %p154 = scmp.ne.s32.totalorder %s145, %s146
      %p155 = scmp.eq.s32.totalorder %s30, 0
      %p156 = por %p154, %p155
      %p157 = scmp.ne.s32.totalorder %s145, %s146
      %p158 = scmp.eq.s32.totalorder %s31, 1
      %p159 = por %p157, %p158
      %p161 = scmp.ne.s32.totalorder %s146, %s160
      %p162 = scmp.eq.s32.totalorder %s31, 0
      %p163 = por %p161, %p162
      %s165 = sadd.s32 %s164, 1
      %p168 = scmp.eq.s32.totalorder %s25, 1
      %p169 = scmp.ne.s32.totalorder %s164, %s166
      %p170 = scmp.eq.s32.totalorder %s25, 0
      %p171 = por %p169, %p170
      %p172 = scmp.ne.s32.totalorder %s164, %s166
      %p173 = scmp.eq.s32.totalorder %s30, 1
      %p174 = por %p172, %p173
      %p175 = scmp.ne.s32.totalorder %s166, %s167
      %p176 = scmp.eq.s32.totalorder %s30, 0
      %p177 = por %p175, %p176
      %p178 = scmp.ne.s32.totalorder %s166, %s167
      %p179 = scmp.eq.s32.totalorder %s31, 1
      %p180 = por %p178, %p179
      %p182 = scmp.ne.s32.totalorder %s167, %s181
      %p183 = scmp.eq.s32.totalorder %s31, 0
      %p184 = por %p182, %p183
      %s186 = sadd.s32 %s185, 1
      %p189 = scmp.eq.s32.totalorder %s25, 1
      %p190 = scmp.ne.s32.totalorder %s185, %s187
      %p191 = scmp.eq.s32.totalorder %s25, 0
      %p192 = por %p190, %p191
      %p193 = scmp.ne.s32.totalorder %s185, %s187
      %p194 = scmp.eq.s32.totalorder %s30, 1
      %p195 = por %p193, %p194
      %p196 = scmp.ne.s32.totalorder %s187, %s188
      %p197 = scmp.eq.s32.totalorder %s30, 0
      %p198 = por %p196, %p197
      %p199 = scmp.ne.s32.totalorder %s187, %s188
      %p200 = scmp.eq.s32.totalorder %s31, 1
      %p201 = por %p199, %p200
      %p203 = scmp.ne.s32.totalorder %s188, %s202
      %p204 = scmp.eq.s32.totalorder %s31, 0
      %p205 = por %p203, %p204
      %s207 = sadd.s32 %s206, 1
      %p210 = scmp.eq.s32.totalorder %s25, 1
      %p211 = scmp.ne.s32.totalorder %s206, %s208
      %p212 = scmp.eq.s32.totalorder %s25, 0
      %p213 = por %p211, %p212
      %p214 = scmp.ne.s32.totalorder %s206, %s208
      %p215 = scmp.eq.s32.totalorder %s30, 1
      %p216 = por %p214, %p215
      %p217 = scmp.ne.s32.totalorder %s208, %s209
      %p218 = scmp.eq.s32.totalorder %s30, 0
      %p219 = por %p217, %p218
      %p220 = scmp.ne.s32.totalorder %s208, %s209
      %p221 = scmp.eq.s32.totalorder %s31, 1
      %p222 = por %p220, %p221
      %p224 = scmp.ne.s32.totalorder %s209, %s223
      %p225 = scmp.eq.s32.totalorder %s31, 0
      %p226 = por %p224, %p225
      %s227 = ssub.s32 %s25, %s32
      %p228 = scmp.eq.s32.totalorder %s227, 0
      %s230 = sadd.s32 %s229, 1
      %s231 = scalar_select %p228, %s229, %s230
      %p234 = pneg %p228
      %p235 = scmp.eq.s32.totalorder %s25, 1
      %p236 = por %p234, %p235
      %p237 = scmp.ne.s32.totalorder %s229, %s232
      %p238 = scmp.eq.s32.totalorder %s25, 0
      %p239 = por %p237, %p238
      %p240 = scmp.ne.s32.totalorder %s229, %s232
      %p241 = scmp.eq.s32.totalorder %s30, 1
      %p242 = por %p240, %p241
      %p243 = scmp.ne.s32.totalorder %s232, %s233
      %p244 = scmp.eq.s32.totalorder %s30, 0
      %p245 = por %p243, %p244
      %p246 = scmp.ne.s32.totalorder %s232, %s233
      %p247 = scmp.eq.s32.totalorder %s31, 1
      %p248 = por %p246, %p247
      %p250 = scmp.ne.s32.totalorder %s233, %s249
      %p251 = scmp.eq.s32.totalorder %s31, 0
      %p252 = por %p250, %p251
      %p253 = scmp.le.s32.totalorder 1, %s25
      %p254 = scmp.lt.s32.totalorder %s25, 3
      %p255 = pnand %p253, %p254
      %p256 = pneg %p255
      // Predicated region
      $region9: #{tpu_custom_call.1} parent=5 // pred_check
        _
      $region10: #{tpu_custom_call.1} parent=5 // pred_check_branch
        %258 = sbr.rel (%p255) target = $region12
      $region11: #{tpu_custom_call.1} parent=5 // pred_region
        %s259 = ssub.s32 %s25, 1
        // Predicated region
        $region13: #{tpu_custom_call.1} parent=11 // pred_check
          %p260 = pneg %p72
        $region14: #{tpu_custom_call.1} parent=11 // pred_check_branch
          %262 = sbr.rel (%p260) target = $region16
        $region15: #{tpu_custom_call.1} parent=11 // pred_region
          %s264 = ssub.s32 8192, 8192
          %265 = vsyncadd [#allocation6], %s264
          %s266 = sshll.u32 [#allocation5], 4
          %s267 = int_to_ptr.vmem [resolvable:$true] %s266
          %272 = dma.hbm_to_vmem [thread:$0]  %s1, 8192, %s267, [#allocation6], 512, 512, 32
        $region16: #{tpu_custom_call.1} parent=11 // pred_fallthru
          _
        // Predicated region
        $region17: #{tpu_custom_call.1} parent=11 // pred_check
          %p273 = pneg %p93
        $region18: #{tpu_custom_call.1} parent=11 // pred_check_branch
          %275 = sbr.rel (%p273) target = $region20
        $region19: #{tpu_custom_call.1} parent=11 // pred_region
          %s277 = ssub.s32 128, 128
          %278 = vsyncadd [#allocation6], %s277
          %s280 = sshll.u32 [#allocation7], 4
          %s281 = int_to_ptr.vmem [resolvable:$true] %s280
          %283 = dma.hbm_to_vmem [thread:$0]  %s2, 128, %s281, [#allocation6]
        $region20: #{tpu_custom_call.1} parent=11 // pred_fallthru
          _
        // Predicated region
        $region21: #{tpu_custom_call.1} parent=11 // pred_check
          %p284 = pneg %p114
        $region22: #{tpu_custom_call.1} parent=11 // pred_check_branch
          %286 = sbr.rel (%p284) target = $region24
        $region23: #{tpu_custom_call.1} parent=11 // pred_region
          %s288 = ssub.s32 65536, 65536
          %289 = vsyncadd [#allocation9], %s288
          %s290 = sshll.u32 [#allocation8], 4
          %s291 = int_to_ptr.vmem [resolvable:$true] %s290
          %296 = dma.hbm_to_vmem [thread:$0]  %s3, 65536, %s291, [#allocation9], 512, 512, 32
        $region24: #{tpu_custom_call.1} parent=11 // pred_fallthru
          _
        // Predicated region
        $region25: #{tpu_custom_call.1} parent=11 // pred_check
          %p297 = pneg %p135
        $region26: #{tpu_custom_call.1} parent=11 // pred_check_branch
          %299 = sbr.rel (%p297) target = $region28
        $region27: #{tpu_custom_call.1} parent=11 // pred_region
          %s301 = ssub.s32 128, 128
          %302 = vsyncadd [#allocation9], %s301
          %s304 = sshll.u32 [#allocation10], 4
          %s305 = int_to_ptr.vmem [resolvable:$true] %s304
          %307 = dma.hbm_to_vmem [thread:$0]  %s4, 128, %s305, [#allocation9]
        $region28: #{tpu_custom_call.1} parent=11 // pred_fallthru
          _
        // Predicated region
        $region29: #{tpu_custom_call.1} parent=11 // pred_check
          %p308 = pneg %p156
        $region30: #{tpu_custom_call.1} parent=11 // pred_check_branch
          %310 = sbr.rel (%p308) target = $region32
        $region31: #{tpu_custom_call.1} parent=11 // pred_region
          %s312 = ssub.s32 32768, 32768
          %313 = vsyncadd [#allocation12], %s312
          %s314 = sshll.u32 [#allocation11], 4
          %s315 = int_to_ptr.vmem [resolvable:$true] %s314
          %320 = dma.hbm_to_vmem [thread:$0]  %s5, 32768, %s315, [#allocation12], 256, 256, 16
        $region32: #{tpu_custom_call.1} parent=11 // pred_fallthru
          _
        // Predicated region
        $region33: #{tpu_custom_call.1} parent=11 // pred_check
          %p321 = pneg %p177
        $region34: #{tpu_custom_call.1} parent=11 // pred_check_branch
          %323 = sbr.rel (%p321) target = $region36
        $region35: #{tpu_custom_call.1} parent=11 // pred_region
          %s325 = ssub.s32 64, 64
          %326 = vsyncadd [#allocation12], %s325
          %s328 = sshll.u32 [#allocation13], 4
          %s329 = int_to_ptr.vmem [resolvable:$true] %s328
          %331 = dma.hbm_to_vmem [thread:$0]  %s6, 64, %s329, [#allocation12]
        $region36: #{tpu_custom_call.1} parent=11 // pred_fallthru
          _
        // Predicated region
        $region37: #{tpu_custom_call.1} parent=11 // pred_check
          %p332 = pneg %p198
        $region38: #{tpu_custom_call.1} parent=11 // pred_check_branch
          %334 = sbr.rel (%p332) target = $region40
        $region39: #{tpu_custom_call.1} parent=11 // pred_region
          %s336 = ssub.s32 4096, 4096
          %337 = vsyncadd [#allocation15], %s336
          %s338 = sshll.u32 [#allocation14], 4
          %s339 = int_to_ptr.vmem [resolvable:$true] %s338
          %344 = dma.hbm_to_vmem [thread:$0]  %s7, 4096, %s339, [#allocation15], 64, 64, 4
        $region40: #{tpu_custom_call.1} parent=11 // pred_fallthru
          _
        // Predicated region
        $region41: #{tpu_custom_call.1} parent=11 // pred_check
          %p345 = pneg %p219
        $region42: #{tpu_custom_call.1} parent=11 // pred_check_branch
          %347 = sbr.rel (%p345) target = $region44
        $region43: #{tpu_custom_call.1} parent=11 // pred_region
          %s349 = ssub.s32 16, 16
          %350 = vsyncadd [#allocation15], %s349
          %s352 = sshll.u32 [#allocation16], 4
          %s353 = int_to_ptr.vmem [resolvable:$true] %s352
          %355 = dma.hbm_to_vmem [thread:$0]  %s8, 16, %s353, [#allocation15]
        $region44: #{tpu_custom_call.1} parent=11 // pred_fallthru
          _
      $region12: #{tpu_custom_call.1} parent=5 // pred_fallthru
        _
      %p356 = scmp.lt.s32.totalorder %s25, 2
      // Predicated region
      $region45: #{tpu_custom_call.1} parent=5 // pred_check
        %p357 = pneg %p356
      $region46: #{tpu_custom_call.1} parent=5 // pred_check_branch
        %359 = sbr.rel (%p357) target = $region48
      $region47: #{tpu_custom_call.1} parent=5 // pred_region
        // Predicated region
        $region49: #{tpu_custom_call.1} parent=47 // pred_check
          %p360 = pneg %p45
        $region50: #{tpu_custom_call.1} parent=47 // pred_check_branch
          %362 = sbr.rel (%p360) target = $region52
        $region51: #{tpu_custom_call.1} parent=47 // pred_region
          %s363 = sand.u32 %s35, 1
          %s364 = scalar_lea.sflag [#allocation3], %s363
          %s365 = sand.u32 %s35, 1
          %s366 = smul.addr %s365, 4
          %s367 = scalar_lea.vmem [#allocation2], %s366
          %s369 = ssub.s32 64, 64
          %370 = vsyncadd %s364, %s369
          %s371 = smul.addr %s25, 64
          %s372 = scalar_lea.hbm %s0, %s371
          %s374 = sshll.u32 %s367, 4
          %s375 = int_to_ptr.vmem [resolvable:$true] %s374
          %377 = dma.hbm_to_vmem [thread:$0]  %s372, 64, %s375, %s364
        $region52: #{tpu_custom_call.1} parent=47 // pred_fallthru
          _
      $region48: #{tpu_custom_call.1} parent=5 // pred_fallthru
        _
      %p378 = scmp.le.s32.totalorder 1, %s25
      %p379 = scmp.lt.s32.totalorder %s25, 3
      %p380 = pnand %p378, %p379
      %p381 = pneg %p380
      // Predicated region
      $region53: #{tpu_custom_call.1} parent=5 // pred_check
        _
      $region54: #{tpu_custom_call.1} parent=5 // pred_check_branch
        %383 = sbr.rel (%p380) target = $region56
      $region55: #{tpu_custom_call.1} parent=5 // pred_region
        %s384 = ssub.s32 %s25, 1
        %s385 = sand.u32 %s38, 1
        %s386 = scalar_lea.sflag [#allocation3], %s385
        %s387 = sand.u32 %s38, 1
        %s388 = smul.addr %s387, 4
        %s389 = scalar_lea.vmem [#allocation2], %s388
        // Predicated region
        $region57: #{tpu_custom_call.1} parent=55 // pred_check
          %p390 = pneg %p51
        $region58: #{tpu_custom_call.1} parent=55 // pred_check_branch
          %392 = sbr.rel (%p390) target = $region60
        $region59: #{tpu_custom_call.1} parent=55 // pred_region
          %393 = dma.done %s386, 64
        $region60: #{tpu_custom_call.1} parent=55 // pred_fallthru
          _
        // Predicated region
        $region61: #{tpu_custom_call.1} parent=55 // pred_check
          %p394 = pneg %p72
        $region62: #{tpu_custom_call.1} parent=55 // pred_check_branch
          %396 = sbr.rel (%p394) target = $region64
        $region63: #{tpu_custom_call.1} parent=55 // pred_region
          %397 = dma.done [#allocation6], 8192
        $region64: #{tpu_custom_call.1} parent=55 // pred_fallthru
          _
        // Predicated region
        $region65: #{tpu_custom_call.1} parent=55 // pred_check
          %p398 = pneg %p93
        $region66: #{tpu_custom_call.1} parent=55 // pred_check_branch
          %400 = sbr.rel (%p398) target = $region68
        $region67: #{tpu_custom_call.1} parent=55 // pred_region
          %401 = dma.done [#allocation6], 128
        $region68: #{tpu_custom_call.1} parent=55 // pred_fallthru
          _
        // Predicated region
        $region69: #{tpu_custom_call.1} parent=55 // pred_check
          %p402 = pneg %p114
        $region70: #{tpu_custom_call.1} parent=55 // pred_check_branch
          %404 = sbr.rel (%p402) target = $region72
        $region71: #{tpu_custom_call.1} parent=55 // pred_region
          %405 = dma.done [#allocation9], 65536
        $region72: #{tpu_custom_call.1} parent=55 // pred_fallthru
          _
        // Predicated region
        $region73: #{tpu_custom_call.1} parent=55 // pred_check
          %p406 = pneg %p135
        $region74: #{tpu_custom_call.1} parent=55 // pred_check_branch
          %408 = sbr.rel (%p406) target = $region76
        $region75: #{tpu_custom_call.1} parent=55 // pred_region
          %409 = dma.done [#allocation9], 128
        $region76: #{tpu_custom_call.1} parent=55 // pred_fallthru
          _
        // Predicated region
        $region77: #{tpu_custom_call.1} parent=55 // pred_check
          %p410 = pneg %p156
        $region78: #{tpu_custom_call.1} parent=55 // pred_check_branch
          %412 = sbr.rel (%p410) target = $region80
        $region79: #{tpu_custom_call.1} parent=55 // pred_region
          %413 = dma.done [#allocation12], 32768
        $region80: #{tpu_custom_call.1} parent=55 // pred_fallthru
          _
        // Predicated region
        $region81: #{tpu_custom_call.1} parent=55 // pred_check
          %p414 = pneg %p177
        $region82: #{tpu_custom_call.1} parent=55 // pred_check_branch
          %416 = sbr.rel (%p414) target = $region84
        $region83: #{tpu_custom_call.1} parent=55 // pred_region
          %417 = dma.done [#allocation12], 64
        $region84: #{tpu_custom_call.1} parent=55 // pred_fallthru
          _
        // Predicated region
        $region85: #{tpu_custom_call.1} parent=55 // pred_check
          %p418 = pneg %p198
        $region86: #{tpu_custom_call.1} parent=55 // pred_check_branch
          %420 = sbr.rel (%p418) target = $region88
        $region87: #{tpu_custom_call.1} parent=55 // pred_region
          %421 = dma.done [#allocation15], 4096
        $region88: #{tpu_custom_call.1} parent=55 // pred_fallthru
          _
        // Predicated region
        $region89: #{tpu_custom_call.1} parent=55 // pred_check
          %p422 = pneg %p219
        $region90: #{tpu_custom_call.1} parent=55 // pred_check_branch
          %424 = sbr.rel (%p422) target = $region92
        $region91: #{tpu_custom_call.1} parent=55 // pred_region
          %425 = dma.done [#allocation15], 16
        $region92: #{tpu_custom_call.1} parent=55 // pred_fallthru
          _
        %s426 = sand.u32 %s38, 1
        %s427 = scalar_lea.sflag [#allocation3], %s426
        %s428 = sand.u32 %s38, 1
        %s429 = smul.addr %s428, 4
        %s430 = scalar_lea.vmem [#allocation2], %s429
        %p431 = pneg %p51
        %p432 = pneg %p48
        %p433 = pneg %p72
        %p434 = pneg %p69
        %p435 = pneg %p93
        %p436 = pneg %p90
        %p437 = pneg %p114
        %p438 = pneg %p111
        %p439 = pneg %p135
        %p440 = pneg %p132
        %p441 = pneg %p156
        %p442 = pneg %p153
        %p443 = pneg %p177
        %p444 = pneg %p174
        %p445 = pneg %p198
        %p446 = pneg %p195
        %p447 = pneg %p219
        %p448 = pneg %p216
        %p449 = pneg %p245
        %p450 = pneg %p242
        %s451 = sand.u32 %s232, 1
        %s452 = scalar_lea.sflag [#allocation4], %s451
        %s453 = sand.u32 %s232, 1
        %s454 = smul.addr %s453, 8
        %s455 = scalar_lea.vmem [#allocation17], %s454
        %v457 = vld [vmem:[%s389] sm:$0xf]
        %v458 = vld [vmem:[#allocation5] sm:$0xff]
        %v459 = vld [vmem:[#allocation5 + $0x8] sm:$0xff]
        %v460 = vld [vmem:[#allocation5 + $0x10] sm:$0xff]
        %v461 = vld [vmem:[#allocation5 + $0x18] sm:$0xff]
        %v462 = vld [vmem:[#allocation5 + $0x20] sm:$0xff]
        %v463 = vld [vmem:[#allocation5 + $0x28] sm:$0xff]
        %v464 = vld [vmem:[#allocation5 + $0x30] sm:$0xff]
        %v465 = vld [vmem:[#allocation5 + $0x38] sm:$0xff]
        %v466 = vld [vmem:[#allocation5 + $0x40] sm:$0xff]
        %v467 = vld [vmem:[#allocation5 + $0x48] sm:$0xff]
        %v468 = vld [vmem:[#allocation5 + $0x50] sm:$0xff]
        %v469 = vld [vmem:[#allocation5 + $0x58] sm:$0xff]
        %v470 = vld [vmem:[#allocation5 + $0x60] sm:$0xff]
        %v471 = vld [vmem:[#allocation5 + $0x68] sm:$0xff]
        %v472 = vld [vmem:[#allocation5 + $0x70] sm:$0xff]
        %v473 = vld [vmem:[#allocation5 + $0x78] sm:$0xff]
        %v474 = vld [vmem:[#allocation5 + $0x80] sm:$0xff]
        %v475 = vld [vmem:[#allocation5 + $0x88] sm:$0xff]
        %v476 = vld [vmem:[#allocation5 + $0x90] sm:$0xff]
        %v477 = vld [vmem:[#allocation5 + $0x98] sm:$0xff]
        %v478 = vld [vmem:[#allocation5 + $0xa0] sm:$0xff]
        %v479 = vld [vmem:[#allocation5 + $0xa8] sm:$0xff]
        %v480 = vld [vmem:[#allocation5 + $0xb0] sm:$0xff]
        %v481 = vld [vmem:[#allocation5 + $0xb8] sm:$0xff]
        %v482 = vld [vmem:[#allocation5 + $0xc0] sm:$0xff]
        %v483 = vld [vmem:[#allocation5 + $0xc8] sm:$0xff]
        %v484 = vld [vmem:[#allocation5 + $0xd0] sm:$0xff]
        %v485 = vld [vmem:[#allocation5 + $0xd8] sm:$0xff]
        %v486 = vld [vmem:[#allocation5 + $0xe0] sm:$0xff]
        %v487 = vld [vmem:[#allocation5 + $0xe8] sm:$0xff]
        %v488 = vld [vmem:[#allocation5 + $0xf0] sm:$0xff]
        %v489 = vld [vmem:[#allocation5 + $0xf8] sm:$0xff]
        %v490 = vld [vmem:[#allocation5 + $0x100] sm:$0xff]
        %v491 = vld [vmem:[#allocation5 + $0x108] sm:$0xff]
        %v492 = vld [vmem:[#allocation5 + $0x110] sm:$0xff]
        %v493 = vld [vmem:[#allocation5 + $0x118] sm:$0xff]
        %v494 = vld [vmem:[#allocation5 + $0x120] sm:$0xff]
        %v495 = vld [vmem:[#allocation5 + $0x128] sm:$0xff]
        %v496 = vld [vmem:[#allocation5 + $0x130] sm:$0xff]
        %v497 = vld [vmem:[#allocation5 + $0x138] sm:$0xff]
        %v498 = vld [vmem:[#allocation5 + $0x140] sm:$0xff]
        %v499 = vld [vmem:[#allocation5 + $0x148] sm:$0xff]
        %v500 = vld [vmem:[#allocation5 + $0x150] sm:$0xff]
        %v501 = vld [vmem:[#allocation5 + $0x158] sm:$0xff]
        %v502 = vld [vmem:[#allocation5 + $0x160] sm:$0xff]
        %v503 = vld [vmem:[#allocation5 + $0x168] sm:$0xff]
        %v504 = vld [vmem:[#allocation5 + $0x170] sm:$0xff]
        %v505 = vld [vmem:[#allocation5 + $0x178] sm:$0xff]
        %v506 = vld [vmem:[#allocation5 + $0x180] sm:$0xff]
        %v507 = vld [vmem:[#allocation5 + $0x188] sm:$0xff]
        %v508 = vld [vmem:[#allocation5 + $0x190] sm:$0xff]
        %v509 = vld [vmem:[#allocation5 + $0x198] sm:$0xff]
        %v510 = vld [vmem:[#allocation5 + $0x1a0] sm:$0xff]
        %v511 = vld [vmem:[#allocation5 + $0x1a8] sm:$0xff]
        %v512 = vld [vmem:[#allocation5 + $0x1b0] sm:$0xff]
        %v513 = vld [vmem:[#allocation5 + $0x1b8] sm:$0xff]
        %v514 = vld [vmem:[#allocation5 + $0x1c0] sm:$0xff]
        %v515 = vld [vmem:[#allocation5 + $0x1c8] sm:$0xff]
        %v516 = vld [vmem:[#allocation5 + $0x1d0] sm:$0xff]
        %v517 = vld [vmem:[#allocation5 + $0x1d8] sm:$0xff]
        %v518 = vld [vmem:[#allocation5 + $0x1e0] sm:$0xff]
        %v519 = vld [vmem:[#allocation5 + $0x1e8] sm:$0xff]
        %v520 = vld [vmem:[#allocation5 + $0x1f0] sm:$0xff]
        %v521 = vld [vmem:[#allocation5 + $0x1f8] sm:$0xff]
        %v522 = vld [vmem:[#allocation7] sm:$0xff]
        %v524 = vlaneseq
        %v525 = vshrl.u32 %v524, 7
        %v526 = vsub.s32 0, %v525
        %v527 = vrot.slane %v522, %v526
        %v528 = vlaneseq
        %v529 = vshrl.u32 %v528, 7
        %v530 = vsub.s32 1, %v529
        %v531 = vrot.slane %v522, %v530
        %v532 = vlaneseq
        %v533 = vshrl.u32 %v532, 7
        %v534 = vsub.s32 2, %v533
        %v535 = vrot.slane %v522, %v534
        %v536 = vlaneseq
        %v537 = vshrl.u32 %v536, 7
        %v538 = vsub.s32 3, %v537
        %v539 = vrot.slane %v522, %v538
        %v540 = vlaneseq
        %v541 = vshrl.u32 %v540, 7
        %v542 = vsub.s32 4, %v541
        %v543 = vrot.slane %v522, %v542
        %v544 = vlaneseq
        %v545 = vshrl.u32 %v544, 7
        %v546 = vsub.s32 5, %v545
        %v547 = vrot.slane %v522, %v546
        %v548 = vlaneseq
        %v549 = vshrl.u32 %v548, 7
        %v550 = vsub.s32 6, %v549
        %v551 = vrot.slane %v522, %v550
        %v552 = vlaneseq
        %v553 = vshrl.u32 %v552, 7
        %v554 = vsub.s32 7, %v553
        %v555 = vrot.slane %v522, %v554
        %v628 = vunpack.c.l.b16 %v458
        %v629 = vunpack.c.h.b16 %v458
        %v630 = vunpack.c.l.b16 %v459
        %v631 = vunpack.c.h.b16 %v459
        %v632 = vunpack.c.l.b16 %v460
        %v633 = vunpack.c.h.b16 %v460
        %v634 = vunpack.c.l.b16 %v461
        %v635 = vunpack.c.h.b16 %v461
        %v636 = vunpack.c.l.b16 %v462
        %v637 = vunpack.c.h.b16 %v462
        %v638 = vunpack.c.l.b16 %v463
        %v639 = vunpack.c.h.b16 %v463
        %v640 = vunpack.c.l.b16 %v464
        %v641 = vunpack.c.h.b16 %v464
        %v642 = vunpack.c.l.b16 %v465
        %v643 = vunpack.c.h.b16 %v465
        %v644 = vunpack.c.l.b16 %v466
        %v645 = vunpack.c.h.b16 %v466
        %v646 = vunpack.c.l.b16 %v467
        %v647 = vunpack.c.h.b16 %v467
        %v648 = vunpack.c.l.b16 %v468
        %v649 = vunpack.c.h.b16 %v468
        %v650 = vunpack.c.l.b16 %v469
        %v651 = vunpack.c.h.b16 %v469
        %v652 = vunpack.c.l.b16 %v470
        %v653 = vunpack.c.h.b16 %v470
        %v654 = vunpack.c.l.b16 %v471
        %v655 = vunpack.c.h.b16 %v471
        %v656 = vunpack.c.l.b16 %v472
        %v657 = vunpack.c.h.b16 %v472
        %v658 = vunpack.c.l.b16 %v473
        %v659 = vunpack.c.h.b16 %v473
        %v660 = vunpack.c.l.b16 %v474
        %v661 = vunpack.c.h.b16 %v474
        %v662 = vunpack.c.l.b16 %v475
        %v663 = vunpack.c.h.b16 %v475
        %v664 = vunpack.c.l.b16 %v476
        %v665 = vunpack.c.h.b16 %v476
        %v666 = vunpack.c.l.b16 %v477
        %v667 = vunpack.c.h.b16 %v477
        %v668 = vunpack.c.l.b16 %v478
        %v669 = vunpack.c.h.b16 %v478
        %v670 = vunpack.c.l.b16 %v479
        %v671 = vunpack.c.h.b16 %v479
        %v672 = vunpack.c.l.b16 %v480
        %v673 = vunpack.c.h.b16 %v480
        %v674 = vunpack.c.l.b16 %v481
        %v675 = vunpack.c.h.b16 %v481
        %v676 = vunpack.c.l.b16 %v482
        %v677 = vunpack.c.h.b16 %v482
        %v678 = vunpack.c.l.b16 %v483
        %v679 = vunpack.c.h.b16 %v483
        %v680 = vunpack.c.l.b16 %v484
        %v681 = vunpack.c.h.b16 %v484
        %v682 = vunpack.c.l.b16 %v485
        %v683 = vunpack.c.h.b16 %v485
        %v684 = vunpack.c.l.b16 %v486
        %v685 = vunpack.c.h.b16 %v486
        %v686 = vunpack.c.l.b16 %v487
        %v687 = vunpack.c.h.b16 %v487
        %v688 = vunpack.c.l.b16 %v488
        %v689 = vunpack.c.h.b16 %v488
        %v690 = vunpack.c.l.b16 %v489
        %v691 = vunpack.c.h.b16 %v489
        %v692 = vunpack.c.l.b16 %v490
        %v693 = vunpack.c.h.b16 %v490
        %v694 = vunpack.c.l.b16 %v491
        %v695 = vunpack.c.h.b16 %v491
        %v696 = vunpack.c.l.b16 %v492
        %v697 = vunpack.c.h.b16 %v492
        %v698 = vunpack.c.l.b16 %v493
        %v699 = vunpack.c.h.b16 %v493
        %v700 = vunpack.c.l.b16 %v494
        %v701 = vunpack.c.h.b16 %v494
        %v702 = vunpack.c.l.b16 %v495
        %v703 = vunpack.c.h.b16 %v495
        %v704 = vunpack.c.l.b16 %v496
        %v705 = vunpack.c.h.b16 %v496
        %v706 = vunpack.c.l.b16 %v497
        %v707 = vunpack.c.h.b16 %v497
        %v708 = vunpack.c.l.b16 %v498
        %v709 = vunpack.c.h.b16 %v498
        %v710 = vunpack.c.l.b16 %v499
        %v711 = vunpack.c.h.b16 %v499
        %v712 = vunpack.c.l.b16 %v500
        %v713 = vunpack.c.h.b16 %v500
        %v714 = vunpack.c.l.b16 %v501
        %v715 = vunpack.c.h.b16 %v501
        %v716 = vunpack.c.l.b16 %v502
        %v717 = vunpack.c.h.b16 %v502
        %v718 = vunpack.c.l.b16 %v503
        %v719 = vunpack.c.h.b16 %v503
        %v720 = vunpack.c.l.b16 %v504
        %v721 = vunpack.c.h.b16 %v504
        %v722 = vunpack.c.l.b16 %v505
        %v723 = vunpack.c.h.b16 %v505
        %v724 = vunpack.c.l.b16 %v506
        %v725 = vunpack.c.h.b16 %v506
        %v726 = vunpack.c.l.b16 %v507
        %v727 = vunpack.c.h.b16 %v507
        %v728 = vunpack.c.l.b16 %v508
        %v729 = vunpack.c.h.b16 %v508
        %v730 = vunpack.c.l.b16 %v509
        %v731 = vunpack.c.h.b16 %v509
        %v732 = vunpack.c.l.b16 %v510
        %v733 = vunpack.c.h.b16 %v510
        %v734 = vunpack.c.l.b16 %v511
        %v735 = vunpack.c.h.b16 %v511
        %v736 = vunpack.c.l.b16 %v512
        %v737 = vunpack.c.h.b16 %v512
        %v738 = vunpack.c.l.b16 %v513
        %v739 = vunpack.c.h.b16 %v513
        %v740 = vunpack.c.l.b16 %v514
        %v741 = vunpack.c.h.b16 %v514
        %v742 = vunpack.c.l.b16 %v515
        %v743 = vunpack.c.h.b16 %v515
        %v744 = vunpack.c.l.b16 %v516
        %v745 = vunpack.c.h.b16 %v516
        %v746 = vunpack.c.l.b16 %v517
        %v747 = vunpack.c.h.b16 %v517
        %v748 = vunpack.c.l.b16 %v518
        %v749 = vunpack.c.h.b16 %v518
        %v750 = vunpack.c.l.b16 %v519
        %v751 = vunpack.c.h.b16 %v519
        %v752 = vunpack.c.l.b16 %v520
        %v753 = vunpack.c.h.b16 %v520
        %v754 = vunpack.c.l.b16 %v521
        %v755 = vunpack.c.h.b16 %v521
        %v756 = vpack.c.b16 %v636, %v628
        %v757 = vpack.c.b16 %v637, %v629
        %v758 = vpack.c.b16 %v638, %v630
        %v759 = vpack.c.b16 %v639, %v631
        %v760 = vpack.c.b16 %v640, %v632
        %v761 = vpack.c.b16 %v641, %v633
        %v762 = vpack.c.b16 %v642, %v634
        %v763 = vpack.c.b16 %v643, %v635
        %v764 = vpack.c.b16 %v652, %v644
        %v765 = vpack.c.b16 %v653, %v645
        %v766 = vpack.c.b16 %v654, %v646
        %v767 = vpack.c.b16 %v655, %v647
        %v768 = vpack.c.b16 %v656, %v648
        %v769 = vpack.c.b16 %v657, %v649
        %v770 = vpack.c.b16 %v658, %v650
        %v771 = vpack.c.b16 %v659, %v651
        %v772 = vpack.c.b16 %v668, %v660
        %v773 = vpack.c.b16 %v669, %v661
        %v774 = vpack.c.b16 %v670, %v662
        %v775 = vpack.c.b16 %v671, %v663
        %v776 = vpack.c.b16 %v672, %v664
        %v777 = vpack.c.b16 %v673, %v665
        %v778 = vpack.c.b16 %v674, %v666
        %v779 = vpack.c.b16 %v675, %v667
        %v780 = vpack.c.b16 %v684, %v676
        %v781 = vpack.c.b16 %v685, %v677
        %v782 = vpack.c.b16 %v686, %v678
        %v783 = vpack.c.b16 %v687, %v679
        %v784 = vpack.c.b16 %v688, %v680
        %v785 = vpack.c.b16 %v689, %v681
        %v786 = vpack.c.b16 %v690, %v682
        %v787 = vpack.c.b16 %v691, %v683
        %v788 = vpack.c.b16 %v700, %v692
        %v789 = vpack.c.b16 %v701, %v693
        %v790 = vpack.c.b16 %v702, %v694
        %v791 = vpack.c.b16 %v703, %v695
        %v792 = vpack.c.b16 %v704, %v696
        %v793 = vpack.c.b16 %v705, %v697
        %v794 = vpack.c.b16 %v706, %v698
        %v795 = vpack.c.b16 %v707, %v699
        %v796 = vpack.c.b16 %v716, %v708
        %v797 = vpack.c.b16 %v717, %v709
        %v798 = vpack.c.b16 %v718, %v710
        %v799 = vpack.c.b16 %v719, %v711
        %v800 = vpack.c.b16 %v720, %v712
        %v801 = vpack.c.b16 %v721, %v713
        %v802 = vpack.c.b16 %v722, %v714
        %v803 = vpack.c.b16 %v723, %v715
        %v804 = vpack.c.b16 %v732, %v724
        %v805 = vpack.c.b16 %v733, %v725
        %v806 = vpack.c.b16 %v734, %v726
        %v807 = vpack.c.b16 %v735, %v727
        %v808 = vpack.c.b16 %v736, %v728
        %v809 = vpack.c.b16 %v737, %v729
        %v810 = vpack.c.b16 %v738, %v730
        %v811 = vpack.c.b16 %v739, %v731
        %v812 = vpack.c.b16 %v748, %v740
        %v813 = vpack.c.b16 %v749, %v741
        %v814 = vpack.c.b16 %v750, %v742
        %v815 = vpack.c.b16 %v751, %v743
        %v816 = vpack.c.b16 %v752, %v744
        %v817 = vpack.c.b16 %v753, %v745
        %v818 = vpack.c.b16 %v754, %v746
        %v819 = vpack.c.b16 %v755, %v747
        %884 = vmatprep.subr.bf16.mxu0 %v757
        %885 = vmatpush1.bf16.msra.mxu0 %v756
        %886 = vmatprep.subr.bf16.mxu0 %v765
        %887 = vmatpush1.bf16.msra.mxu0 %v764
        %888 = vmatprep.subr.bf16.mxu0 %v773
        %889 = vmatpush1.bf16.msra.mxu0 %v772
        %890 = vmatprep.subr.bf16.mxu0 %v781
        %891 = vmatpush1.bf16.msra.mxu0 %v780
        %892 = vmatprep.subr.bf16.mxu0 %v789
        %893 = vmatpush1.bf16.msra.mxu0 %v788
        %894 = vmatprep.subr.bf16.mxu0 %v797
        %895 = vmatpush1.bf16.msra.mxu0 %v796
        %896 = vmatprep.subr.bf16.mxu0 %v805
        %897 = vmatpush1.bf16.msra.mxu0 %v804
        %898 = vmatprep.subr.bf16.mxu0 %v813
        %899 = vmatpush1.bf16.msra.mxu0 %v812
        %900 = vmatprep.subr.bf16.mxu0 0
        %901 = vmatpush1.bf16.msra.mxu0 0
        %902 = vmatprep.subr.bf16.mxu0 0
        %903 = vmatpush1.bf16.msra.mxu0 0
        %904 = vmatprep.subr.bf16.mxu0 0
        %905 = vmatpush1.bf16.msra.mxu0 0
        %906 = vmatprep.subr.bf16.mxu0 0
        %907 = vmatpush1.bf16.msra.mxu0 0
        %908 = vmatprep.subr.bf16.mxu0 0
        %909 = vmatpush1.bf16.msra.mxu0 0
        %910 = vmatprep.subr.bf16.mxu0 0
        %911 = vmatpush1.bf16.msra.mxu0 0
        %912 = vmatprep.subr.bf16.mxu0 0
        %913 = vmatpush1.bf16.msra.mxu0 0
        %914 = vmatprep.subr.bf16.mxu0 0
        %915 = vmatpush1.bf16.msra.mxu0 0
        %916 = vmatprep.mubr.bf16.mxu0 0
        %917 = vmatmul.mubr.bf16.gmra.mrb[0].mxu0 %v457
        %v918 = vpop.f32.mrb[0].mxu0
        %v919 = vadd.f32 %v527, %v918
        %v920 = vpop.f32.mrb[0].mxu0
        %v921 = vadd.f32 %v531, %v920
        %v922 = vpop.f32.mrb[0].mxu0
        %v923 = vpop.f32.mrb[0].mxu0
        %924 = vdwg.mxu0
        %925 = vmatprep.subr.bf16.mxu0 %v759
        %926 = vmatpush1.bf16.msra.mxu0 %v758
        %927 = vmatprep.subr.bf16.mxu0 %v767
        %928 = vmatpush1.bf16.msra.mxu0 %v766
        %929 = vmatprep.subr.bf16.mxu0 %v775
        %930 = vmatpush1.bf16.msra.mxu0 %v774
        %931 = vmatprep.subr.bf16.mxu0 %v783
        %932 = vmatpush1.bf16.msra.mxu0 %v782
        %933 = vmatprep.subr.bf16.mxu0 %v791
        %934 = vmatpush1.bf16.msra.mxu0 %v790
        %935 = vmatprep.subr.bf16.mxu0 %v799
        %936 = vmatpush1.bf16.msra.mxu0 %v798
        %937 = vmatprep.subr.bf16.mxu0 %v807
        %938 = vmatpush1.bf16.msra.mxu0 %v806
        %939 = vmatprep.subr.bf16.mxu0 %v815
        %940 = vmatpush1.bf16.msra.mxu0 %v814
        %941 = vmatprep.subr.bf16.mxu0 0
        %942 = vmatpush1.bf16.msra.mxu0 0
        %943 = vmatprep.subr.bf16.mxu0 0
        %944 = vmatpush1.bf16.msra.mxu0 0
        %945 = vmatprep.subr.bf16.mxu0 0
        %946 = vmatpush1.bf16.msra.mxu0 0
        %947 = vmatprep.subr.bf16.mxu0 0
        %948 = vmatpush1.bf16.msra.mxu0 0
        %949 = vmatprep.subr.bf16.mxu0 0
        %950 = vmatpush1.bf16.msra.mxu0 0
        %951 = vmatprep.subr.bf16.mxu0 0
        %952 = vmatpush1.bf16.msra.mxu0 0
        %953 = vmatprep.subr.bf16.mxu0 0
        %954 = vmatpush1.bf16.msra.mxu0 0
        %955 = vmatprep.subr.bf16.mxu0 0
        %956 = vmatpush1.bf16.msra.mxu0 0
        %957 = vmatprep.mubr.bf16.mxu0 0
        %958 = vmatmul.mubr.bf16.gmra.mrb[0].mxu0 %v457
        %v959 = vpop.f32.mrb[0].mxu0
        %v960 = vadd.f32 %v535, %v959
        %v961 = vpop.f32.mrb[0].mxu0
        %v962 = vadd.f32 %v539, %v961
        %v963 = vpop.f32.mrb[0].mxu0
        %v964 = vpop.f32.mrb[0].mxu0
        %965 = vdwg.mxu0
        %966 = vmatprep.subr.bf16.mxu0 %v761
        %967 = vmatpush1.bf16.msra.mxu0 %v760
        %968 = vmatprep.subr.bf16.mxu0 %v769
        %969 = vmatpush1.bf16.msra.mxu0 %v768
        %970 = vmatprep.subr.bf16.mxu0 %v777
        %971 = vmatpush1.bf16.msra.mxu0 %v776
        %972 = vmatprep.subr.bf16.mxu0 %v785
        %973 = vmatpush1.bf16.msra.mxu0 %v784
        %974 = vmatprep.subr.bf16.mxu0 %v793
        %975 = vmatpush1.bf16.msra.mxu0 %v792
        %976 = vmatprep.subr.bf16.mxu0 %v801
        %977 = vmatpush1.bf16.msra.mxu0 %v800
        %978 = vmatprep.subr.bf16.mxu0 %v809
        %979 = vmatpush1.bf16.msra.mxu0 %v808
        %980 = vmatprep.subr.bf16.mxu0 %v817
        %981 = vmatpush1.bf16.msra.mxu0 %v816
        %982 = vmatprep.subr.bf16.mxu0 0
        %983 = vmatpush1.bf16.msra.mxu0 0
        %984 = vmatprep.subr.bf16.mxu0 0
        %985 = vmatpush1.bf16.msra.mxu0 0
        %986 = vmatprep.subr.bf16.mxu0 0
        %987 = vmatpush1.bf16.msra.mxu0 0
        %988 = vmatprep.subr.bf16.mxu0 0
        %989 = vmatpush1.bf16.msra.mxu0 0
        %990 = vmatprep.subr.bf16.mxu0 0
        %991 = vmatpush1.bf16.msra.mxu0 0
        %992 = vmatprep.subr.bf16.mxu0 0
        %993 = vmatpush1.bf16.msra.mxu0 0
        %994 = vmatprep.subr.bf16.mxu0 0
        %995 = vmatpush1.bf16.msra.mxu0 0
        %996 = vmatprep.subr.bf16.mxu0 0
        %997 = vmatpush1.bf16.msra.mxu0 0
        %998 = vmatprep.mubr.bf16.mxu0 0
        %999 = vmatmul.mubr.bf16.gmra.mrb[0].mxu0 %v457
        %v1000 = vpop.f32.mrb[0].mxu0
        %v1001 = vadd.f32 %v543, %v1000
        %v1002 = vpop.f32.mrb[0].mxu0
        %v1003 = vadd.f32 %v547, %v1002
        %v1004 = vpop.f32.mrb[0].mxu0
        %v1005 = vpop.f32.mrb[0].mxu0
        %1006 = vdwg.mxu0
        %1007 = vmatprep.subr.bf16.mxu0 %v763
        %1008 = vmatpush1.bf16.msra.mxu0 %v762
        %1009 = vmatprep.subr.bf16.mxu0 %v771
        %1010 = vmatpush1.bf16.msra.mxu0 %v770
        %1011 = vmatprep.subr.bf16.mxu0 %v779
        %1012 = vmatpush1.bf16.msra.mxu0 %v778
        %1013 = vmatprep.subr.bf16.mxu0 %v787
        %1014 = vmatpush1.bf16.msra.mxu0 %v786
        %1015 = vmatprep.subr.bf16.mxu0 %v795
        %1016 = vmatpush1.bf16.msra.mxu0 %v794
        %1017 = vmatprep.subr.bf16.mxu0 %v803
        %1018 = vmatpush1.bf16.msra.mxu0 %v802
        %1019 = vmatprep.subr.bf16.mxu0 %v811
        %1020 = vmatpush1.bf16.msra.mxu0 %v810
        %1021 = vmatprep.subr.bf16.mxu0 %v819
        %1022 = vmatpush1.bf16.msra.mxu0 %v818
        %1023 = vmatprep.subr.bf16.mxu0 0
        %1024 = vmatpush1.bf16.msra.mxu0 0
        %1025 = vmatprep.subr.bf16.mxu0 0
        %1026 = vmatpush1.bf16.msra.mxu0 0
        %1027 = vmatprep.subr.bf16.mxu0 0
        %1028 = vmatpush1.bf16.msra.mxu0 0
        %1029 = vmatprep.subr.bf16.mxu0 0
        %1030 = vmatpush1.bf16.msra.mxu0 0
        %1031 = vmatprep.subr.bf16.mxu0 0
        %1032 = vmatpush1.bf16.msra.mxu0 0
        %1033 = vmatprep.subr.bf16.mxu0 0
        %1034 = vmatpush1.bf16.msra.mxu0 0
        %1035 = vmatprep.subr.bf16.mxu0 0
        %1036 = vmatpush1.bf16.msra.mxu0 0
        %1037 = vmatprep.subr.bf16.mxu0 0
        %1038 = vmatpush1.bf16.msra.mxu0 0
        %1039 = vmatprep.mubr.bf16.mxu0 0
        %1040 = vmatmul.mubr.bf16.gmra.mrb[0].mxu0 %v457
        %v1041 = vpop.f32.mrb[0].mxu0
        %v1042 = vadd.f32 %v551, %v1041
        %v1043 = vpop.f32.mrb[0].mxu0
        %v1044 = vadd.f32 %v555, %v1043
        %v1045 = vpop.f32.mrb[0].mxu0
        %v1046 = vpop.f32.mrb[0].mxu0
        %1047 = vdwg.mxu0
        %v1048 = vmax.f32 %v919, 0.0
        %v1049 = vmax.f32 %v921, 0.0
        %v1050 = vmax.f32 %v960, 0.0
        %v1051 = vmax.f32 %v962, 0.0
        %v1052 = vmax.f32 %v1001, 0.0
        %v1053 = vmax.f32 %v1003, 0.0
        %v1054 = vmax.f32 %v1042, 0.0
        %v1055 = vmax.f32 %v1044, 0.0
        %v1056 = vpack.c.bf16 %v1048, %v1048
        %v1057 = vpack.c.bf16 %v1049, %v1049
        %v1058 = vpack.c.bf16 %v1050, %v1050
        %v1059 = vpack.c.bf16 %v1051, %v1051
        %v1060 = vpack.c.bf16 %v1052, %v1052
        %v1061 = vpack.c.bf16 %v1053, %v1053
        %v1062 = vpack.c.bf16 %v1054, %v1054
        %v1063 = vpack.c.bf16 %v1055, %v1055
        %v1064 = vld [vmem:[#allocation8] sm:$0xff]
        %v1065 = vld [vmem:[#allocation8 + $0x8] sm:$0xff]
        %v1066 = vld [vmem:[#allocation8 + $0x10] sm:$0xff]
        %v1067 = vld [vmem:[#allocation8 + $0x18] sm:$0xff]
        %v1068 = vld [vmem:[#allocation8 + $0x20] sm:$0xff]
        %v1069 = vld [vmem:[#allocation8 + $0x28] sm:$0xff]
        %v1070 = vld [vmem:[#allocation8 + $0x30] sm:$0xff]
        %v1071 = vld [vmem:[#allocation8 + $0x38] sm:$0xff]
        %v1072 = vld [vmem:[#allocation8 + $0x40] sm:$0xff]
        %v1073 = vld [vmem:[#allocation8 + $0x48] sm:$0xff]
        %v1074 = vld [vmem:[#allocation8 + $0x50] sm:$0xff]
        %v1075 = vld [vmem:[#allocation8 + $0x58] sm:$0xff]
        %v1076 = vld [vmem:[#allocation8 + $0x60] sm:$0xff]
        %v1077 = vld [vmem:[#allocation8 + $0x68] sm:$0xff]
        %v1078 = vld [vmem:[#allocation8 + $0x70] sm:$0xff]
        %v1079 = vld [vmem:[#allocation8 + $0x78] sm:$0xff]
        %v1080 = vld [vmem:[#allocation8 + $0x80] sm:$0xff]
        %v1081 = vld [vmem:[#allocation8 + $0x88] sm:$0xff]
        %v1082 = vld [vmem:[#allocation8 + $0x90] sm:$0xff]
        %v1083 = vld [vmem:[#allocation8 + $0x98] sm:$0xff]
        %v1084 = vld [vmem:[#allocation8 + $0xa0] sm:$0xff]
        %v1085 = vld [vmem:[#allocation8 + $0xa8] sm:$0xff]
        %v1086 = vld [vmem:[#allocation8 + $0xb0] sm:$0xff]
        %v1087 = vld [vmem:[#allocation8 + $0xb8] sm:$0xff]
        %v1088 = vld [vmem:[#allocation8 + $0xc0] sm:$0xff]
        %v1089 = vld [vmem:[#allocation8 + $0xc8] sm:$0xff]
        %v1090 = vld [vmem:[#allocation8 + $0xd0] sm:$0xff]
        %v1091 = vld [vmem:[#allocation8 + $0xd8] sm:$0xff]
        %v1092 = vld [vmem:[#allocation8 + $0xe0] sm:$0xff]
        %v1093 = vld [vmem:[#allocation8 + $0xe8] sm:$0xff]
        %v1094 = vld [vmem:[#allocation8 + $0xf0] sm:$0xff]
        %v1095 = vld [vmem:[#allocation8 + $0xf8] sm:$0xff]
        %v1096 = vld [vmem:[#allocation8 + $0x100] sm:$0xff]
        %v1097 = vld [vmem:[#allocation8 + $0x108] sm:$0xff]
        %v1098 = vld [vmem:[#allocation8 + $0x110] sm:$0xff]
        %v1099 = vld [vmem:[#allocation8 + $0x118] sm:$0xff]
        %v1100 = vld [vmem:[#allocation8 + $0x120] sm:$0xff]
        %v1101 = vld [vmem:[#allocation8 + $0x128] sm:$0xff]
        %v1102 = vld [vmem:[#allocation8 + $0x130] sm:$0xff]
        %v1103 = vld [vmem:[#allocation8 + $0x138] sm:$0xff]
        %v1104 = vld [vmem:[#allocation8 + $0x140] sm:$0xff]
        %v1105 = vld [vmem:[#allocation8 + $0x148] sm:$0xff]
        %v1106 = vld [vmem:[#allocation8 + $0x150] sm:$0xff]
        %v1107 = vld [vmem:[#allocation8 + $0x158] sm:$0xff]
        %v1108 = vld [vmem:[#allocation8 + $0x160] sm:$0xff]
        %v1109 = vld [vmem:[#allocation8 + $0x168] sm:$0xff]
        %v1110 = vld [vmem:[#allocation8 + $0x170] sm:$0xff]
        %v1111 = vld [vmem:[#allocation8 + $0x178] sm:$0xff]
        %v1112 = vld [vmem:[#allocation8 + $0x180] sm:$0xff]
        %v1113 = vld [vmem:[#allocation8 + $0x188] sm:$0xff]
        %v1114 = vld [vmem:[#allocation8 + $0x190] sm:$0xff]
        %v1115 = vld [vmem:[#allocation8 + $0x198] sm:$0xff]
        %v1116 = vld [vmem:[#allocation8 + $0x1a0] sm:$0xff]
        %v1117 = vld [vmem:[#allocation8 + $0x1a8] sm:$0xff]
        %v1118 = vld [vmem:[#allocation8 + $0x1b0] sm:$0xff]
        %v1119 = vld [vmem:[#allocation8 + $0x1b8] sm:$0xff]
        %v1120 = vld [vmem:[#allocation8 + $0x1c0] sm:$0xff]
        %v1121 = vld [vmem:[#allocation8 + $0x1c8] sm:$0xff]
        %v1122 = vld [vmem:[#allocation8 + $0x1d0] sm:$0xff]
        %v1123 = vld [vmem:[#allocation8 + $0x1d8] sm:$0xff]
        %v1124 = vld [vmem:[#allocation8 + $0x1e0] sm:$0xff]
        %v1125 = vld [vmem:[#allocation8 + $0x1e8] sm:$0xff]
        %v1126 = vld [vmem:[#allocation8 + $0x1f0] sm:$0xff]
        %v1127 = vld [vmem:[#allocation8 + $0x1f8] sm:$0xff]
        %v1128 = vld [vmem:[#allocation8 + $0x200] sm:$0xff]
        %v1129 = vld [vmem:[#allocation8 + $0x208] sm:$0xff]
        %v1130 = vld [vmem:[#allocation8 + $0x210] sm:$0xff]
        %v1131 = vld [vmem:[#allocation8 + $0x218] sm:$0xff]
        %v1132 = vld [vmem:[#allocation8 + $0x220] sm:$0xff]
        %v1133 = vld [vmem:[#allocation8 + $0x228] sm:$0xff]
        %v1134 = vld [vmem:[#allocation8 + $0x230] sm:$0xff]
        %v1135 = vld [vmem:[#allocation8 + $0x238] sm:$0xff]
        %v1136 = vld [vmem:[#allocation8 + $0x240] sm:$0xff]
        %v1137 = vld [vmem:[#allocation8 + $0x248] sm:$0xff]
        %v1138 = vld [vmem:[#allocation8 + $0x250] sm:$0xff]
        %v1139 = vld [vmem:[#allocation8 + $0x258] sm:$0xff]
        %v1140 = vld [vmem:[#allocation8 + $0x260] sm:$0xff]
        %v1141 = vld [vmem:[#allocation8 + $0x268] sm:$0xff]
        %v1142 = vld [vmem:[#allocation8 + $0x270] sm:$0xff]
        %v1143 = vld [vmem:[#allocation8 + $0x278] sm:$0xff]
        %v1144 = vld [vmem:[#allocation8 + $0x280] sm:$0xff]
        %v1145 = vld [vmem:[#allocation8 + $0x288] sm:$0xff]
        %v1146 = vld [vmem:[#allocation8 + $0x290] sm:$0xff]
        %v1147 = vld [vmem:[#allocation8 + $0x298] sm:$0xff]
        %v1148 = vld [vmem:[#allocation8 + $0x2a0] sm:$0xff]
        %v1149 = vld [vmem:[#allocation8 + $0x2a8] sm:$0xff]
        %v1150 = vld [vmem:[#allocation8 + $0x2b0] sm:$0xff]
        %v1151 = vld [vmem:[#allocation8 + $0x2b8] sm:$0xff]
        %v1152 = vld [vmem:[#allocation8 + $0x2c0] sm:$0xff]
        %v1153 = vld [vmem:[#allocation8 + $0x2c8] sm:$0xff]
        %v1154 = vld [vmem:[#allocation8 + $0x2d0] sm:$0xff]
        %v1155 = vld [vmem:[#allocation8 + $0x2d8] sm:$0xff]
        %v1156 = vld [vmem:[#allocation8 + $0x2e0] sm:$0xff]
        %v1157 = vld [vmem:[#allocation8 + $0x2e8] sm:$0xff]
        %v1158 = vld [vmem:[#allocation8 + $0x2f0] sm:$0xff]
        %v1159 = vld [vmem:[#allocation8 + $0x2f8] sm:$0xff]
        %v1160 = vld [vmem:[#allocation8 + $0x300] sm:$0xff]
        %v1161 = vld [vmem:[#allocation8 + $0x308] sm:$0xff]
        %v1162 = vld [vmem:[#allocation8 + $0x310] sm:$0xff]
        %v1163 = vld [vmem:[#allocation8 + $0x318] sm:$0xff]
        %v1164 = vld [vmem:[#allocation8 + $0x320] sm:$0xff]
        %v1165 = vld [vmem:[#allocation8 + $0x328] sm:$0xff]
        %v1166 = vld [vmem:[#allocation8 + $0x330] sm:$0xff]
        %v1167 = vld [vmem:[#allocation8 + $0x338] sm:$0xff]
        %v1168 = vld [vmem:[#allocation8 + $0x340] sm:$0xff]
        %v1169 = vld [vmem:[#allocation8 + $0x348] sm:$0xff]
        %v1170 = vld [vmem:[#allocation8 + $0x350] sm:$0xff]
        %v1171 = vld [vmem:[#allocation8 + $0x358] sm:$0xff]
        %v1172 = vld [vmem:[#allocation8 + $0x360] sm:$0xff]
        %v1173 = vld [vmem:[#allocation8 + $0x368] sm:$0xff]
        %v1174 = vld [vmem:[#allocation8 + $0x370] sm:$0xff]
        %v1175 = vld [vmem:[#allocation8 + $0x378] sm:$0xff]
        %v1176 = vld [vmem:[#allocation8 + $0x380] sm:$0xff]
        %v1177 = vld [vmem:[#allocation8 + $0x388] sm:$0xff]
        %v1178 = vld [vmem:[#allocation8 + $0x390] sm:$0xff]
        %v1179 = vld [vmem:[#allocation8 + $0x398] sm:$0xff]
        %v1180 = vld [vmem:[#allocation8 + $0x3a0] sm:$0xff]
        %v1181 = vld [vmem:[#allocation8 + $0x3a8] sm:$0xff]
        %v1182 = vld [vmem:[#allocation8 + $0x3b0] sm:$0xff]
        %v1183 = vld [vmem:[#allocation8 + $0x3b8] sm:$0xff]
        %v1184 = vld [vmem:[#allocation8 + $0x3c0] sm:$0xff]
        %v1185 = vld [vmem:[#allocation8 + $0x3c8] sm:$0xff]
        %v1186 = vld [vmem:[#allocation8 + $0x3d0] sm:$0xff]
        %v1187 = vld [vmem:[#allocation8 + $0x3d8] sm:$0xff]
        %v1188 = vld [vmem:[#allocation8 + $0x3e0] sm:$0xff]
        %v1189 = vld [vmem:[#allocation8 + $0x3e8] sm:$0xff]
        %v1190 = vld [vmem:[#allocation8 + $0x3f0] sm:$0xff]
        %v1191 = vld [vmem:[#allocation8 + $0x3f8] sm:$0xff]
        %v1192 = vld [vmem:[#allocation8 + $0x400] sm:$0xff]
        %v1193 = vld [vmem:[#allocation8 + $0x408] sm:$0xff]
        %v1194 = vld [vmem:[#allocation8 + $0x410] sm:$0xff]
        %v1195 = vld [vmem:[#allocation8 + $0x418] sm:$0xff]
        %v1196 = vld [vmem:[#allocation8 + $0x420] sm:$0xff]
        %v1197 = vld [vmem:[#allocation8 + $0x428] sm:$0xff]
        %v1198 = vld [vmem:[#allocation8 + $0x430] sm:$0xff]
        %v1199 = vld [vmem:[#allocation8 + $0x438] sm:$0xff]
        %v1200 = vld [vmem:[#allocation8 + $0x440] sm:$0xff]
        %v1201 = vld [vmem:[#allocation8 + $0x448] sm:$0xff]
        %v1202 = vld [vmem:[#allocation8 + $0x450] sm:$0xff]
        %v1203 = vld [vmem:[#allocation8 + $0x458] sm:$0xff]
        %v1204 = vld [vmem:[#allocation8 + $0x460] sm:$0xff]
        %v1205 = vld [vmem:[#allocation8 + $0x468] sm:$0xff]
        %v1206 = vld [vmem:[#allocation8 + $0x470] sm:$0xff]
        %v1207 = vld [vmem:[#allocation8 + $0x478] sm:$0xff]
        %v1208 = vld [vmem:[#allocation8 + $0x480] sm:$0xff]
        %v1209 = vld [vmem:[#allocation8 + $0x488] sm:$0xff]
        %v1210 = vld [vmem:[#allocation8 + $0x490] sm:$0xff]
        %v1211 = vld [vmem:[#allocation8 + $0x498] sm:$0xff]
        %v1212 = vld [vmem:[#allocation8 + $0x4a0] sm:$0xff]
        %v1213 = vld [vmem:[#allocation8 + $0x4a8] sm:$0xff]
        %v1214 = vld [vmem:[#allocation8 + $0x4b0] sm:$0xff]
        %v1215 = vld [vmem:[#allocation8 + $0x4b8] sm:$0xff]
        %v1216 = vld [vmem:[#allocation8 + $0x4c0] sm:$0xff]
        %v1217 = vld [vmem:[#allocation8 + $0x4c8] sm:$0xff]
        %v1218 = vld [vmem:[#allocation8 + $0x4d0] sm:$0xff]
        %v1219 = vld [vmem:[#allocation8 + $0x4d8] sm:$0xff]
        %v1220 = vld [vmem:[#allocation8 + $0x4e0] sm:$0xff]
        %v1221 = vld [vmem:[#allocation8 + $0x4e8] sm:$0xff]
        %v1222 = vld [vmem:[#allocation8 + $0x4f0] sm:$0xff]
        %v1223 = vld [vmem:[#allocation8 + $0x4f8] sm:$0xff]
        %v1224 = vld [vmem:[#allocation8 + $0x500] sm:$0xff]
        %v1225 = vld [vmem:[#allocation8 + $0x508] sm:$0xff]
        %v1226 = vld [vmem:[#allocation8 + $0x510] sm:$0xff]
        %v1227 = vld [vmem:[#allocation8 + $0x518] sm:$0xff]
        %v1228 = vld [vmem:[#allocation8 + $0x520] sm:$0xff]
        %v1229 = vld [vmem:[#allocation8 + $0x528] sm:$0xff]
        %v1230 = vld [vmem:[#allocation8 + $0x530] sm:$0xff]
        %v1231 = vld [vmem:[#allocation8 + $0x538] sm:$0xff]
        %v1232 = vld [vmem:[#allocation8 + $0x540] sm:$0xff]
        %v1233 = vld [vmem:[#allocation8 + $0x548] sm:$0xff]
        %v1234 = vld [vmem:[#allocation8 + $0x550] sm:$0xff]
        %v1235 = vld [vmem:[#allocation8 + $0x558] sm:$0xff]
        %v1236 = vld [vmem:[#allocation8 + $0x560] sm:$0xff]
        %v1237 = vld [vmem:[#allocation8 + $0x568] sm:$0xff]
        %v1238 = vld [vmem:[#allocation8 + $0x570] sm:$0xff]
        %v1239 = vld [vmem:[#allocation8 + $0x578] sm:$0xff]
        %v1240 = vld [vmem:[#allocation8 + $0x580] sm:$0xff]
        %v1241 = vld [vmem:[#allocation8 + $0x588] sm:$0xff]
        %v1242 = vld [vmem:[#allocation8 + $0x590] sm:$0xff]
        %v1243 = vld [vmem:[#allocation8 + $0x598] sm:$0xff]
        %v1244 = vld [vmem:[#allocation8 + $0x5a0] sm:$0xff]
        %v1245 = vld [vmem:[#allocation8 + $0x5a8] sm:$0xff]
        %v1246 = vld [vmem:[#allocation8 + $0x5b0] sm:$0xff]
        %v1247 = vld [vmem:[#allocation8 + $0x5b8] sm:$0xff]
        %v1248 = vld [vmem:[#allocation8 + $0x5c0] sm:$0xff]
        %v1249 = vld [vmem:[#allocation8 + $0x5c8] sm:$0xff]
        %v1250 = vld [vmem:[#allocation8 + $0x5d0] sm:$0xff]
        %v1251 = vld [vmem:[#allocation8 + $0x5d8] sm:$0xff]
        %v1252 = vld [vmem:[#allocation8 + $0x5e0] sm:$0xff]
        %v1253 = vld [vmem:[#allocation8 + $0x5e8] sm:$0xff]
        %v1254 = vld [vmem:[#allocation8 + $0x5f0] sm:$0xff]
        %v1255 = vld [vmem:[#allocation8 + $0x5f8] sm:$0xff]
        %v1256 = vld [vmem:[#allocation8 + $0x600] sm:$0xff]
        %v1257 = vld [vmem:[#allocation8 + $0x608] sm:$0xff]
        %v1258 = vld [vmem:[#allocation8 + $0x610] sm:$0xff]
        %v1259 = vld [vmem:[#allocation8 + $0x618] sm:$0xff]
        %v1260 = vld [vmem:[#allocation8 + $0x620] sm:$0xff]
        %v1261 = vld [vmem:[#allocation8 + $0x628] sm:$0xff]
        %v1262 = vld [vmem:[#allocation8 + $0x630] sm:$0xff]
        %v1263 = vld [vmem:[#allocation8 + $0x638] sm:$0xff]
        %v1264 = vld [vmem:[#allocation8 + $0x640] sm:$0xff]
        %v1265 = vld [vmem:[#allocation8 + $0x648] sm:$0xff]
        %v1266 = vld [vmem:[#allocation8 + $0x650] sm:$0xff]
        %v1267 = vld [vmem:[#allocation8 + $0x658] sm:$0xff]
        %v1268 = vld [vmem:[#allocation8 + $0x660] sm:$0xff]
        %v1269 = vld [vmem:[#allocation8 + $0x668] sm:$0xff]
        %v1270 = vld [vmem:[#allocation8 + $0x670] sm:$0xff]
        %v1271 = vld [vmem:[#allocation8 + $0x678] sm:$0xff]
        %v1272 = vld [vmem:[#allocation8 + $0x680] sm:$0xff]
        %v1273 = vld [vmem:[#allocation8 + $0x688] sm:$0xff]
        %v1274 = vld [vmem:[#allocation8 + $0x690] sm:$0xff]
        %v1275 = vld [vmem:[#allocation8 + $0x698] sm:$0xff]
        %v1276 = vld [vmem:[#allocation8 + $0x6a0] sm:$0xff]
        %v1277 = vld [vmem:[#allocation8 + $0x6a8] sm:$0xff]
        %v1278 = vld [vmem:[#allocation8 + $0x6b0] sm:$0xff]
        %v1279 = vld [vmem:[#allocation8 + $0x6b8] sm:$0xff]
        %v1280 = vld [vmem:[#allocation8 + $0x6c0] sm:$0xff]
        %v1281 = vld [vmem:[#allocation8 + $0x6c8] sm:$0xff]
        %v1282 = vld [vmem:[#allocation8 + $0x6d0] sm:$0xff]
        %v1283 = vld [vmem:[#allocation8 + $0x6d8] sm:$0xff]
        %v1284 = vld [vmem:[#allocation8 + $0x6e0] sm:$0xff]
        %v1285 = vld [vmem:[#allocation8 + $0x6e8] sm:$0xff]
        %v1286 = vld [vmem:[#allocation8 + $0x6f0] sm:$0xff]
        %v1287 = vld [vmem:[#allocation8 + $0x6f8] sm:$0xff]
        %v1288 = vld [vmem:[#allocation8 + $0x700] sm:$0xff]
        %v1289 = vld [vmem:[#allocation8 + $0x708] sm:$0xff]
        %v1290 = vld [vmem:[#allocation8 + $0x710] sm:$0xff]
        %v1291 = vld [vmem:[#allocation8 + $0x718] sm:$0xff]
        %v1292 = vld [vmem:[#allocation8 + $0x720] sm:$0xff]
        %v1293 = vld [vmem:[#allocation8 + $0x728] sm:$0xff]
        %v1294 = vld [vmem:[#allocation8 + $0x730] sm:$0xff]
        %v1295 = vld [vmem:[#allocation8 + $0x738] sm:$0xff]
        %v1296 = vld [vmem:[#allocation8 + $0x740] sm:$0xff]
        %v1297 = vld [vmem:[#allocation8 + $0x748] sm:$0xff]
        %v1298 = vld [vmem:[#allocation8 + $0x750] sm:$0xff]
        %v1299 = vld [vmem:[#allocation8 + $0x758] sm:$0xff]
        %v1300 = vld [vmem:[#allocation8 + $0x760] sm:$0xff]
        %v1301 = vld [vmem:[#allocation8 + $0x768] sm:$0xff]
        %v1302 = vld [vmem:[#allocation8 + $0x770] sm:$0xff]
        %v1303 = vld [vmem:[#allocation8 + $0x778] sm:$0xff]
        %v1304 = vld [vmem:[#allocation8 + $0x780] sm:$0xff]
        %v1305 = vld [vmem:[#allocation8 + $0x788] sm:$0xff]
        %v1306 = vld [vmem:[#allocation8 + $0x790] sm:$0xff]
        %v1307 = vld [vmem:[#allocation8 + $0x798] sm:$0xff]
        %v1308 = vld [vmem:[#allocation8 + $0x7a0] sm:$0xff]
        %v1309 = vld [vmem:[#allocation8 + $0x7a8] sm:$0xff]
        %v1310 = vld [vmem:[#allocation8 + $0x7b0] sm:$0xff]
        %v1311 = vld [vmem:[#allocation8 + $0x7b8] sm:$0xff]
        %v1312 = vld [vmem:[#allocation8 + $0x7c0] sm:$0xff]
        %v1313 = vld [vmem:[#allocation8 + $0x7c8] sm:$0xff]
        %v1314 = vld [vmem:[#allocation8 + $0x7d0] sm:$0xff]
        %v1315 = vld [vmem:[#allocation8 + $0x7d8] sm:$0xff]
        %v1316 = vld [vmem:[#allocation8 + $0x7e0] sm:$0xff]
        %v1317 = vld [vmem:[#allocation8 + $0x7e8] sm:$0xff]
        %v1318 = vld [vmem:[#allocation8 + $0x7f0] sm:$0xff]
        %v1319 = vld [vmem:[#allocation8 + $0x7f8] sm:$0xff]
        %v1320 = vld [vmem:[#allocation8 + $0x800] sm:$0xff]
        %v1321 = vld [vmem:[#allocation8 + $0x808] sm:$0xff]
        %v1322 = vld [vmem:[#allocation8 + $0x810] sm:$0xff]
        %v1323 = vld [vmem:[#allocation8 + $0x818] sm:$0xff]
        %v1324 = vld [vmem:[#allocation8 + $0x820] sm:$0xff]
        %v1325 = vld [vmem:[#allocation8 + $0x828] sm:$0xff]
        %v1326 = vld [vmem:[#allocation8 + $0x830] sm:$0xff]
        %v1327 = vld [vmem:[#allocation8 + $0x838] sm:$0xff]
        %v1328 = vld [vmem:[#allocation8 + $0x840] sm:$0xff]
        %v1329 = vld [vmem:[#allocation8 + $0x848] sm:$0xff]
        %v1330 = vld [vmem:[#allocation8 + $0x850] sm:$0xff]
        %v1331 = vld [vmem:[#allocation8 + $0x858] sm:$0xff]
        %v1332 = vld [vmem:[#allocation8 + $0x860] sm:$0xff]
        %v1333 = vld [vmem:[#allocation8 + $0x868] sm:$0xff]
        %v1334 = vld [vmem:[#allocation8 + $0x870] sm:$0xff]
        %v1335 = vld [vmem:[#allocation8 + $0x878] sm:$0xff]
        %v1336 = vld [vmem:[#allocation8 + $0x880] sm:$0xff]
        %v1337 = vld [vmem:[#allocation8 + $0x888] sm:$0xff]
        %v1338 = vld [vmem:[#allocation8 + $0x890] sm:$0xff]
        %v1339 = vld [vmem:[#allocation8 + $0x898] sm:$0xff]
        %v1340 = vld [vmem:[#allocation8 + $0x8a0] sm:$0xff]
        %v1341 = vld [vmem:[#allocation8 + $0x8a8] sm:$0xff]
        %v1342 = vld [vmem:[#allocation8 + $0x8b0] sm:$0xff]
        %v1343 = vld [vmem:[#allocation8 + $0x8b8] sm:$0xff]
        %v1344 = vld [vmem:[#allocation8 + $0x8c0] sm:$0xff]
        %v1345 = vld [vmem:[#allocation8 + $0x8c8] sm:$0xff]
        %v1346 = vld [vmem:[#allocation8 + $0x8d0] sm:$0xff]
        %v1347 = vld [vmem:[#allocation8 + $0x8d8] sm:$0xff]
        %v1348 = vld [vmem:[#allocation8 + $0x8e0] sm:$0xff]
        %v1349 = vld [vmem:[#allocation8 + $0x8e8] sm:$0xff]
        %v1350 = vld [vmem:[#allocation8 + $0x8f0] sm:$0xff]
        %v1351 = vld [vmem:[#allocation8 + $0x8f8] sm:$0xff]
        %v1352 = vld [vmem:[#allocation8 + $0x900] sm:$0xff]
        %v1353 = vld [vmem:[#allocation8 + $0x908] sm:$0xff]
        %v1354 = vld [vmem:[#allocation8 + $0x910] sm:$0xff]
        %v1355 = vld [vmem:[#allocation8 + $0x918] sm:$0xff]
        %v1356 = vld [vmem:[#allocation8 + $0x920] sm:$0xff]
        %v1357 = vld [vmem:[#allocation8 + $0x928] sm:$0xff]
        %v1358 = vld [vmem:[#allocation8 + $0x930] sm:$0xff]
        %v1359 = vld [vmem:[#allocation8 + $0x938] sm:$0xff]
        %v1360 = vld [vmem:[#allocation8 + $0x940] sm:$0xff]
        %v1361 = vld [vmem:[#allocation8 + $0x948] sm:$0xff]
        %v1362 = vld [vmem:[#allocation8 + $0x950] sm:$0xff]
        %v1363 = vld [vmem:[#allocation8 + $0x958] sm:$0xff]
        %v1364 = vld [vmem:[#allocation8 + $0x960] sm:$0xff]
        %v1365 = vld [vmem:[#allocation8 + $0x968] sm:$0xff]
        %v1366 = vld [vmem:[#allocation8 + $0x970] sm:$0xff]
        %v1367 = vld [vmem:[#allocation8 + $0x978] sm:$0xff]
        %v1368 = vld [vmem:[#allocation8 + $0x980] sm:$0xff]
        %v1369 = vld [vmem:[#allocation8 + $0x988] sm:$0xff]
        %v1370 = vld [vmem:[#allocation8 + $0x990] sm:$0xff]
        %v1371 = vld [vmem:[#allocation8 + $0x998] sm:$0xff]
        %v1372 = vld [vmem:[#allocation8 + $0x9a0] sm:$0xff]
        %v1373 = vld [vmem:[#allocation8 + $0x9a8] sm:$0xff]
        %v1374 = vld [vmem:[#allocation8 + $0x9b0] sm:$0xff]
        %v1375 = vld [vmem:[#allocation8 + $0x9b8] sm:$0xff]
        %v1376 = vld [vmem:[#allocation8 + $0x9c0] sm:$0xff]
        %v1377 = vld [vmem:[#allocation8 + $0x9c8] sm:$0xff]
        %v1378 = vld [vmem:[#allocation8 + $0x9d0] sm:$0xff]
        %v1379 = vld [vmem:[#allocation8 + $0x9d8] sm:$0xff]
        %v1380 = vld [vmem:[#allocation8 + $0x9e0] sm:$0xff]
        %v1381 = vld [vmem:[#allocation8 + $0x9e8] sm:$0xff]
        %v1382 = vld [vmem:[#allocation8 + $0x9f0] sm:$0xff]
        %v1383 = vld [vmem:[#allocation8 + $0x9f8] sm:$0xff]
        %v1384 = vld [vmem:[#allocation8 + $0xa00] sm:$0xff]
        %v1385 = vld [vmem:[#allocation8 + $0xa08] sm:$0xff]
        %v1386 = vld [vmem:[#allocation8 + $0xa10] sm:$0xff]
        %v1387 = vld [vmem:[#allocation8 + $0xa18] sm:$0xff]
        %v1388 = vld [vmem:[#allocation8 + $0xa20] sm:$0xff]
        %v1389 = vld [vmem:[#allocation8 + $0xa28] sm:$0xff]
        %v1390 = vld [vmem:[#allocation8 + $0xa30] sm:$0xff]
        %v1391 = vld [vmem:[#allocation8 + $0xa38] sm:$0xff]
        %v1392 = vld [vmem:[#allocation8 + $0xa40] sm:$0xff]
        %v1393 = vld [vmem:[#allocation8 + $0xa48] sm:$0xff]
        %v1394 = vld [vmem:[#allocation8 + $0xa50] sm:$0xff]
        %v1395 = vld [vmem:[#allocation8 + $0xa58] sm:$0xff]
        %v1396 = vld [vmem:[#allocation8 + $0xa60] sm:$0xff]
        %v1397 = vld [vmem:[#allocation8 + $0xa68] sm:$0xff]
        %v1398 = vld [vmem:[#allocation8 + $0xa70] sm:$0xff]
        %v1399 = vld [vmem:[#allocation8 + $0xa78] sm:$0xff]
        %v1400 = vld [vmem:[#allocation8 + $0xa80] sm:$0xff]
        %v1401 = vld [vmem:[#allocation8 + $0xa88] sm:$0xff]
        %v1402 = vld [vmem:[#allocation8 + $0xa90] sm:$0xff]
        %v1403 = vld [vmem:[#allocation8 + $0xa98] sm:$0xff]
        %v1404 = vld [vmem:[#allocation8 + $0xaa0] sm:$0xff]
        %v1405 = vld [vmem:[#allocation8 + $0xaa8] sm:$0xff]
        %v1406 = vld [vmem:[#allocation8 + $0xab0] sm:$0xff]
        %v1407 = vld [vmem:[#allocation8 + $0xab8] sm:$0xff]
        %v1408 = vld [vmem:[#allocation8 + $0xac0] sm:$0xff]
        %v1409 = vld [vmem:[#allocation8 + $0xac8] sm:$0xff]
        %v1410 = vld [vmem:[#allocation8 + $0xad0] sm:$0xff]
        %v1411 = vld [vmem:[#allocation8 + $0xad8] sm:$0xff]
        %v1412 = vld [vmem:[#allocation8 + $0xae0] sm:$0xff]
        %v1413 = vld [vmem:[#allocation8 + $0xae8] sm:$0xff]
        %v1414 = vld [vmem:[#allocation8 + $0xaf0] sm:$0xff]
        %v1415 = vld [vmem:[#allocation8 + $0xaf8] sm:$0xff]
        %v1416 = vld [vmem:[#allocation8 + $0xb00] sm:$0xff]
        %v1417 = vld [vmem:[#allocation8 + $0xb08] sm:$0xff]
        %v1418 = vld [vmem:[#allocation8 + $0xb10] sm:$0xff]
        %v1419 = vld [vmem:[#allocation8 + $0xb18] sm:$0xff]
        %v1420 = vld [vmem:[#allocation8 + $0xb20] sm:$0xff]
        %v1421 = vld [vmem:[#allocation8 + $0xb28] sm:$0xff]
        %v1422 = vld [vmem:[#allocation8 + $0xb30] sm:$0xff]
        %v1423 = vld [vmem:[#allocation8 + $0xb38] sm:$0xff]
        %v1424 = vld [vmem:[#allocation8 + $0xb40] sm:$0xff]
        %v1425 = vld [vmem:[#allocation8 + $0xb48] sm:$0xff]
        %v1426 = vld [vmem:[#allocation8 + $0xb50] sm:$0xff]
        %v1427 = vld [vmem:[#allocation8 + $0xb58] sm:$0xff]
        %v1428 = vld [vmem:[#allocation8 + $0xb60] sm:$0xff]
        %v1429 = vld [vmem:[#allocation8 + $0xb68] sm:$0xff]
        %v1430 = vld [vmem:[#allocation8 + $0xb70] sm:$0xff]
        %v1431 = vld [vmem:[#allocation8 + $0xb78] sm:$0xff]
        %v1432 = vld [vmem:[#allocation8 + $0xb80] sm:$0xff]
        %v1433 = vld [vmem:[#allocation8 + $0xb88] sm:$0xff]
        %v1434 = vld [vmem:[#allocation8 + $0xb90] sm:$0xff]
        %v1435 = vld [vmem:[#allocation8 + $0xb98] sm:$0xff]
        %v1436 = vld [vmem:[#allocation8 + $0xba0] sm:$0xff]
        %v1437 = vld [vmem:[#allocation8 + $0xba8] sm:$0xff]
        %v1438 = vld [vmem:[#allocation8 + $0xbb0] sm:$0xff]
        %v1439 = vld [vmem:[#allocation8 + $0xbb8] sm:$0xff]
        %v1440 = vld [vmem:[#allocation8 + $0xbc0] sm:$0xff]
        %v1441 = vld [vmem:[#allocation8 + $0xbc8] sm:$0xff]
        %v1442 = vld [vmem:[#allocation8 + $0xbd0] sm:$0xff]
        %v1443 = vld [vmem:[#allocation8 + $0xbd8] sm:$0xff]
        %v1444 = vld [vmem:[#allocation8 + $0xbe0] sm:$0xff]
        %v1445 = vld [vmem:[#allocation8 + $0xbe8] sm:$0xff]
        %v1446 = vld [vmem:[#allocation8 + $0xbf0] sm:$0xff]
        %v1447 = vld [vmem:[#allocation8 + $0xbf8] sm:$0xff]
        %v1448 = vld [vmem:[#allocation8 + $0xc00] sm:$0xff]
        %v1449 = vld [vmem:[#allocation8 + $0xc08] sm:$0xff]
        %v1450 = vld [vmem:[#allocation8 + $0xc10] sm:$0xff]
        %v1451 = vld [vmem:[#allocation8 + $0xc18] sm:$0xff]
        %v1452 = vld [vmem:[#allocation8 + $0xc20] sm:$0xff]
        %v1453 = vld [vmem:[#allocation8 + $0xc28] sm:$0xff]
        %v1454 = vld [vmem:[#allocation8 + $0xc30] sm:$0xff]
        %v1455 = vld [vmem:[#allocation8 + $0xc38] sm:$0xff]
        %v1456 = vld [vmem:[#allocation8 + $0xc40] sm:$0xff]
        %v1457 = vld [vmem:[#allocation8 + $0xc48] sm:$0xff]
        %v1458 = vld [vmem:[#allocation8 + $0xc50] sm:$0xff]
        %v1459 = vld [vmem:[#allocation8 + $0xc58] sm:$0xff]
        %v1460 = vld [vmem:[#allocation8 + $0xc60] sm:$0xff]
        %v1461 = vld [vmem:[#allocation8 + $0xc68] sm:$0xff]
        %v1462 = vld [vmem:[#allocation8 + $0xc70] sm:$0xff]
        %v1463 = vld [vmem:[#allocation8 + $0xc78] sm:$0xff]
        %v1464 = vld [vmem:[#allocation8 + $0xc80] sm:$0xff]
        %v1465 = vld [vmem:[#allocation8 + $0xc88] sm:$0xff]
        %v1466 = vld [vmem:[#allocation8 + $0xc90] sm:$0xff]
        %v1467 = vld [vmem:[#allocation8 + $0xc98] sm:$0xff]
        %v1468 = vld [vmem:[#allocation8 + $0xca0] sm:$0xff]
        %v1469 = vld [vmem:[#allocation8 + $0xca8] sm:$0xff]
        %v1470 = vld [vmem:[#allocation8 + $0xcb0] sm:$0xff]
        %v1471 = vld [vmem:[#allocation8 + $0xcb8] sm:$0xff]
        %v1472 = vld [vmem:[#allocation8 + $0xcc0] sm:$0xff]
        %v1473 = vld [vmem:[#allocation8 + $0xcc8] sm:$0xff]
        %v1474 = vld [vmem:[#allocation8 + $0xcd0] sm:$0xff]
        %v1475 = vld [vmem:[#allocation8 + $0xcd8] sm:$0xff]
        %v1476 = vld [vmem:[#allocation8 + $0xce0] sm:$0xff]
        %v1477 = vld [vmem:[#allocation8 + $0xce8] sm:$0xff]
        %v1478 = vld [vmem:[#allocation8 + $0xcf0] sm:$0xff]
        %v1479 = vld [vmem:[#allocation8 + $0xcf8] sm:$0xff]
        %v1480 = vld [vmem:[#allocation8 + $0xd00] sm:$0xff]
        %v1481 = vld [vmem:[#allocation8 + $0xd08] sm:$0xff]
        %v1482 = vld [vmem:[#allocation8 + $0xd10] sm:$0xff]
        %v1483 = vld [vmem:[#allocation8 + $0xd18] sm:$0xff]
        %v1484 = vld [vmem:[#allocation8 + $0xd20] sm:$0xff]
        %v1485 = vld [vmem:[#allocation8 + $0xd28] sm:$0xff]
        %v1486 = vld [vmem:[#allocation8 + $0xd30] sm:$0xff]
        %v1487 = vld [vmem:[#allocation8 + $0xd38] sm:$0xff]
        %v1488 = vld [vmem:[#allocation8 + $0xd40] sm:$0xff]
        %v1489 = vld [vmem:[#allocation8 + $0xd48] sm:$0xff]
        %v1490 = vld [vmem:[#allocation8 + $0xd50] sm:$0xff]
        %v1491 = vld [vmem:[#allocation8 + $0xd58] sm:$0xff]
        %v1492 = vld [vmem:[#allocation8 + $0xd60] sm:$0xff]
        %v1493 = vld [vmem:[#allocation8 + $0xd68] sm:$0xff]
        %v1494 = vld [vmem:[#allocation8 + $0xd70] sm:$0xff]
        %v1495 = vld [vmem:[#allocation8 + $0xd78] sm:$0xff]
        %v1496 = vld [vmem:[#allocation8 + $0xd80] sm:$0xff]
        %v1497 = vld [vmem:[#allocation8 + $0xd88] sm:$0xff]
        %v1498 = vld [vmem:[#allocation8 + $0xd90] sm:$0xff]
        %v1499 = vld [vmem:[#allocation8 + $0xd98] sm:$0xff]
        %v1500 = vld [vmem:[#allocation8 + $0xda0] sm:$0xff]
        %v1501 = vld [vmem:[#allocation8 + $0xda8] sm:$0xff]
        %v1502 = vld [vmem:[#allocation8 + $0xdb0] sm:$0xff]
        %v1503 = vld [vmem:[#allocation8 + $0xdb8] sm:$0xff]
        %v1504 = vld [vmem:[#allocation8 + $0xdc0] sm:$0xff]
        %v1505 = vld [vmem:[#allocation8 + $0xdc8] sm:$0xff]
        %v1506 = vld [vmem:[#allocation8 + $0xdd0] sm:$0xff]
        %v1507 = vld [vmem:[#allocation8 + $0xdd8] sm:$0xff]
        %v1508 = vld [vmem:[#allocation8 + $0xde0] sm:$0xff]
        %v1509 = vld [vmem:[#allocation8 + $0xde8] sm:$0xff]
        %v1510 = vld [vmem:[#allocation8 + $0xdf0] sm:$0xff]
        %v1511 = vld [vmem:[#allocation8 + $0xdf8] sm:$0xff]
        %v1512 = vld [vmem:[#allocation8 + $0xe00] sm:$0xff]
        %v1513 = vld [vmem:[#allocation8 + $0xe08] sm:$0xff]
        %v1514 = vld [vmem:[#allocation8 + $0xe10] sm:$0xff]
        %v1515 = vld [vmem:[#allocation8 + $0xe18] sm:$0xff]
        %v1516 = vld [vmem:[#allocation8 + $0xe20] sm:$0xff]
        %v1517 = vld [vmem:[#allocation8 + $0xe28] sm:$0xff]
        %v1518 = vld [vmem:[#allocation8 + $0xe30] sm:$0xff]
        %v1519 = vld [vmem:[#allocation8 + $0xe38] sm:$0xff]
        %v1520 = vld [vmem:[#allocation8 + $0xe40] sm:$0xff]
        %v1521 = vld [vmem:[#allocation8 + $0xe48] sm:$0xff]
        %v1522 = vld [vmem:[#allocation8 + $0xe50] sm:$0xff]
        %v1523 = vld [vmem:[#allocation8 + $0xe58] sm:$0xff]
        %v1524 = vld [vmem:[#allocation8 + $0xe60] sm:$0xff]
        %v1525 = vld [vmem:[#allocation8 + $0xe68] sm:$0xff]
        %v1526 = vld [vmem:[#allocation8 + $0xe70] sm:$0xff]
        %v1527 = vld [vmem:[#allocation8 + $0xe78] sm:$0xff]
        %v1528 = vld [vmem:[#allocation8 + $0xe80] sm:$0xff]
        %v1529 = vld [vmem:[#allocation8 + $0xe88] sm:$0xff]
        %v1530 = vld [vmem:[#allocation8 + $0xe90] sm:$0xff]
        %v1531 = vld [vmem:[#allocation8 + $0xe98] sm:$0xff]
        %v1532 = vld [vmem:[#allocation8 + $0xea0] sm:$0xff]
        %v1533 = vld [vmem:[#allocation8 + $0xea8] sm:$0xff]
        %v1534 = vld [vmem:[#allocation8 + $0xeb0] sm:$0xff]
        %v1535 = vld [vmem:[#allocation8 + $0xeb8] sm:$0xff]
        %v1536 = vld [vmem:[#allocation8 + $0xec0] sm:$0xff]
        %v1537 = vld [vmem:[#allocation8 + $0xec8] sm:$0xff]
        %v1538 = vld [vmem:[#allocation8 + $0xed0] sm:$0xff]
        %v1539 = vld [vmem:[#allocation8 + $0xed8] sm:$0xff]
        %v1540 = vld [vmem:[#allocation8 + $0xee0] sm:$0xff]
        %v1541 = vld [vmem:[#allocation8 + $0xee8] sm:$0xff]
        %v1542 = vld [vmem:[#allocation8 + $0xef0] sm:$0xff]
        %v1543 = vld [vmem:[#allocation8 + $0xef8] sm:$0xff]
        %v1544 = vld [vmem:[#allocation8 + $0xf00] sm:$0xff]
        %v1545 = vld [vmem:[#allocation8 + $0xf08] sm:$0xff]
        %v1546 = vld [vmem:[#allocation8 + $0xf10] sm:$0xff]
        %v1547 = vld [vmem:[#allocation8 + $0xf18] sm:$0xff]
        %v1548 = vld [vmem:[#allocation8 + $0xf20] sm:$0xff]
        %v1549 = vld [vmem:[#allocation8 + $0xf28] sm:$0xff]
        %v1550 = vld [vmem:[#allocation8 + $0xf30] sm:$0xff]
        %v1551 = vld [vmem:[#allocation8 + $0xf38] sm:$0xff]
        %v1552 = vld [vmem:[#allocation8 + $0xf40] sm:$0xff]
        %v1553 = vld [vmem:[#allocation8 + $0xf48] sm:$0xff]
        %v1554 = vld [vmem:[#allocation8 + $0xf50] sm:$0xff]
        %v1555 = vld [vmem:[#allocation8 + $0xf58] sm:$0xff]
        %v1556 = vld [vmem:[#allocation8 + $0xf60] sm:$0xff]
        %v1557 = vld [vmem:[#allocation8 + $0xf68] sm:$0xff]
        %v1558 = vld [vmem:[#allocation8 + $0xf70] sm:$0xff]
        %v1559 = vld [vmem:[#allocation8 + $0xf78] sm:$0xff]
        %v1560 = vld [vmem:[#allocation8 + $0xf80] sm:$0xff]
        %v1561 = vld [vmem:[#allocation8 + $0xf88] sm:$0xff]
        %v1562 = vld [vmem:[#allocation8 + $0xf90] sm:$0xff]
        %v1563 = vld [vmem:[#allocation8 + $0xf98] sm:$0xff]
        %v1564 = vld [vmem:[#allocation8 + $0xfa0] sm:$0xff]
        %v1565 = vld [vmem:[#allocation8 + $0xfa8] sm:$0xff]
        %v1566 = vld [vmem:[#allocation8 + $0xfb0] sm:$0xff]
        %v1567 = vld [vmem:[#allocation8 + $0xfb8] sm:$0xff]
        %v1568 = vld [vmem:[#allocation8 + $0xfc0] sm:$0xff]
        %v1569 = vld [vmem:[#allocation8 + $0xfc8] sm:$0xff]
        %v1570 = vld [vmem:[#allocation8 + $0xfd0] sm:$0xff]
        %v1571 = vld [vmem:[#allocation8 + $0xfd8] sm:$0xff]
        %v1572 = vld [vmem:[#allocation8 + $0xfe0] sm:$0xff]
        %v1573 = vld [vmem:[#allocation8 + $0xfe8] sm:$0xff]
        %v1574 = vld [vmem:[#allocation8 + $0xff0] sm:$0xff]
        %v1575 = vld [vmem:[#allocation8 + $0xff8] sm:$0xff]
        %v1576 = vld [vmem:[#allocation10] sm:$0xff]
        %v1578 = vlaneseq
        %v1579 = vshrl.u32 %v1578, 7
        %v1580 = vsub.s32 0, %v1579
        %v1581 = vrot.slane %v1576, %v1580
        %v1582 = vlaneseq
        %v1583 = vshrl.u32 %v1582, 7
        %v1584 = vsub.s32 1, %v1583
        %v1585 = vrot.slane %v1576, %v1584
        %v1586 = vlaneseq
        %v1587 = vshrl.u32 %v1586, 7
        %v1588 = vsub.s32 2, %v1587
        %v1589 = vrot.slane %v1576, %v1588
        %v1590 = vlaneseq
        %v1591 = vshrl.u32 %v1590, 7
        %v1592 = vsub.s32 3, %v1591
        %v1593 = vrot.slane %v1576, %v1592
        %v1594 = vlaneseq
        %v1595 = vshrl.u32 %v1594, 7
        %v1596 = vsub.s32 4, %v1595
        %v1597 = vrot.slane %v1576, %v1596
        %v1598 = vlaneseq
        %v1599 = vshrl.u32 %v1598, 7
        %v1600 = vsub.s32 5, %v1599
        %v1601 = vrot.slane %v1576, %v1600
        %v1602 = vlaneseq
        %v1603 = vshrl.u32 %v1602, 7
        %v1604 = vsub.s32 6, %v1603
        %v1605 = vrot.slane %v1576, %v1604
        %v1606 = vlaneseq
        %v1607 = vshrl.u32 %v1606, 7
        %v1608 = vsub.s32 7, %v1607
        %v1609 = vrot.slane %v1576, %v1608
        %v2130 = vunpack.c.l.b16 %v1064
        %v2131 = vunpack.c.h.b16 %v1064
        %v2132 = vunpack.c.l.b16 %v1065
        %v2133 = vunpack.c.h.b16 %v1065
        %v2134 = vunpack.c.l.b16 %v1066
        %v2135 = vunpack.c.h.b16 %v1066
        %v2136 = vunpack.c.l.b16 %v1067
        %v2137 = vunpack.c.h.b16 %v1067
        %v2138 = vunpack.c.l.b16 %v1068
        %v2139 = vunpack.c.h.b16 %v1068
        %v2140 = vunpack.c.l.b16 %v1069
        %v2141 = vunpack.c.h.b16 %v1069
        %v2142 = vunpack.c.l.b16 %v1070
        %v2143 = vunpack.c.h.b16 %v1070
        %v2144 = vunpack.c.l.b16 %v1071
        %v2145 = vunpack.c.h.b16 %v1071
        %v2146 = vunpack.c.l.b16 %v1072
        %v2147 = vunpack.c.h.b16 %v1072
        %v2148 = vunpack.c.l.b16 %v1073
        %v2149 = vunpack.c.h.b16 %v1073
        %v2150 = vunpack.c.l.b16 %v1074
        %v2151 = vunpack.c.h.b16 %v1074
        %v2152 = vunpack.c.l.b16 %v1075
        %v2153 = vunpack.c.h.b16 %v1075
        %v2154 = vunpack.c.l.b16 %v1076
        %v2155 = vunpack.c.h.b16 %v1076
        %v2156 = vunpack.c.l.b16 %v1077
        %v2157 = vunpack.c.h.b16 %v1077
        %v2158 = vunpack.c.l.b16 %v1078
        %v2159 = vunpack.c.h.b16 %v1078
        %v2160 = vunpack.c.l.b16 %v1079
        %v2161 = vunpack.c.h.b16 %v1079
        %v2162 = vunpack.c.l.b16 %v1080
        %v2163 = vunpack.c.h.b16 %v1080
        %v2164 = vunpack.c.l.b16 %v1081
        %v2165 = vunpack.c.h.b16 %v1081
        %v2166 = vunpack.c.l.b16 %v1082
        %v2167 = vunpack.c.h.b16 %v1082
        %v2168 = vunpack.c.l.b16 %v1083
        %v2169 = vunpack.c.h.b16 %v1083
        %v2170 = vunpack.c.l.b16 %v1084
        %v2171 = vunpack.c.h.b16 %v1084
        %v2172 = vunpack.c.l.b16 %v1085
        %v2173 = vunpack.c.h.b16 %v1085
        %v2174 = vunpack.c.l.b16 %v1086
        %v2175 = vunpack.c.h.b16 %v1086
        %v2176 = vunpack.c.l.b16 %v1087
        %v2177 = vunpack.c.h.b16 %v1087
        %v2178 = vunpack.c.l.b16 %v1088
        %v2179 = vunpack.c.h.b16 %v1088
        %v2180 = vunpack.c.l.b16 %v1089
        %v2181 = vunpack.c.h.b16 %v1089
        %v2182 = vunpack.c.l.b16 %v1090
        %v2183 = vunpack.c.h.b16 %v1090
        %v2184 = vunpack.c.l.b16 %v1091
        %v2185 = vunpack.c.h.b16 %v1091
        %v2186 = vunpack.c.l.b16 %v1092
        %v2187 = vunpack.c.h.b16 %v1092
        %v2188 = vunpack.c.l.b16 %v1093
        %v2189 = vunpack.c.h.b16 %v1093
        %v2190 = vunpack.c.l.b16 %v1094
        %v2191 = vunpack.c.h.b16 %v1094
        %v2192 = vunpack.c.l.b16 %v1095
        %v2193 = vunpack.c.h.b16 %v1095
        %v2194 = vunpack.c.l.b16 %v1096
        %v2195 = vunpack.c.h.b16 %v1096
        %v2196 = vunpack.c.l.b16 %v1097
        %v2197 = vunpack.c.h.b16 %v1097
        %v2198 = vunpack.c.l.b16 %v1098
        %v2199 = vunpack.c.h.b16 %v1098
        %v2200 = vunpack.c.l.b16 %v1099
        %v2201 = vunpack.c.h.b16 %v1099
        %v2202 = vunpack.c.l.b16 %v1100
        %v2203 = vunpack.c.h.b16 %v1100
        %v2204 = vunpack.c.l.b16 %v1101
        %v2205 = vunpack.c.h.b16 %v1101
        %v2206 = vunpack.c.l.b16 %v1102
        %v2207 = vunpack.c.h.b16 %v1102
        %v2208 = vunpack.c.l.b16 %v1103
        %v2209 = vunpack.c.h.b16 %v1103
        %v2210 = vunpack.c.l.b16 %v1104
        %v2211 = vunpack.c.h.b16 %v1104
        %v2212 = vunpack.c.l.b16 %v1105
        %v2213 = vunpack.c.h.b16 %v1105
        %v2214 = vunpack.c.l.b16 %v1106
        %v2215 = vunpack.c.h.b16 %v1106
        %v2216 = vunpack.c.l.b16 %v1107
        %v2217 = vunpack.c.h.b16 %v1107
        %v2218 = vunpack.c.l.b16 %v1108
        %v2219 = vunpack.c.h.b16 %v1108
        %v2220 = vunpack.c.l.b16 %v1109
        %v2221 = vunpack.c.h.b16 %v1109
        %v2222 = vunpack.c.l.b16 %v1110
        %v2223 = vunpack.c.h.b16 %v1110
        %v2224 = vunpack.c.l.b16 %v1111
        %v2225 = vunpack.c.h.b16 %v1111
        %v2226 = vunpack.c.l.b16 %v1112
        %v2227 = vunpack.c.h.b16 %v1112
        %v2228 = vunpack.c.l.b16 %v1113
        %v2229 = vunpack.c.h.b16 %v1113
        %v2230 = vunpack.c.l.b16 %v1114
        %v2231 = vunpack.c.h.b16 %v1114
        %v2232 = vunpack.c.l.b16 %v1115
        %v2233 = vunpack.c.h.b16 %v1115
        %v2234 = vunpack.c.l.b16 %v1116
        %v2235 = vunpack.c.h.b16 %v1116
        %v2236 = vunpack.c.l.b16 %v1117
        %v2237 = vunpack.c.h.b16 %v1117
        %v2238 = vunpack.c.l.b16 %v1118
        %v2239 = vunpack.c.h.b16 %v1118
        %v2240 = vunpack.c.l.b16 %v1119
        %v2241 = vunpack.c.h.b16 %v1119
        %v2242 = vunpack.c.l.b16 %v1120
        %v2243 = vunpack.c.h.b16 %v1120
        %v2244 = vunpack.c.l.b16 %v1121
        %v2245 = vunpack.c.h.b16 %v1121
        %v2246 = vunpack.c.l.b16 %v1122
        %v2247 = vunpack.c.h.b16 %v1122
        %v2248 = vunpack.c.l.b16 %v1123
        %v2249 = vunpack.c.h.b16 %v1123
        %v2250 = vunpack.c.l.b16 %v1124
        %v2251 = vunpack.c.h.b16 %v1124
        %v2252 = vunpack.c.l.b16 %v1125
        %v2253 = vunpack.c.h.b16 %v1125
        %v2254 = vunpack.c.l.b16 %v1126
        %v2255 = vunpack.c.h.b16 %v1126
        %v2256 = vunpack.c.l.b16 %v1127
        %v2257 = vunpack.c.h.b16 %v1127
        %v2258 = vunpack.c.l.b16 %v1128
        %v2259 = vunpack.c.h.b16 %v1128
        %v2260 = vunpack.c.l.b16 %v1129
        %v2261 = vunpack.c.h.b16 %v1129
        %v2262 = vunpack.c.l.b16 %v1130
        %v2263 = vunpack.c.h.b16 %v1130
        %v2264 = vunpack.c.l.b16 %v1131
        %v2265 = vunpack.c.h.b16 %v1131
        %v2266 = vunpack.c.l.b16 %v1132
        %v2267 = vunpack.c.h.b16 %v1132
        %v2268 = vunpack.c.l.b16 %v1133
        %v2269 = vunpack.c.h.b16 %v1133
        %v2270 = vunpack.c.l.b16 %v1134
        %v2271 = vunpack.c.h.b16 %v1134
        %v2272 = vunpack.c.l.b16 %v1135
        %v2273 = vunpack.c.h.b16 %v1135
        %v2274 = vunpack.c.l.b16 %v1136
        %v2275 = vunpack.c.h.b16 %v1136
        %v2276 = vunpack.c.l.b16 %v1137
        %v2277 = vunpack.c.h.b16 %v1137
        %v2278 = vunpack.c.l.b16 %v1138
        %v2279 = vunpack.c.h.b16 %v1138
        %v2280 = vunpack.c.l.b16 %v1139
        %v2281 = vunpack.c.h.b16 %v1139
        %v2282 = vunpack.c.l.b16 %v1140
        %v2283 = vunpack.c.h.b16 %v1140
        %v2284 = vunpack.c.l.b16 %v1141
        %v2285 = vunpack.c.h.b16 %v1141
        %v2286 = vunpack.c.l.b16 %v1142
        %v2287 = vunpack.c.h.b16 %v1142
        %v2288 = vunpack.c.l.b16 %v1143
        %v2289 = vunpack.c.h.b16 %v1143
        %v2290 = vunpack.c.l.b16 %v1144
        %v2291 = vunpack.c.h.b16 %v1144
        %v2292 = vunpack.c.l.b16 %v1145
        %v2293 = vunpack.c.h.b16 %v1145
        %v2294 = vunpack.c.l.b16 %v1146
        %v2295 = vunpack.c.h.b16 %v1146
        %v2296 = vunpack.c.l.b16 %v1147
        %v2297 = vunpack.c.h.b16 %v1147
        %v2298 = vunpack.c.l.b16 %v1148
        %v2299 = vunpack.c.h.b16 %v1148
        %v2300 = vunpack.c.l.b16 %v1149
        %v2301 = vunpack.c.h.b16 %v1149
        %v2302 = vunpack.c.l.b16 %v1150
        %v2303 = vunpack.c.h.b16 %v1150
        %v2304 = vunpack.c.l.b16 %v1151
        %v2305 = vunpack.c.h.b16 %v1151
        %v2306 = vunpack.c.l.b16 %v1152
        %v2307 = vunpack.c.h.b16 %v1152
        %v2308 = vunpack.c.l.b16 %v1153
        %v2309 = vunpack.c.h.b16 %v1153
        %v2310 = vunpack.c.l.b16 %v1154
        %v2311 = vunpack.c.h.b16 %v1154
        %v2312 = vunpack.c.l.b16 %v1155
        %v2313 = vunpack.c.h.b16 %v1155
        %v2314 = vunpack.c.l.b16 %v1156
        %v2315 = vunpack.c.h.b16 %v1156
        %v2316 = vunpack.c.l.b16 %v1157
        %v2317 = vunpack.c.h.b16 %v1157
        %v2318 = vunpack.c.l.b16 %v1158
        %v2319 = vunpack.c.h.b16 %v1158
        %v2320 = vunpack.c.l.b16 %v1159
        %v2321 = vunpack.c.h.b16 %v1159
        %v2322 = vunpack.c.l.b16 %v1160
        %v2323 = vunpack.c.h.b16 %v1160
        %v2324 = vunpack.c.l.b16 %v1161
        %v2325 = vunpack.c.h.b16 %v1161
        %v2326 = vunpack.c.l.b16 %v1162
        %v2327 = vunpack.c.h.b16 %v1162
        %v2328 = vunpack.c.l.b16 %v1163
        %v2329 = vunpack.c.h.b16 %v1163
        %v2330 = vunpack.c.l.b16 %v1164
        %v2331 = vunpack.c.h.b16 %v1164
        %v2332 = vunpack.c.l.b16 %v1165
        %v2333 = vunpack.c.h.b16 %v1165
        %v2334 = vunpack.c.l.b16 %v1166
        %v2335 = vunpack.c.h.b16 %v1166
        %v2336 = vunpack.c.l.b16 %v1167
        %v2337 = vunpack.c.h.b16 %v1167
        %v2338 = vunpack.c.l.b16 %v1168
        %v2339 = vunpack.c.h.b16 %v1168
        %v2340 = vunpack.c.l.b16 %v1169
        %v2341 = vunpack.c.h.b16 %v1169
        %v2342 = vunpack.c.l.b16 %v1170
        %v2343 = vunpack.c.h.b16 %v1170
        %v2344 = vunpack.c.l.b16 %v1171
        %v2345 = vunpack.c.h.b16 %v1171
        %v2346 = vunpack.c.l.b16 %v1172
        %v2347 = vunpack.c.h.b16 %v1172
        %v2348 = vunpack.c.l.b16 %v1173
        %v2349 = vunpack.c.h.b16 %v1173
        %v2350 = vunpack.c.l.b16 %v1174
        %v2351 = vunpack.c.h.b16 %v1174
        %v2352 = vunpack.c.l.b16 %v1175
        %v2353 = vunpack.c.h.b16 %v1175
        %v2354 = vunpack.c.l.b16 %v1176
        %v2355 = vunpack.c.h.b16 %v1176
        %v2356 = vunpack.c.l.b16 %v1177
        %v2357 = vunpack.c.h.b16 %v1177
        %v2358 = vunpack.c.l.b16 %v1178
        %v2359 = vunpack.c.h.b16 %v1178
        %v2360 = vunpack.c.l.b16 %v1179
        %v2361 = vunpack.c.h.b16 %v1179
        %v2362 = vunpack.c.l.b16 %v1180
        %v2363 = vunpack.c.h.b16 %v1180
        %v2364 = vunpack.c.l.b16 %v1181
        %v2365 = vunpack.c.h.b16 %v1181
        %v2366 = vunpack.c.l.b16 %v1182
        %v2367 = vunpack.c.h.b16 %v1182
        %v2368 = vunpack.c.l.b16 %v1183
        %v2369 = vunpack.c.h.b16 %v1183
        %v2370 = vunpack.c.l.b16 %v1184
        %v2371 = vunpack.c.h.b16 %v1184
        %v2372 = vunpack.c.l.b16 %v1185
        %v2373 = vunpack.c.h.b16 %v1185
        %v2374 = vunpack.c.l.b16 %v1186
        %v2375 = vunpack.c.h.b16 %v1186
        %v2376 = vunpack.c.l.b16 %v1187
        %v2377 = vunpack.c.h.b16 %v1187
        %v2378 = vunpack.c.l.b16 %v1188
        %v2379 = vunpack.c.h.b16 %v1188
        %v2380 = vunpack.c.l.b16 %v1189
        %v2381 = vunpack.c.h.b16 %v1189
        %v2382 = vunpack.c.l.b16 %v1190
        %v2383 = vunpack.c.h.b16 %v1190
        %v2384 = vunpack.c.l.b16 %v1191
        %v2385 = vunpack.c.h.b16 %v1191
        %v2386 = vunpack.c.l.b16 %v1192
        %v2387 = vunpack.c.h.b16 %v1192
        %v2388 = vunpack.c.l.b16 %v1193
        %v2389 = vunpack.c.h.b16 %v1193
        %v2390 = vunpack.c.l.b16 %v1194
        %v2391 = vunpack.c.h.b16 %v1194
        %v2392 = vunpack.c.l.b16 %v1195
        %v2393 = vunpack.c.h.b16 %v1195
        %v2394 = vunpack.c.l.b16 %v1196
        %v2395 = vunpack.c.h.b16 %v1196
        %v2396 = vunpack.c.l.b16 %v1197
        %v2397 = vunpack.c.h.b16 %v1197
        %v2398 = vunpack.c.l.b16 %v1198
        %v2399 = vunpack.c.h.b16 %v1198
        %v2400 = vunpack.c.l.b16 %v1199
        %v2401 = vunpack.c.h.b16 %v1199
        %v2402 = vunpack.c.l.b16 %v1200
        %v2403 = vunpack.c.h.b16 %v1200
        %v2404 = vunpack.c.l.b16 %v1201
        %v2405 = vunpack.c.h.b16 %v1201
        %v2406 = vunpack.c.l.b16 %v1202
        %v2407 = vunpack.c.h.b16 %v1202
        %v2408 = vunpack.c.l.b16 %v1203
        %v2409 = vunpack.c.h.b16 %v1203
        %v2410 = vunpack.c.l.b16 %v1204
        %v2411 = vunpack.c.h.b16 %v1204
        %v2412 = vunpack.c.l.b16 %v1205
        %v2413 = vunpack.c.h.b16 %v1205
        %v2414 = vunpack.c.l.b16 %v1206
        %v2415 = vunpack.c.h.b16 %v1206
        %v2416 = vunpack.c.l.b16 %v1207
        %v2417 = vunpack.c.h.b16 %v1207
        %v2418 = vunpack.c.l.b16 %v1208
        %v2419 = vunpack.c.h.b16 %v1208
        %v2420 = vunpack.c.l.b16 %v1209
        %v2421 = vunpack.c.h.b16 %v1209
        %v2422 = vunpack.c.l.b16 %v1210
        %v2423 = vunpack.c.h.b16 %v1210
        %v2424 = vunpack.c.l.b16 %v1211
        %v2425 = vunpack.c.h.b16 %v1211
        %v2426 = vunpack.c.l.b16 %v1212
        %v2427 = vunpack.c.h.b16 %v1212
        %v2428 = vunpack.c.l.b16 %v1213
        %v2429 = vunpack.c.h.b16 %v1213
        %v2430 = vunpack.c.l.b16 %v1214
        %v2431 = vunpack.c.h.b16 %v1214
        %v2432 = vunpack.c.l.b16 %v1215
        %v2433 = vunpack.c.h.b16 %v1215
        %v2434 = vunpack.c.l.b16 %v1216
        %v2435 = vunpack.c.h.b16 %v1216
        %v2436 = vunpack.c.l.b16 %v1217
        %v2437 = vunpack.c.h.b16 %v1217
        %v2438 = vunpack.c.l.b16 %v1218
        %v2439 = vunpack.c.h.b16 %v1218
        %v2440 = vunpack.c.l.b16 %v1219
        %v2441 = vunpack.c.h.b16 %v1219
        %v2442 = vunpack.c.l.b16 %v1220
        %v2443 = vunpack.c.h.b16 %v1220
        %v2444 = vunpack.c.l.b16 %v1221
        %v2445 = vunpack.c.h.b16 %v1221
        %v2446 = vunpack.c.l.b16 %v1222
        %v2447 = vunpack.c.h.b16 %v1222
        %v2448 = vunpack.c.l.b16 %v1223
        %v2449 = vunpack.c.h.b16 %v1223
        %v2450 = vunpack.c.l.b16 %v1224
        %v2451 = vunpack.c.h.b16 %v1224
        %v2452 = vunpack.c.l.b16 %v1225
        %v2453 = vunpack.c.h.b16 %v1225
        %v2454 = vunpack.c.l.b16 %v1226
        %v2455 = vunpack.c.h.b16 %v1226
        %v2456 = vunpack.c.l.b16 %v1227
        %v2457 = vunpack.c.h.b16 %v1227
        %v2458 = vunpack.c.l.b16 %v1228
        %v2459 = vunpack.c.h.b16 %v1228
        %v2460 = vunpack.c.l.b16 %v1229
        %v2461 = vunpack.c.h.b16 %v1229
        %v2462 = vunpack.c.l.b16 %v1230
        %v2463 = vunpack.c.h.b16 %v1230
        %v2464 = vunpack.c.l.b16 %v1231
        %v2465 = vunpack.c.h.b16 %v1231
        %v2466 = vunpack.c.l.b16 %v1232
        %v2467 = vunpack.c.h.b16 %v1232
        %v2468 = vunpack.c.l.b16 %v1233
        %v2469 = vunpack.c.h.b16 %v1233
        %v2470 = vunpack.c.l.b16 %v1234
        %v2471 = vunpack.c.h.b16 %v1234
        %v2472 = vunpack.c.l.b16 %v1235
        %v2473 = vunpack.c.h.b16 %v1235
        %v2474 = vunpack.c.l.b16 %v1236
        %v2475 = vunpack.c.h.b16 %v1236
        %v2476 = vunpack.c.l.b16 %v1237
        %v2477 = vunpack.c.h.b16 %v1237
        %v2478 = vunpack.c.l.b16 %v1238
        %v2479 = vunpack.c.h.b16 %v1238
        %v2480 = vunpack.c.l.b16 %v1239
        %v2481 = vunpack.c.h.b16 %v1239
        %v2482 = vunpack.c.l.b16 %v1240
        %v2483 = vunpack.c.h.b16 %v1240
        %v2484 = vunpack.c.l.b16 %v1241
        %v2485 = vunpack.c.h.b16 %v1241
        %v2486 = vunpack.c.l.b16 %v1242
        %v2487 = vunpack.c.h.b16 %v1242
        %v2488 = vunpack.c.l.b16 %v1243
        %v2489 = vunpack.c.h.b16 %v1243
        %v2490 = vunpack.c.l.b16 %v1244
        %v2491 = vunpack.c.h.b16 %v1244
        %v2492 = vunpack.c.l.b16 %v1245
        %v2493 = vunpack.c.h.b16 %v1245
        %v2494 = vunpack.c.l.b16 %v1246
        %v2495 = vunpack.c.h.b16 %v1246
        %v2496 = vunpack.c.l.b16 %v1247
        %v2497 = vunpack.c.h.b16 %v1247
        %v2498 = vunpack.c.l.b16 %v1248
        %v2499 = vunpack.c.h.b16 %v1248
        %v2500 = vunpack.c.l.b16 %v1249
        %v2501 = vunpack.c.h.b16 %v1249
        %v2502 = vunpack.c.l.b16 %v1250
        %v2503 = vunpack.c.h.b16 %v1250
        %v2504 = vunpack.c.l.b16 %v1251
        %v2505 = vunpack.c.h.b16 %v1251
        %v2506 = vunpack.c.l.b16 %v1252
        %v2507 = vunpack.c.h.b16 %v1252
        %v2508 = vunpack.c.l.b16 %v1253
        %v2509 = vunpack.c.h.b16 %v1253
        %v2510 = vunpack.c.l.b16 %v1254
        %v2511 = vunpack.c.h.b16 %v1254
        %v2512 = vunpack.c.l.b16 %v1255
        %v2513 = vunpack.c.h.b16 %v1255
        %v2514 = vunpack.c.l.b16 %v1256
        %v2515 = vunpack.c.h.b16 %v1256
        %v2516 = vunpack.c.l.b16 %v1257
        %v2517 = vunpack.c.h.b16 %v1257
        %v2518 = vunpack.c.l.b16 %v1258
        %v2519 = vunpack.c.h.b16 %v1258
        %v2520 = vunpack.c.l.b16 %v1259
        %v2521 = vunpack.c.h.b16 %v1259
        %v2522 = vunpack.c.l.b16 %v1260
        %v2523 = vunpack.c.h.b16 %v1260
        %v2524 = vunpack.c.l.b16 %v1261
        %v2525 = vunpack.c.h.b16 %v1261
        %v2526 = vunpack.c.l.b16 %v1262
        %v2527 = vunpack.c.h.b16 %v1262
        %v2528 = vunpack.c.l.b16 %v1263
        %v2529 = vunpack.c.h.b16 %v1263
        %v2530 = vunpack.c.l.b16 %v1264
        %v2531 = vunpack.c.h.b16 %v1264
        %v2532 = vunpack.c.l.b16 %v1265
        %v2533 = vunpack.c.h.b16 %v1265
        %v2534 = vunpack.c.l.b16 %v1266
        %v2535 = vunpack.c.h.b16 %v1266
        %v2536 = vunpack.c.l.b16 %v1267
        %v2537 = vunpack.c.h.b16 %v1267
        %v2538 = vunpack.c.l.b16 %v1268
        %v2539 = vunpack.c.h.b16 %v1268
        %v2540 = vunpack.c.l.b16 %v1269
        %v2541 = vunpack.c.h.b16 %v1269
        %v2542 = vunpack.c.l.b16 %v1270
        %v2543 = vunpack.c.h.b16 %v1270
        %v2544 = vunpack.c.l.b16 %v1271
        %v2545 = vunpack.c.h.b16 %v1271
        %v2546 = vunpack.c.l.b16 %v1272
        %v2547 = vunpack.c.h.b16 %v1272
        %v2548 = vunpack.c.l.b16 %v1273
        %v2549 = vunpack.c.h.b16 %v1273
        %v2550 = vunpack.c.l.b16 %v1274
        %v2551 = vunpack.c.h.b16 %v1274
        %v2552 = vunpack.c.l.b16 %v1275
        %v2553 = vunpack.c.h.b16 %v1275
        %v2554 = vunpack.c.l.b16 %v1276
        %v2555 = vunpack.c.h.b16 %v1276
        %v2556 = vunpack.c.l.b16 %v1277
        %v2557 = vunpack.c.h.b16 %v1277
        %v2558 = vunpack.c.l.b16 %v1278
        %v2559 = vunpack.c.h.b16 %v1278
        %v2560 = vunpack.c.l.b16 %v1279
        %v2561 = vunpack.c.h.b16 %v1279
        %v2562 = vunpack.c.l.b16 %v1280
        %v2563 = vunpack.c.h.b16 %v1280
        %v2564 = vunpack.c.l.b16 %v1281
        %v2565 = vunpack.c.h.b16 %v1281
        %v2566 = vunpack.c.l.b16 %v1282
        %v2567 = vunpack.c.h.b16 %v1282
        %v2568 = vunpack.c.l.b16 %v1283
        %v2569 = vunpack.c.h.b16 %v1283
        %v2570 = vunpack.c.l.b16 %v1284
        %v2571 = vunpack.c.h.b16 %v1284
        %v2572 = vunpack.c.l.b16 %v1285
        %v2573 = vunpack.c.h.b16 %v1285
        %v2574 = vunpack.c.l.b16 %v1286
        %v2575 = vunpack.c.h.b16 %v1286
        %v2576 = vunpack.c.l.b16 %v1287
        %v2577 = vunpack.c.h.b16 %v1287
        %v2578 = vunpack.c.l.b16 %v1288
        %v2579 = vunpack.c.h.b16 %v1288
        %v2580 = vunpack.c.l.b16 %v1289
        %v2581 = vunpack.c.h.b16 %v1289
        %v2582 = vunpack.c.l.b16 %v1290
        %v2583 = vunpack.c.h.b16 %v1290
        %v2584 = vunpack.c.l.b16 %v1291
        %v2585 = vunpack.c.h.b16 %v1291
        %v2586 = vunpack.c.l.b16 %v1292
        %v2587 = vunpack.c.h.b16 %v1292
        %v2588 = vunpack.c.l.b16 %v1293
        %v2589 = vunpack.c.h.b16 %v1293
        %v2590 = vunpack.c.l.b16 %v1294
        %v2591 = vunpack.c.h.b16 %v1294
        %v2592 = vunpack.c.l.b16 %v1295
        %v2593 = vunpack.c.h.b16 %v1295
        %v2594 = vunpack.c.l.b16 %v1296
        %v2595 = vunpack.c.h.b16 %v1296
        %v2596 = vunpack.c.l.b16 %v1297
        %v2597 = vunpack.c.h.b16 %v1297
        %v2598 = vunpack.c.l.b16 %v1298
        %v2599 = vunpack.c.h.b16 %v1298
        %v2600 = vunpack.c.l.b16 %v1299
        %v2601 = vunpack.c.h.b16 %v1299
        %v2602 = vunpack.c.l.b16 %v1300
        %v2603 = vunpack.c.h.b16 %v1300
        %v2604 = vunpack.c.l.b16 %v1301
        %v2605 = vunpack.c.h.b16 %v1301
        %v2606 = vunpack.c.l.b16 %v1302
        %v2607 = vunpack.c.h.b16 %v1302
        %v2608 = vunpack.c.l.b16 %v1303
        %v2609 = vunpack.c.h.b16 %v1303
        %v2610 = vunpack.c.l.b16 %v1304
        %v2611 = vunpack.c.h.b16 %v1304
        %v2612 = vunpack.c.l.b16 %v1305
        %v2613 = vunpack.c.h.b16 %v1305
        %v2614 = vunpack.c.l.b16 %v1306
        %v2615 = vunpack.c.h.b16 %v1306
        %v2616 = vunpack.c.l.b16 %v1307
        %v2617 = vunpack.c.h.b16 %v1307
        %v2618 = vunpack.c.l.b16 %v1308
        %v2619 = vunpack.c.h.b16 %v1308
        %v2620 = vunpack.c.l.b16 %v1309
        %v2621 = vunpack.c.h.b16 %v1309
        %v2622 = vunpack.c.l.b16 %v1310
        %v2623 = vunpack.c.h.b16 %v1310
        %v2624 = vunpack.c.l.b16 %v1311
        %v2625 = vunpack.c.h.b16 %v1311
        %v2626 = vunpack.c.l.b16 %v1312
        %v2627 = vunpack.c.h.b16 %v1312
        %v2628 = vunpack.c.l.b16 %v1313
        %v2629 = vunpack.c.h.b16 %v1313
        %v2630 = vunpack.c.l.b16 %v1314
        %v2631 = vunpack.c.h.b16 %v1314
        %v2632 = vunpack.c.l.b16 %v1315
        %v2633 = vunpack.c.h.b16 %v1315
        %v2634 = vunpack.c.l.b16 %v1316
        %v2635 = vunpack.c.h.b16 %v1316
        %v2636 = vunpack.c.l.b16 %v1317
        %v2637 = vunpack.c.h.b16 %v1317
        %v2638 = vunpack.c.l.b16 %v1318
        %v2639 = vunpack.c.h.b16 %v1318
        %v2640 = vunpack.c.l.b16 %v1319
        %v2641 = vunpack.c.h.b16 %v1319
        %v2642 = vunpack.c.l.b16 %v1320
        %v2643 = vunpack.c.h.b16 %v1320
        %v2644 = vunpack.c.l.b16 %v1321
        %v2645 = vunpack.c.h.b16 %v1321
        %v2646 = vunpack.c.l.b16 %v1322
        %v2647 = vunpack.c.h.b16 %v1322
        %v2648 = vunpack.c.l.b16 %v1323
        %v2649 = vunpack.c.h.b16 %v1323
        %v2650 = vunpack.c.l.b16 %v1324
        %v2651 = vunpack.c.h.b16 %v1324
        %v2652 = vunpack.c.l.b16 %v1325
        %v2653 = vunpack.c.h.b16 %v1325
        %v2654 = vunpack.c.l.b16 %v1326
        %v2655 = vunpack.c.h.b16 %v1326
        %v2656 = vunpack.c.l.b16 %v1327
        %v2657 = vunpack.c.h.b16 %v1327
        %v2658 = vunpack.c.l.b16 %v1328
        %v2659 = vunpack.c.h.b16 %v1328
        %v2660 = vunpack.c.l.b16 %v1329
        %v2661 = vunpack.c.h.b16 %v1329
        %v2662 = vunpack.c.l.b16 %v1330
        %v2663 = vunpack.c.h.b16 %v1330
        %v2664 = vunpack.c.l.b16 %v1331
        %v2665 = vunpack.c.h.b16 %v1331
        %v2666 = vunpack.c.l.b16 %v1332
        %v2667 = vunpack.c.h.b16 %v1332
        %v2668 = vunpack.c.l.b16 %v1333
        %v2669 = vunpack.c.h.b16 %v1333
        %v2670 = vunpack.c.l.b16 %v1334
        %v2671 = vunpack.c.h.b16 %v1334
        %v2672 = vunpack.c.l.b16 %v1335
        %v2673 = vunpack.c.h.b16 %v1335
        %v2674 = vunpack.c.l.b16 %v1336
        %v2675 = vunpack.c.h.b16 %v1336
        %v2676 = vunpack.c.l.b16 %v1337
        %v2677 = vunpack.c.h.b16 %v1337
        %v2678 = vunpack.c.l.b16 %v1338
        %v2679 = vunpack.c.h.b16 %v1338
        %v2680 = vunpack.c.l.b16 %v1339
        %v2681 = vunpack.c.h.b16 %v1339
        %v2682 = vunpack.c.l.b16 %v1340
        %v2683 = vunpack.c.h.b16 %v1340
        %v2684 = vunpack.c.l.b16 %v1341
        %v2685 = vunpack.c.h.b16 %v1341
        %v2686 = vunpack.c.l.b16 %v1342
        %v2687 = vunpack.c.h.b16 %v1342
        %v2688 = vunpack.c.l.b16 %v1343
        %v2689 = vunpack.c.h.b16 %v1343
        %v2690 = vunpack.c.l.b16 %v1344
        %v2691 = vunpack.c.h.b16 %v1344
        %v2692 = vunpack.c.l.b16 %v1345
        %v2693 = vunpack.c.h.b16 %v1345
        %v2694 = vunpack.c.l.b16 %v1346
        %v2695 = vunpack.c.h.b16 %v1346
        %v2696 = vunpack.c.l.b16 %v1347
        %v2697 = vunpack.c.h.b16 %v1347
        %v2698 = vunpack.c.l.b16 %v1348
        %v2699 = vunpack.c.h.b16 %v1348
        %v2700 = vunpack.c.l.b16 %v1349
        %v2701 = vunpack.c.h.b16 %v1349
        %v2702 = vunpack.c.l.b16 %v1350
        %v2703 = vunpack.c.h.b16 %v1350
        %v2704 = vunpack.c.l.b16 %v1351
        %v2705 = vunpack.c.h.b16 %v1351
        %v2706 = vunpack.c.l.b16 %v1352
        %v2707 = vunpack.c.h.b16 %v1352
        %v2708 = vunpack.c.l.b16 %v1353
        %v2709 = vunpack.c.h.b16 %v1353
        %v2710 = vunpack.c.l.b16 %v1354
        %v2711 = vunpack.c.h.b16 %v1354
        %v2712 = vunpack.c.l.b16 %v1355
        %v2713 = vunpack.c.h.b16 %v1355
        %v2714 = vunpack.c.l.b16 %v1356
        %v2715 = vunpack.c.h.b16 %v1356
        %v2716 = vunpack.c.l.b16 %v1357
        %v2717 = vunpack.c.h.b16 %v1357
        %v2718 = vunpack.c.l.b16 %v1358
        %v2719 = vunpack.c.h.b16 %v1358
        %v2720 = vunpack.c.l.b16 %v1359
        %v2721 = vunpack.c.h.b16 %v1359
        %v2722 = vunpack.c.l.b16 %v1360
        %v2723 = vunpack.c.h.b16 %v1360
        %v2724 = vunpack.c.l.b16 %v1361
        %v2725 = vunpack.c.h.b16 %v1361
        %v2726 = vunpack.c.l.b16 %v1362
        %v2727 = vunpack.c.h.b16 %v1362
        %v2728 = vunpack.c.l.b16 %v1363
        %v2729 = vunpack.c.h.b16 %v1363
        %v2730 = vunpack.c.l.b16 %v1364
        %v2731 = vunpack.c.h.b16 %v1364
        %v2732 = vunpack.c.l.b16 %v1365
        %v2733 = vunpack.c.h.b16 %v1365
        %v2734 = vunpack.c.l.b16 %v1366
        %v2735 = vunpack.c.h.b16 %v1366
        %v2736 = vunpack.c.l.b16 %v1367
        %v2737 = vunpack.c.h.b16 %v1367
        %v2738 = vunpack.c.l.b16 %v1368
        %v2739 = vunpack.c.h.b16 %v1368
        %v2740 = vunpack.c.l.b16 %v1369
        %v2741 = vunpack.c.h.b16 %v1369
        %v2742 = vunpack.c.l.b16 %v1370
        %v2743 = vunpack.c.h.b16 %v1370
        %v2744 = vunpack.c.l.b16 %v1371
        %v2745 = vunpack.c.h.b16 %v1371
        %v2746 = vunpack.c.l.b16 %v1372
        %v2747 = vunpack.c.h.b16 %v1372
        %v2748 = vunpack.c.l.b16 %v1373
        %v2749 = vunpack.c.h.b16 %v1373
        %v2750 = vunpack.c.l.b16 %v1374
        %v2751 = vunpack.c.h.b16 %v1374
        %v2752 = vunpack.c.l.b16 %v1375
        %v2753 = vunpack.c.h.b16 %v1375
        %v2754 = vunpack.c.l.b16 %v1376
        %v2755 = vunpack.c.h.b16 %v1376
        %v2756 = vunpack.c.l.b16 %v1377
        %v2757 = vunpack.c.h.b16 %v1377
        %v2758 = vunpack.c.l.b16 %v1378
        %v2759 = vunpack.c.h.b16 %v1378
        %v2760 = vunpack.c.l.b16 %v1379
        %v2761 = vunpack.c.h.b16 %v1379
        %v2762 = vunpack.c.l.b16 %v1380
        %v2763 = vunpack.c.h.b16 %v1380
        %v2764 = vunpack.c.l.b16 %v1381
        %v2765 = vunpack.c.h.b16 %v1381
        %v2766 = vunpack.c.l.b16 %v1382
        %v2767 = vunpack.c.h.b16 %v1382
        %v2768 = vunpack.c.l.b16 %v1383
        %v2769 = vunpack.c.h.b16 %v1383
        %v2770 = vunpack.c.l.b16 %v1384
        %v2771 = vunpack.c.h.b16 %v1384
        %v2772 = vunpack.c.l.b16 %v1385
        %v2773 = vunpack.c.h.b16 %v1385
        %v2774 = vunpack.c.l.b16 %v1386
        %v2775 = vunpack.c.h.b16 %v1386
        %v2776 = vunpack.c.l.b16 %v1387
        %v2777 = vunpack.c.h.b16 %v1387
        %v2778 = vunpack.c.l.b16 %v1388
        %v2779 = vunpack.c.h.b16 %v1388
        %v2780 = vunpack.c.l.b16 %v1389
        %v2781 = vunpack.c.h.b16 %v1389
        %v2782 = vunpack.c.l.b16 %v1390
        %v2783 = vunpack.c.h.b16 %v1390
        %v2784 = vunpack.c.l.b16 %v1391
        %v2785 = vunpack.c.h.b16 %v1391
        %v2786 = vunpack.c.l.b16 %v1392
        %v2787 = vunpack.c.h.b16 %v1392
        %v2788 = vunpack.c.l.b16 %v1393
        %v2789 = vunpack.c.h.b16 %v1393
        %v2790 = vunpack.c.l.b16 %v1394
        %v2791 = vunpack.c.h.b16 %v1394
        %v2792 = vunpack.c.l.b16 %v1395
        %v2793 = vunpack.c.h.b16 %v1395
        %v2794 = vunpack.c.l.b16 %v1396
        %v2795 = vunpack.c.h.b16 %v1396
        %v2796 = vunpack.c.l.b16 %v1397
        %v2797 = vunpack.c.h.b16 %v1397
        %v2798 = vunpack.c.l.b16 %v1398
        %v2799 = vunpack.c.h.b16 %v1398
        %v2800 = vunpack.c.l.b16 %v1399
        %v2801 = vunpack.c.h.b16 %v1399
        %v2802 = vunpack.c.l.b16 %v1400
        %v2803 = vunpack.c.h.b16 %v1400
        %v2804 = vunpack.c.l.b16 %v1401
        %v2805 = vunpack.c.h.b16 %v1401
        %v2806 = vunpack.c.l.b16 %v1402
        %v2807 = vunpack.c.h.b16 %v1402
        %v2808 = vunpack.c.l.b16 %v1403
        %v2809 = vunpack.c.h.b16 %v1403
        %v2810 = vunpack.c.l.b16 %v1404
        %v2811 = vunpack.c.h.b16 %v1404
        %v2812 = vunpack.c.l.b16 %v1405
        %v2813 = vunpack.c.h.b16 %v1405
        %v2814 = vunpack.c.l.b16 %v1406
        %v2815 = vunpack.c.h.b16 %v1406
        %v2816 = vunpack.c.l.b16 %v1407
        %v2817 = vunpack.c.h.b16 %v1407
        %v2818 = vunpack.c.l.b16 %v1408
        %v2819 = vunpack.c.h.b16 %v1408
        %v2820 = vunpack.c.l.b16 %v1409
        %v2821 = vunpack.c.h.b16 %v1409
        %v2822 = vunpack.c.l.b16 %v1410
        %v2823 = vunpack.c.h.b16 %v1410
        %v2824 = vunpack.c.l.b16 %v1411
        %v2825 = vunpack.c.h.b16 %v1411
        %v2826 = vunpack.c.l.b16 %v1412
        %v2827 = vunpack.c.h.b16 %v1412
        %v2828 = vunpack.c.l.b16 %v1413
        %v2829 = vunpack.c.h.b16 %v1413
        %v2830 = vunpack.c.l.b16 %v1414
        %v2831 = vunpack.c.h.b16 %v1414
        %v2832 = vunpack.c.l.b16 %v1415
        %v2833 = vunpack.c.h.b16 %v1415
        %v2834 = vunpack.c.l.b16 %v1416
        %v2835 = vunpack.c.h.b16 %v1416
        %v2836 = vunpack.c.l.b16 %v1417
        %v2837 = vunpack.c.h.b16 %v1417
        %v2838 = vunpack.c.l.b16 %v1418
        %v2839 = vunpack.c.h.b16 %v1418
        %v2840 = vunpack.c.l.b16 %v1419
        %v2841 = vunpack.c.h.b16 %v1419
        %v2842 = vunpack.c.l.b16 %v1420
        %v2843 = vunpack.c.h.b16 %v1420
        %v2844 = vunpack.c.l.b16 %v1421
        %v2845 = vunpack.c.h.b16 %v1421
        %v2846 = vunpack.c.l.b16 %v1422
        %v2847 = vunpack.c.h.b16 %v1422
        %v2848 = vunpack.c.l.b16 %v1423
        %v2849 = vunpack.c.h.b16 %v1423
        %v2850 = vunpack.c.l.b16 %v1424
        %v2851 = vunpack.c.h.b16 %v1424
        %v2852 = vunpack.c.l.b16 %v1425
        %v2853 = vunpack.c.h.b16 %v1425
        %v2854 = vunpack.c.l.b16 %v1426
        %v2855 = vunpack.c.h.b16 %v1426
        %v2856 = vunpack.c.l.b16 %v1427
        %v2857 = vunpack.c.h.b16 %v1427
        %v2858 = vunpack.c.l.b16 %v1428
        %v2859 = vunpack.c.h.b16 %v1428
        %v2860 = vunpack.c.l.b16 %v1429
        %v2861 = vunpack.c.h.b16 %v1429
        %v2862 = vunpack.c.l.b16 %v1430
        %v2863 = vunpack.c.h.b16 %v1430
        %v2864 = vunpack.c.l.b16 %v1431
        %v2865 = vunpack.c.h.b16 %v1431
        %v2866 = vunpack.c.l.b16 %v1432
        %v2867 = vunpack.c.h.b16 %v1432
        %v2868 = vunpack.c.l.b16 %v1433
        %v2869 = vunpack.c.h.b16 %v1433
        %v2870 = vunpack.c.l.b16 %v1434
        %v2871 = vunpack.c.h.b16 %v1434
        %v2872 = vunpack.c.l.b16 %v1435
        %v2873 = vunpack.c.h.b16 %v1435
        %v2874 = vunpack.c.l.b16 %v1436
        %v2875 = vunpack.c.h.b16 %v1436
        %v2876 = vunpack.c.l.b16 %v1437
        %v2877 = vunpack.c.h.b16 %v1437
        %v2878 = vunpack.c.l.b16 %v1438
        %v2879 = vunpack.c.h.b16 %v1438
        %v2880 = vunpack.c.l.b16 %v1439
        %v2881 = vunpack.c.h.b16 %v1439
        %v2882 = vunpack.c.l.b16 %v1440
        %v2883 = vunpack.c.h.b16 %v1440
        %v2884 = vunpack.c.l.b16 %v1441
        %v2885 = vunpack.c.h.b16 %v1441
        %v2886 = vunpack.c.l.b16 %v1442
        %v2887 = vunpack.c.h.b16 %v1442
        %v2888 = vunpack.c.l.b16 %v1443
        %v2889 = vunpack.c.h.b16 %v1443
        %v2890 = vunpack.c.l.b16 %v1444
        %v2891 = vunpack.c.h.b16 %v1444
        %v2892 = vunpack.c.l.b16 %v1445
        %v2893 = vunpack.c.h.b16 %v1445
        %v2894 = vunpack.c.l.b16 %v1446
        %v2895 = vunpack.c.h.b16 %v1446
        %v2896 = vunpack.c.l.b16 %v1447
        %v2897 = vunpack.c.h.b16 %v1447
        %v2898 = vunpack.c.l.b16 %v1448
        %v2899 = vunpack.c.h.b16 %v1448
        %v2900 = vunpack.c.l.b16 %v1449
        %v2901 = vunpack.c.h.b16 %v1449
        %v2902 = vunpack.c.l.b16 %v1450
        %v2903 = vunpack.c.h.b16 %v1450
        %v2904 = vunpack.c.l.b16 %v1451
        %v2905 = vunpack.c.h.b16 %v1451
        %v2906 = vunpack.c.l.b16 %v1452
        %v2907 = vunpack.c.h.b16 %v1452
        %v2908 = vunpack.c.l.b16 %v1453
        %v2909 = vunpack.c.h.b16 %v1453
        %v2910 = vunpack.c.l.b16 %v1454
        %v2911 = vunpack.c.h.b16 %v1454
        %v2912 = vunpack.c.l.b16 %v1455
        %v2913 = vunpack.c.h.b16 %v1455
        %v2914 = vunpack.c.l.b16 %v1456
        %v2915 = vunpack.c.h.b16 %v1456
        %v2916 = vunpack.c.l.b16 %v1457
        %v2917 = vunpack.c.h.b16 %v1457
        %v2918 = vunpack.c.l.b16 %v1458
        %v2919 = vunpack.c.h.b16 %v1458
        %v2920 = vunpack.c.l.b16 %v1459
        %v2921 = vunpack.c.h.b16 %v1459
        %v2922 = vunpack.c.l.b16 %v1460
        %v2923 = vunpack.c.h.b16 %v1460
        %v2924 = vunpack.c.l.b16 %v1461
        %v2925 = vunpack.c.h.b16 %v1461
        %v2926 = vunpack.c.l.b16 %v1462
        %v2927 = vunpack.c.h.b16 %v1462
        %v2928 = vunpack.c.l.b16 %v1463
        %v2929 = vunpack.c.h.b16 %v1463
        %v2930 = vunpack.c.l.b16 %v1464
        %v2931 = vunpack.c.h.b16 %v1464
        %v2932 = vunpack.c.l.b16 %v1465
        %v2933 = vunpack.c.h.b16 %v1465
        %v2934 = vunpack.c.l.b16 %v1466
        %v2935 = vunpack.c.h.b16 %v1466
        %v2936 = vunpack.c.l.b16 %v1467
        %v2937 = vunpack.c.h.b16 %v1467
        %v2938 = vunpack.c.l.b16 %v1468
        %v2939 = vunpack.c.h.b16 %v1468
        %v2940 = vunpack.c.l.b16 %v1469
        %v2941 = vunpack.c.h.b16 %v1469
        %v2942 = vunpack.c.l.b16 %v1470
        %v2943 = vunpack.c.h.b16 %v1470
        %v2944 = vunpack.c.l.b16 %v1471
        %v2945 = vunpack.c.h.b16 %v1471
        %v2946 = vunpack.c.l.b16 %v1472
        %v2947 = vunpack.c.h.b16 %v1472
        %v2948 = vunpack.c.l.b16 %v1473
        %v2949 = vunpack.c.h.b16 %v1473
        %v2950 = vunpack.c.l.b16 %v1474
        %v2951 = vunpack.c.h.b16 %v1474
        %v2952 = vunpack.c.l.b16 %v1475
        %v2953 = vunpack.c.h.b16 %v1475
        %v2954 = vunpack.c.l.b16 %v1476
        %v2955 = vunpack.c.h.b16 %v1476
        %v2956 = vunpack.c.l.b16 %v1477
        %v2957 = vunpack.c.h.b16 %v1477
        %v2958 = vunpack.c.l.b16 %v1478
        %v2959 = vunpack.c.h.b16 %v1478
        %v2960 = vunpack.c.l.b16 %v1479
        %v2961 = vunpack.c.h.b16 %v1479
        %v2962 = vunpack.c.l.b16 %v1480
        %v2963 = vunpack.c.h.b16 %v1480
        %v2964 = vunpack.c.l.b16 %v1481
        %v2965 = vunpack.c.h.b16 %v1481
        %v2966 = vunpack.c.l.b16 %v1482
        %v2967 = vunpack.c.h.b16 %v1482
        %v2968 = vunpack.c.l.b16 %v1483
        %v2969 = vunpack.c.h.b16 %v1483
        %v2970 = vunpack.c.l.b16 %v1484
        %v2971 = vunpack.c.h.b16 %v1484
        %v2972 = vunpack.c.l.b16 %v1485
        %v2973 = vunpack.c.h.b16 %v1485
        %v2974 = vunpack.c.l.b16 %v1486
        %v2975 = vunpack.c.h.b16 %v1486
        %v2976 = vunpack.c.l.b16 %v1487
        %v2977 = vunpack.c.h.b16 %v1487
        %v2978 = vunpack.c.l.b16 %v1488
        %v2979 = vunpack.c.h.b16 %v1488
        %v2980 = vunpack.c.l.b16 %v1489
        %v2981 = vunpack.c.h.b16 %v1489
        %v2982 = vunpack.c.l.b16 %v1490
        %v2983 = vunpack.c.h.b16 %v1490
        %v2984 = vunpack.c.l.b16 %v1491
        %v2985 = vunpack.c.h.b16 %v1491
        %v2986 = vunpack.c.l.b16 %v1492
        %v2987 = vunpack.c.h.b16 %v1492
        %v2988 = vunpack.c.l.b16 %v1493
        %v2989 = vunpack.c.h.b16 %v1493
        %v2990 = vunpack.c.l.b16 %v1494
        %v2991 = vunpack.c.h.b16 %v1494
        %v2992 = vunpack.c.l.b16 %v1495
        %v2993 = vunpack.c.h.b16 %v1495
        %v2994 = vunpack.c.l.b16 %v1496
        %v2995 = vunpack.c.h.b16 %v1496
        %v2996 = vunpack.c.l.b16 %v1497
        %v2997 = vunpack.c.h.b16 %v1497
        %v2998 = vunpack.c.l.b16 %v1498
        %v2999 = vunpack.c.h.b16 %v1498
        %v3000 = vunpack.c.l.b16 %v1499
        %v3001 = vunpack.c.h.b16 %v1499
        %v3002 = vunpack.c.l.b16 %v1500
        %v3003 = vunpack.c.h.b16 %v1500
        %v3004 = vunpack.c.l.b16 %v1501
        %v3005 = vunpack.c.h.b16 %v1501
        %v3006 = vunpack.c.l.b16 %v1502
        %v3007 = vunpack.c.h.b16 %v1502
        %v3008 = vunpack.c.l.b16 %v1503
        %v3009 = vunpack.c.h.b16 %v1503
        %v3010 = vunpack.c.l.b16 %v1504
        %v3011 = vunpack.c.h.b16 %v1504
        %v3012 = vunpack.c.l.b16 %v1505
        %v3013 = vunpack.c.h.b16 %v1505
        %v3014 = vunpack.c.l.b16 %v1506
        %v3015 = vunpack.c.h.b16 %v1506
        %v3016 = vunpack.c.l.b16 %v1507
        %v3017 = vunpack.c.h.b16 %v1507
        %v3018 = vunpack.c.l.b16 %v1508
        %v3019 = vunpack.c.h.b16 %v1508
        %v3020 = vunpack.c.l.b16 %v1509
        %v3021 = vunpack.c.h.b16 %v1509
        %v3022 = vunpack.c.l.b16 %v1510
        %v3023 = vunpack.c.h.b16 %v1510
        %v3024 = vunpack.c.l.b16 %v1511
        %v3025 = vunpack.c.h.b16 %v1511
        %v3026 = vunpack.c.l.b16 %v1512
        %v3027 = vunpack.c.h.b16 %v1512
        %v3028 = vunpack.c.l.b16 %v1513
        %v3029 = vunpack.c.h.b16 %v1513
        %v3030 = vunpack.c.l.b16 %v1514
        %v3031 = vunpack.c.h.b16 %v1514
        %v3032 = vunpack.c.l.b16 %v1515
        %v3033 = vunpack.c.h.b16 %v1515
        %v3034 = vunpack.c.l.b16 %v1516
        %v3035 = vunpack.c.h.b16 %v1516
        %v3036 = vunpack.c.l.b16 %v1517
        %v3037 = vunpack.c.h.b16 %v1517
        %v3038 = vunpack.c.l.b16 %v1518
        %v3039 = vunpack.c.h.b16 %v1518
        %v3040 = vunpack.c.l.b16 %v1519
        %v3041 = vunpack.c.h.b16 %v1519
        %v3042 = vunpack.c.l.b16 %v1520
        %v3043 = vunpack.c.h.b16 %v1520
        %v3044 = vunpack.c.l.b16 %v1521
        %v3045 = vunpack.c.h.b16 %v1521
        %v3046 = vunpack.c.l.b16 %v1522
        %v3047 = vunpack.c.h.b16 %v1522
        %v3048 = vunpack.c.l.b16 %v1523
        %v3049 = vunpack.c.h.b16 %v1523
        %v3050 = vunpack.c.l.b16 %v1524
        %v3051 = vunpack.c.h.b16 %v1524
        %v3052 = vunpack.c.l.b16 %v1525
        %v3053 = vunpack.c.h.b16 %v1525
        %v3054 = vunpack.c.l.b16 %v1526
        %v3055 = vunpack.c.h.b16 %v1526
        %v3056 = vunpack.c.l.b16 %v1527
        %v3057 = vunpack.c.h.b16 %v1527
        %v3058 = vunpack.c.l.b16 %v1528
        %v3059 = vunpack.c.h.b16 %v1528
        %v3060 = vunpack.c.l.b16 %v1529
        %v3061 = vunpack.c.h.b16 %v1529
        %v3062 = vunpack.c.l.b16 %v1530
        %v3063 = vunpack.c.h.b16 %v1530
        %v3064 = vunpack.c.l.b16 %v1531
        %v3065 = vunpack.c.h.b16 %v1531
        %v3066 = vunpack.c.l.b16 %v1532
        %v3067 = vunpack.c.h.b16 %v1532
        %v3068 = vunpack.c.l.b16 %v1533
        %v3069 = vunpack.c.h.b16 %v1533
        %v3070 = vunpack.c.l.b16 %v1534
        %v3071 = vunpack.c.h.b16 %v1534
        %v3072 = vunpack.c.l.b16 %v1535
        %v3073 = vunpack.c.h.b16 %v1535
        %v3074 = vunpack.c.l.b16 %v1536
        %v3075 = vunpack.c.h.b16 %v1536
        %v3076 = vunpack.c.l.b16 %v1537
        %v3077 = vunpack.c.h.b16 %v1537
        %v3078 = vunpack.c.l.b16 %v1538
        %v3079 = vunpack.c.h.b16 %v1538
        %v3080 = vunpack.c.l.b16 %v1539
        %v3081 = vunpack.c.h.b16 %v1539
        %v3082 = vunpack.c.l.b16 %v1540
        %v3083 = vunpack.c.h.b16 %v1540
        %v3084 = vunpack.c.l.b16 %v1541
        %v3085 = vunpack.c.h.b16 %v1541
        %v3086 = vunpack.c.l.b16 %v1542
        %v3087 = vunpack.c.h.b16 %v1542
        %v3088 = vunpack.c.l.b16 %v1543
        %v3089 = vunpack.c.h.b16 %v1543
        %v3090 = vunpack.c.l.b16 %v1544
        %v3091 = vunpack.c.h.b16 %v1544
        %v3092 = vunpack.c.l.b16 %v1545
        %v3093 = vunpack.c.h.b16 %v1545
        %v3094 = vunpack.c.l.b16 %v1546
        %v3095 = vunpack.c.h.b16 %v1546
        %v3096 = vunpack.c.l.b16 %v1547
        %v3097 = vunpack.c.h.b16 %v1547
        %v3098 = vunpack.c.l.b16 %v1548
        %v3099 = vunpack.c.h.b16 %v1548
        %v3100 = vunpack.c.l.b16 %v1549
        %v3101 = vunpack.c.h.b16 %v1549
        %v3102 = vunpack.c.l.b16 %v1550
        %v3103 = vunpack.c.h.b16 %v1550
        %v3104 = vunpack.c.l.b16 %v1551
        %v3105 = vunpack.c.h.b16 %v1551
        %v3106 = vunpack.c.l.b16 %v1552
        %v3107 = vunpack.c.h.b16 %v1552
        %v3108 = vunpack.c.l.b16 %v1553
        %v3109 = vunpack.c.h.b16 %v1553
        %v3110 = vunpack.c.l.b16 %v1554
        %v3111 = vunpack.c.h.b16 %v1554
        %v3112 = vunpack.c.l.b16 %v1555
        %v3113 = vunpack.c.h.b16 %v1555
        %v3114 = vunpack.c.l.b16 %v1556
        %v3115 = vunpack.c.h.b16 %v1556
        %v3116 = vunpack.c.l.b16 %v1557
        %v3117 = vunpack.c.h.b16 %v1557
        %v3118 = vunpack.c.l.b16 %v1558
        %v3119 = vunpack.c.h.b16 %v1558
        %v3120 = vunpack.c.l.b16 %v1559
        %v3121 = vunpack.c.h.b16 %v1559
        %v3122 = vunpack.c.l.b16 %v1560
        %v3123 = vunpack.c.h.b16 %v1560
        %v3124 = vunpack.c.l.b16 %v1561
        %v3125 = vunpack.c.h.b16 %v1561
        %v3126 = vunpack.c.l.b16 %v1562
        %v3127 = vunpack.c.h.b16 %v1562
        %v3128 = vunpack.c.l.b16 %v1563
        %v3129 = vunpack.c.h.b16 %v1563
        %v3130 = vunpack.c.l.b16 %v1564
        %v3131 = vunpack.c.h.b16 %v1564
        %v3132 = vunpack.c.l.b16 %v1565
        %v3133 = vunpack.c.h.b16 %v1565
        %v3134 = vunpack.c.l.b16 %v1566
        %v3135 = vunpack.c.h.b16 %v1566
        %v3136 = vunpack.c.l.b16 %v1567
        %v3137 = vunpack.c.h.b16 %v1567
        %v3138 = vunpack.c.l.b16 %v1568
        %v3139 = vunpack.c.h.b16 %v1568
        %v3140 = vunpack.c.l.b16 %v1569
        %v3141 = vunpack.c.h.b16 %v1569
        %v3142 = vunpack.c.l.b16 %v1570
        %v3143 = vunpack.c.h.b16 %v1570
        %v3144 = vunpack.c.l.b16 %v1571
        %v3145 = vunpack.c.h.b16 %v1571
        %v3146 = vunpack.c.l.b16 %v1572
        %v3147 = vunpack.c.h.b16 %v1572
        %v3148 = vunpack.c.l.b16 %v1573
        %v3149 = vunpack.c.h.b16 %v1573
        %v3150 = vunpack.c.l.b16 %v1574
        %v3151 = vunpack.c.h.b16 %v1574
        %v3152 = vunpack.c.l.b16 %v1575
        %v3153 = vunpack.c.h.b16 %v1575
        %v3154 = vpack.c.b16 %v2138, %v2130
        %v3155 = vpack.c.b16 %v2139, %v2131
        %v3156 = vpack.c.b16 %v2140, %v2132
        %v3157 = vpack.c.b16 %v2141, %v2133
        %v3158 = vpack.c.b16 %v2142, %v2134
        %v3159 = vpack.c.b16 %v2143, %v2135
        %v3160 = vpack.c.b16 %v2144, %v2136
        %v3161 = vpack.c.b16 %v2145, %v2137
        %v3162 = vpack.c.b16 %v2154, %v2146
        %v3163 = vpack.c.b16 %v2155, %v2147
        %v3164 = vpack.c.b16 %v2156, %v2148
        %v3165 = vpack.c.b16 %v2157, %v2149
        %v3166 = vpack.c.b16 %v2158, %v2150
        %v3167 = vpack.c.b16 %v2159, %v2151
        %v3168 = vpack.c.b16 %v2160, %v2152
        %v3169 = vpack.c.b16 %v2161, %v2153
        %v3170 = vpack.c.b16 %v2170, %v2162
        %v3171 = vpack.c.b16 %v2171, %v2163
        %v3172 = vpack.c.b16 %v2172, %v2164
        %v3173 = vpack.c.b16 %v2173, %v2165
        %v3174 = vpack.c.b16 %v2174, %v2166
        %v3175 = vpack.c.b16 %v2175, %v2167
        %v3176 = vpack.c.b16 %v2176, %v2168
        %v3177 = vpack.c.b16 %v2177, %v2169
        %v3178 = vpack.c.b16 %v2186, %v2178
        %v3179 = vpack.c.b16 %v2187, %v2179
        %v3180 = vpack.c.b16 %v2188, %v2180
        %v3181 = vpack.c.b16 %v2189, %v2181
        %v3182 = vpack.c.b16 %v2190, %v2182
        %v3183 = vpack.c.b16 %v2191, %v2183
        %v3184 = vpack.c.b16 %v2192, %v2184
        %v3185 = vpack.c.b16 %v2193, %v2185
        %v3186 = vpack.c.b16 %v2202, %v2194
        %v3187 = vpack.c.b16 %v2203, %v2195
        %v3188 = vpack.c.b16 %v2204, %v2196
        %v3189 = vpack.c.b16 %v2205, %v2197
        %v3190 = vpack.c.b16 %v2206, %v2198
        %v3191 = vpack.c.b16 %v2207, %v2199
        %v3192 = vpack.c.b16 %v2208, %v2200
        %v3193 = vpack.c.b16 %v2209, %v2201
        %v3194 = vpack.c.b16 %v2218, %v2210
        %v3195 = vpack.c.b16 %v2219, %v2211
        %v3196 = vpack.c.b16 %v2220, %v2212
        %v3197 = vpack.c.b16 %v2221, %v2213
        %v3198 = vpack.c.b16 %v2222, %v2214
        %v3199 = vpack.c.b16 %v2223, %v2215
        %v3200 = vpack.c.b16 %v2224, %v2216
        %v3201 = vpack.c.b16 %v2225, %v2217
        %v3202 = vpack.c.b16 %v2234, %v2226
        %v3203 = vpack.c.b16 %v2235, %v2227
        %v3204 = vpack.c.b16 %v2236, %v2228
        %v3205 = vpack.c.b16 %v2237, %v2229
        %v3206 = vpack.c.b16 %v2238, %v2230
        %v3207 = vpack.c.b16 %v2239, %v2231
        %v3208 = vpack.c.b16 %v2240, %v2232
        %v3209 = vpack.c.b16 %v2241, %v2233
        %v3210 = vpack.c.b16 %v2250, %v2242
        %v3211 = vpack.c.b16 %v2251, %v2243
        %v3212 = vpack.c.b16 %v2252, %v2244
        %v3213 = vpack.c.b16 %v2253, %v2245
        %v3214 = vpack.c.b16 %v2254, %v2246
        %v3215 = vpack.c.b16 %v2255, %v2247
        %v3216 = vpack.c.b16 %v2256, %v2248
        %v3217 = vpack.c.b16 %v2257, %v2249
        %v3218 = vpack.c.b16 %v2266, %v2258
        %v3219 = vpack.c.b16 %v2267, %v2259
        %v3220 = vpack.c.b16 %v2268, %v2260
        %v3221 = vpack.c.b16 %v2269, %v2261
        %v3222 = vpack.c.b16 %v2270, %v2262
        %v3223 = vpack.c.b16 %v2271, %v2263
        %v3224 = vpack.c.b16 %v2272, %v2264
        %v3225 = vpack.c.b16 %v2273, %v2265
        %v3226 = vpack.c.b16 %v2282, %v2274
        %v3227 = vpack.c.b16 %v2283, %v2275
        %v3228 = vpack.c.b16 %v2284, %v2276
        %v3229 = vpack.c.b16 %v2285, %v2277
        %v3230 = vpack.c.b16 %v2286, %v2278
        %v3231 = vpack.c.b16 %v2287, %v2279
        %v3232 = vpack.c.b16 %v2288, %v2280
        %v3233 = vpack.c.b16 %v2289, %v2281
        %v3234 = vpack.c.b16 %v2298, %v2290
        %v3235 = vpack.c.b16 %v2299, %v2291
        %v3236 = vpack.c.b16 %v2300, %v2292
        %v3237 = vpack.c.b16 %v2301, %v2293
        %v3238 = vpack.c.b16 %v2302, %v2294
        %v3239 = vpack.c.b16 %v2303, %v2295
        %v3240 = vpack.c.b16 %v2304, %v2296
        %v3241 = vpack.c.b16 %v2305, %v2297
        %v3242 = vpack.c.b16 %v2314, %v2306
        %v3243 = vpack.c.b16 %v2315, %v2307
        %v3244 = vpack.c.b16 %v2316, %v2308
        %v3245 = vpack.c.b16 %v2317, %v2309
        %v3246 = vpack.c.b16 %v2318, %v2310
        %v3247 = vpack.c.b16 %v2319, %v2311
        %v3248 = vpack.c.b16 %v2320, %v2312
        %v3249 = vpack.c.b16 %v2321, %v2313
        %v3250 = vpack.c.b16 %v2330, %v2322
        %v3251 = vpack.c.b16 %v2331, %v2323
        %v3252 = vpack.c.b16 %v2332, %v2324
        %v3253 = vpack.c.b16 %v2333, %v2325
        %v3254 = vpack.c.b16 %v2334, %v2326
        %v3255 = vpack.c.b16 %v2335, %v2327
        %v3256 = vpack.c.b16 %v2336, %v2328
        %v3257 = vpack.c.b16 %v2337, %v2329
        %v3258 = vpack.c.b16 %v2346, %v2338
        %v3259 = vpack.c.b16 %v2347, %v2339
        %v3260 = vpack.c.b16 %v2348, %v2340
        %v3261 = vpack.c.b16 %v2349, %v2341
        %v3262 = vpack.c.b16 %v2350, %v2342
        %v3263 = vpack.c.b16 %v2351, %v2343
        %v3264 = vpack.c.b16 %v2352, %v2344
        %v3265 = vpack.c.b16 %v2353, %v2345
        %v3266 = vpack.c.b16 %v2362, %v2354
        %v3267 = vpack.c.b16 %v2363, %v2355
        %v3268 = vpack.c.b16 %v2364, %v2356
        %v3269 = vpack.c.b16 %v2365, %v2357
        %v3270 = vpack.c.b16 %v2366, %v2358
        %v3271 = vpack.c.b16 %v2367, %v2359
        %v3272 = vpack.c.b16 %v2368, %v2360
        %v3273 = vpack.c.b16 %v2369, %v2361
        %v3274 = vpack.c.b16 %v2378, %v2370
        %v3275 = vpack.c.b16 %v2379, %v2371
        %v3276 = vpack.c.b16 %v2380, %v2372
        %v3277 = vpack.c.b16 %v2381, %v2373
        %v3278 = vpack.c.b16 %v2382, %v2374
        %v3279 = vpack.c.b16 %v2383, %v2375
        %v3280 = vpack.c.b16 %v2384, %v2376
        %v3281 = vpack.c.b16 %v2385, %v2377
        %v3282 = vpack.c.b16 %v2394, %v2386
        %v3283 = vpack.c.b16 %v2395, %v2387
        %v3284 = vpack.c.b16 %v2396, %v2388
        %v3285 = vpack.c.b16 %v2397, %v2389
        %v3286 = vpack.c.b16 %v2398, %v2390
        %v3287 = vpack.c.b16 %v2399, %v2391
        %v3288 = vpack.c.b16 %v2400, %v2392
        %v3289 = vpack.c.b16 %v2401, %v2393
        %v3290 = vpack.c.b16 %v2410, %v2402
        %v3291 = vpack.c.b16 %v2411, %v2403
        %v3292 = vpack.c.b16 %v2412, %v2404
        %v3293 = vpack.c.b16 %v2413, %v2405
        %v3294 = vpack.c.b16 %v2414, %v2406
        %v3295 = vpack.c.b16 %v2415, %v2407
        %v3296 = vpack.c.b16 %v2416, %v2408
        %v3297 = vpack.c.b16 %v2417, %v2409
        %v3298 = vpack.c.b16 %v2426, %v2418
        %v3299 = vpack.c.b16 %v2427, %v2419
        %v3300 = vpack.c.b16 %v2428, %v2420
        %v3301 = vpack.c.b16 %v2429, %v2421
        %v3302 = vpack.c.b16 %v2430, %v2422
        %v3303 = vpack.c.b16 %v2431, %v2423
        %v3304 = vpack.c.b16 %v2432, %v2424
        %v3305 = vpack.c.b16 %v2433, %v2425
        %v3306 = vpack.c.b16 %v2442, %v2434
        %v3307 = vpack.c.b16 %v2443, %v2435
        %v3308 = vpack.c.b16 %v2444, %v2436
        %v3309 = vpack.c.b16 %v2445, %v2437
        %v3310 = vpack.c.b16 %v2446, %v2438
        %v3311 = vpack.c.b16 %v2447, %v2439
        %v3312 = vpack.c.b16 %v2448, %v2440
        %v3313 = vpack.c.b16 %v2449, %v2441
        %v3314 = vpack.c.b16 %v2458, %v2450
        %v3315 = vpack.c.b16 %v2459, %v2451
        %v3316 = vpack.c.b16 %v2460, %v2452
        %v3317 = vpack.c.b16 %v2461, %v2453
        %v3318 = vpack.c.b16 %v2462, %v2454
        %v3319 = vpack.c.b16 %v2463, %v2455
        %v3320 = vpack.c.b16 %v2464, %v2456
        %v3321 = vpack.c.b16 %v2465, %v2457
        %v3322 = vpack.c.b16 %v2474, %v2466
        %v3323 = vpack.c.b16 %v2475, %v2467
        %v3324 = vpack.c.b16 %v2476, %v2468
        %v3325 = vpack.c.b16 %v2477, %v2469
        %v3326 = vpack.c.b16 %v2478, %v2470
        %v3327 = vpack.c.b16 %v2479, %v2471
        %v3328 = vpack.c.b16 %v2480, %v2472
        %v3329 = vpack.c.b16 %v2481, %v2473
        %v3330 = vpack.c.b16 %v2490, %v2482
        %v3331 = vpack.c.b16 %v2491, %v2483
        %v3332 = vpack.c.b16 %v2492, %v2484
        %v3333 = vpack.c.b16 %v2493, %v2485
        %v3334 = vpack.c.b16 %v2494, %v2486
        %v3335 = vpack.c.b16 %v2495, %v2487
        %v3336 = vpack.c.b16 %v2496, %v2488
        %v3337 = vpack.c.b16 %v2497, %v2489
        %v3338 = vpack.c.b16 %v2506, %v2498
        %v3339 = vpack.c.b16 %v2507, %v2499
        %v3340 = vpack.c.b16 %v2508, %v2500
        %v3341 = vpack.c.b16 %v2509, %v2501
        %v3342 = vpack.c.b16 %v2510, %v2502
        %v3343 = vpack.c.b16 %v2511, %v2503
        %v3344 = vpack.c.b16 %v2512, %v2504
        %v3345 = vpack.c.b16 %v2513, %v2505
        %v3346 = vpack.c.b16 %v2522, %v2514
        %v3347 = vpack.c.b16 %v2523, %v2515
        %v3348 = vpack.c.b16 %v2524, %v2516
        %v3349 = vpack.c.b16 %v2525, %v2517
        %v3350 = vpack.c.b16 %v2526, %v2518
        %v3351 = vpack.c.b16 %v2527, %v2519
        %v3352 = vpack.c.b16 %v2528, %v2520
        %v3353 = vpack.c.b16 %v2529, %v2521
        %v3354 = vpack.c.b16 %v2538, %v2530
        %v3355 = vpack.c.b16 %v2539, %v2531
        %v3356 = vpack.c.b16 %v2540, %v2532
        %v3357 = vpack.c.b16 %v2541, %v2533
        %v3358 = vpack.c.b16 %v2542, %v2534
        %v3359 = vpack.c.b16 %v2543, %v2535
        %v3360 = vpack.c.b16 %v2544, %v2536
        %v3361 = vpack.c.b16 %v2545, %v2537
        %v3362 = vpack.c.b16 %v2554, %v2546
        %v3363 = vpack.c.b16 %v2555, %v2547
        %v3364 = vpack.c.b16 %v2556, %v2548
        %v3365 = vpack.c.b16 %v2557, %v2549
        %v3366 = vpack.c.b16 %v2558, %v2550
        %v3367 = vpack.c.b16 %v2559, %v2551
        %v3368 = vpack.c.b16 %v2560, %v2552
        %v3369 = vpack.c.b16 %v2561, %v2553
        %v3370 = vpack.c.b16 %v2570, %v2562
        %v3371 = vpack.c.b16 %v2571, %v2563
        %v3372 = vpack.c.b16 %v2572, %v2564
        %v3373 = vpack.c.b16 %v2573, %v2565
        %v3374 = vpack.c.b16 %v2574, %v2566
        %v3375 = vpack.c.b16 %v2575, %v2567
        %v3376 = vpack.c.b16 %v2576, %v2568
        %v3377 = vpack.c.b16 %v2577, %v2569
        %v3378 = vpack.c.b16 %v2586, %v2578
        %v3379 = vpack.c.b16 %v2587, %v2579
        %v3380 = vpack.c.b16 %v2588, %v2580
        %v3381 = vpack.c.b16 %v2589, %v2581
        %v3382 = vpack.c.b16 %v2590, %v2582
        %v3383 = vpack.c.b16 %v2591, %v2583
        %v3384 = vpack.c.b16 %v2592, %v2584
        %v3385 = vpack.c.b16 %v2593, %v2585
        %v3386 = vpack.c.b16 %v2602, %v2594
        %v3387 = vpack.c.b16 %v2603, %v2595
        %v3388 = vpack.c.b16 %v2604, %v2596
        %v3389 = vpack.c.b16 %v2605, %v2597
        %v3390 = vpack.c.b16 %v2606, %v2598
        %v3391 = vpack.c.b16 %v2607, %v2599
        %v3392 = vpack.c.b16 %v2608, %v2600
        %v3393 = vpack.c.b16 %v2609, %v2601
        %v3394 = vpack.c.b16 %v2618, %v2610
        %v3395 = vpack.c.b16 %v2619, %v2611
        %v3396 = vpack.c.b16 %v2620, %v2612
        %v3397 = vpack.c.b16 %v2621, %v2613
        %v3398 = vpack.c.b16 %v2622, %v2614
        %v3399 = vpack.c.b16 %v2623, %v2615
        %v3400 = vpack.c.b16 %v2624, %v2616
        %v3401 = vpack.c.b16 %v2625, %v2617
        %v3402 = vpack.c.b16 %v2634, %v2626
        %v3403 = vpack.c.b16 %v2635, %v2627
        %v3404 = vpack.c.b16 %v2636, %v2628
        %v3405 = vpack.c.b16 %v2637, %v2629
        %v3406 = vpack.c.b16 %v2638, %v2630
        %v3407 = vpack.c.b16 %v2639, %v2631
        %v3408 = vpack.c.b16 %v2640, %v2632
        %v3409 = vpack.c.b16 %v2641, %v2633
        %v3410 = vpack.c.b16 %v2650, %v2642
        %v3411 = vpack.c.b16 %v2651, %v2643
        %v3412 = vpack.c.b16 %v2652, %v2644
        %v3413 = vpack.c.b16 %v2653, %v2645
        %v3414 = vpack.c.b16 %v2654, %v2646
        %v3415 = vpack.c.b16 %v2655, %v2647
        %v3416 = vpack.c.b16 %v2656, %v2648
        %v3417 = vpack.c.b16 %v2657, %v2649
        %v3418 = vpack.c.b16 %v2666, %v2658
        %v3419 = vpack.c.b16 %v2667, %v2659
        %v3420 = vpack.c.b16 %v2668, %v2660
        %v3421 = vpack.c.b16 %v2669, %v2661
        %v3422 = vpack.c.b16 %v2670, %v2662
        %v3423 = vpack.c.b16 %v2671, %v2663
        %v3424 = vpack.c.b16 %v2672, %v2664
        %v3425 = vpack.c.b16 %v2673, %v2665
        %v3426 = vpack.c.b16 %v2682, %v2674
        %v3427 = vpack.c.b16 %v2683, %v2675
        %v3428 = vpack.c.b16 %v2684, %v2676
        %v3429 = vpack.c.b16 %v2685, %v2677
        %v3430 = vpack.c.b16 %v2686, %v2678
        %v3431 = vpack.c.b16 %v2687, %v2679
        %v3432 = vpack.c.b16 %v2688, %v2680
        %v3433 = vpack.c.b16 %v2689, %v2681
        %v3434 = vpack.c.b16 %v2698, %v2690
        %v3435 = vpack.c.b16 %v2699, %v2691
        %v3436 = vpack.c.b16 %v2700, %v2692
        %v3437 = vpack.c.b16 %v2701, %v2693
        %v3438 = vpack.c.b16 %v2702, %v2694
        %v3439 = vpack.c.b16 %v2703, %v2695
        %v3440 = vpack.c.b16 %v2704, %v2696
        %v3441 = vpack.c.b16 %v2705, %v2697
        %v3442 = vpack.c.b16 %v2714, %v2706
        %v3443 = vpack.c.b16 %v2715, %v2707
        %v3444 = vpack.c.b16 %v2716, %v2708
        %v3445 = vpack.c.b16 %v2717, %v2709
        %v3446 = vpack.c.b16 %v2718, %v2710
        %v3447 = vpack.c.b16 %v2719, %v2711
        %v3448 = vpack.c.b16 %v2720, %v2712
        %v3449 = vpack.c.b16 %v2721, %v2713
        %v3450 = vpack.c.b16 %v2730, %v2722
        %v3451 = vpack.c.b16 %v2731, %v2723
        %v3452 = vpack.c.b16 %v2732, %v2724
        %v3453 = vpack.c.b16 %v2733, %v2725
        %v3454 = vpack.c.b16 %v2734, %v2726
        %v3455 = vpack.c.b16 %v2735, %v2727
        %v3456 = vpack.c.b16 %v2736, %v2728
        %v3457 = vpack.c.b16 %v2737, %v2729
        %v3458 = vpack.c.b16 %v2746, %v2738
        %v3459 = vpack.c.b16 %v2747, %v2739
        %v3460 = vpack.c.b16 %v2748, %v2740
        %v3461 = vpack.c.b16 %v2749, %v2741
        %v3462 = vpack.c.b16 %v2750, %v2742
        %v3463 = vpack.c.b16 %v2751, %v2743
        %v3464 = vpack.c.b16 %v2752, %v2744
        %v3465 = vpack.c.b16 %v2753, %v2745
        %v3466 = vpack.c.b16 %v2762, %v2754
        %v3467 = vpack.c.b16 %v2763, %v2755
        %v3468 = vpack.c.b16 %v2764, %v2756
        %v3469 = vpack.c.b16 %v2765, %v2757
        %v3470 = vpack.c.b16 %v2766, %v2758
        %v3471 = vpack.c.b16 %v2767, %v2759
        %v3472 = vpack.c.b16 %v2768, %v2760
        %v3473 = vpack.c.b16 %v2769, %v2761
        %v3474 = vpack.c.b16 %v2778, %v2770
        %v3475 = vpack.c.b16 %v2779, %v2771
        %v3476 = vpack.c.b16 %v2780, %v2772
        %v3477 = vpack.c.b16 %v2781, %v2773
        %v3478 = vpack.c.b16 %v2782, %v2774
        %v3479 = vpack.c.b16 %v2783, %v2775
        %v3480 = vpack.c.b16 %v2784, %v2776
        %v3481 = vpack.c.b16 %v2785, %v2777
        %v3482 = vpack.c.b16 %v2794, %v2786
        %v3483 = vpack.c.b16 %v2795, %v2787
        %v3484 = vpack.c.b16 %v2796, %v2788
        %v3485 = vpack.c.b16 %v2797, %v2789
        %v3486 = vpack.c.b16 %v2798, %v2790
        %v3487 = vpack.c.b16 %v2799, %v2791
        %v3488 = vpack.c.b16 %v2800, %v2792
        %v3489 = vpack.c.b16 %v2801, %v2793
        %v3490 = vpack.c.b16 %v2810, %v2802
        %v3491 = vpack.c.b16 %v2811, %v2803
        %v3492 = vpack.c.b16 %v2812, %v2804
        %v3493 = vpack.c.b16 %v2813, %v2805
        %v3494 = vpack.c.b16 %v2814, %v2806
        %v3495 = vpack.c.b16 %v2815, %v2807
        %v3496 = vpack.c.b16 %v2816, %v2808
        %v3497 = vpack.c.b16 %v2817, %v2809
        %v3498 = vpack.c.b16 %v2826, %v2818
        %v3499 = vpack.c.b16 %v2827, %v2819
        %v3500 = vpack.c.b16 %v2828, %v2820
        %v3501 = vpack.c.b16 %v2829, %v2821
        %v3502 = vpack.c.b16 %v2830, %v2822
        %v3503 = vpack.c.b16 %v2831, %v2823
        %v3504 = vpack.c.b16 %v2832, %v2824
        %v3505 = vpack.c.b16 %v2833, %v2825
        %v3506 = vpack.c.b16 %v2842, %v2834
        %v3507 = vpack.c.b16 %v2843, %v2835
        %v3508 = vpack.c.b16 %v2844, %v2836
        %v3509 = vpack.c.b16 %v2845, %v2837
        %v3510 = vpack.c.b16 %v2846, %v2838
        %v3511 = vpack.c.b16 %v2847, %v2839
        %v3512 = vpack.c.b16 %v2848, %v2840
        %v3513 = vpack.c.b16 %v2849, %v2841
        %v3514 = vpack.c.b16 %v2858, %v2850
        %v3515 = vpack.c.b16 %v2859, %v2851
        %v3516 = vpack.c.b16 %v2860, %v2852
        %v3517 = vpack.c.b16 %v2861, %v2853
        %v3518 = vpack.c.b16 %v2862, %v2854
        %v3519 = vpack.c.b16 %v2863, %v2855
        %v3520 = vpack.c.b16 %v2864, %v2856
        %v3521 = vpack.c.b16 %v2865, %v2857
        %v3522 = vpack.c.b16 %v2874, %v2866
        %v3523 = vpack.c.b16 %v2875, %v2867
        %v3524 = vpack.c.b16 %v2876, %v2868
        %v3525 = vpack.c.b16 %v2877, %v2869
        %v3526 = vpack.c.b16 %v2878, %v2870
        %v3527 = vpack.c.b16 %v2879, %v2871
        %v3528 = vpack.c.b16 %v2880, %v2872
        %v3529 = vpack.c.b16 %v2881, %v2873
        %v3530 = vpack.c.b16 %v2890, %v2882
        %v3531 = vpack.c.b16 %v2891, %v2883
        %v3532 = vpack.c.b16 %v2892, %v2884
        %v3533 = vpack.c.b16 %v2893, %v2885
        %v3534 = vpack.c.b16 %v2894, %v2886
        %v3535 = vpack.c.b16 %v2895, %v2887
        %v3536 = vpack.c.b16 %v2896, %v2888
        %v3537 = vpack.c.b16 %v2897, %v2889
        %v3538 = vpack.c.b16 %v2906, %v2898
        %v3539 = vpack.c.b16 %v2907, %v2899
        %v3540 = vpack.c.b16 %v2908, %v2900
        %v3541 = vpack.c.b16 %v2909, %v2901
        %v3542 = vpack.c.b16 %v2910, %v2902
        %v3543 = vpack.c.b16 %v2911, %v2903
        %v3544 = vpack.c.b16 %v2912, %v2904
        %v3545 = vpack.c.b16 %v2913, %v2905
        %v3546 = vpack.c.b16 %v2922, %v2914
        %v3547 = vpack.c.b16 %v2923, %v2915
        %v3548 = vpack.c.b16 %v2924, %v2916
        %v3549 = vpack.c.b16 %v2925, %v2917
        %v3550 = vpack.c.b16 %v2926, %v2918
        %v3551 = vpack.c.b16 %v2927, %v2919
        %v3552 = vpack.c.b16 %v2928, %v2920
        %v3553 = vpack.c.b16 %v2929, %v2921
        %v3554 = vpack.c.b16 %v2938, %v2930
        %v3555 = vpack.c.b16 %v2939, %v2931
        %v3556 = vpack.c.b16 %v2940, %v2932
        %v3557 = vpack.c.b16 %v2941, %v2933
        %v3558 = vpack.c.b16 %v2942, %v2934
        %v3559 = vpack.c.b16 %v2943, %v2935
        %v3560 = vpack.c.b16 %v2944, %v2936
        %v3561 = vpack.c.b16 %v2945, %v2937
        %v3562 = vpack.c.b16 %v2954, %v2946
        %v3563 = vpack.c.b16 %v2955, %v2947
        %v3564 = vpack.c.b16 %v2956, %v2948
        %v3565 = vpack.c.b16 %v2957, %v2949
        %v3566 = vpack.c.b16 %v2958, %v2950
        %v3567 = vpack.c.b16 %v2959, %v2951
        %v3568 = vpack.c.b16 %v2960, %v2952
        %v3569 = vpack.c.b16 %v2961, %v2953
        %v3570 = vpack.c.b16 %v2970, %v2962
        %v3571 = vpack.c.b16 %v2971, %v2963
        %v3572 = vpack.c.b16 %v2972, %v2964
        %v3573 = vpack.c.b16 %v2973, %v2965
        %v3574 = vpack.c.b16 %v2974, %v2966
        %v3575 = vpack.c.b16 %v2975, %v2967
        %v3576 = vpack.c.b16 %v2976, %v2968
        %v3577 = vpack.c.b16 %v2977, %v2969
        %v3578 = vpack.c.b16 %v2986, %v2978
        %v3579 = vpack.c.b16 %v2987, %v2979
        %v3580 = vpack.c.b16 %v2988, %v2980
        %v3581 = vpack.c.b16 %v2989, %v2981
        %v3582 = vpack.c.b16 %v2990, %v2982
        %v3583 = vpack.c.b16 %v2991, %v2983
        %v3584 = vpack.c.b16 %v2992, %v2984
        %v3585 = vpack.c.b16 %v2993, %v2985
        %v3586 = vpack.c.b16 %v3002, %v2994
        %v3587 = vpack.c.b16 %v3003, %v2995
        %v3588 = vpack.c.b16 %v3004, %v2996
        %v3589 = vpack.c.b16 %v3005, %v2997
        %v3590 = vpack.c.b16 %v3006, %v2998
        %v3591 = vpack.c.b16 %v3007, %v2999
        %v3592 = vpack.c.b16 %v3008, %v3000
        %v3593 = vpack.c.b16 %v3009, %v3001
        %v3594 = vpack.c.b16 %v3018, %v3010
        %v3595 = vpack.c.b16 %v3019, %v3011
        %v3596 = vpack.c.b16 %v3020, %v3012
        %v3597 = vpack.c.b16 %v3021, %v3013
        %v3598 = vpack.c.b16 %v3022, %v3014
        %v3599 = vpack.c.b16 %v3023, %v3015
        %v3600 = vpack.c.b16 %v3024, %v3016
        %v3601 = vpack.c.b16 %v3025, %v3017
        %v3602 = vpack.c.b16 %v3034, %v3026
        %v3603 = vpack.c.b16 %v3035, %v3027
        %v3604 = vpack.c.b16 %v3036, %v3028
        %v3605 = vpack.c.b16 %v3037, %v3029
        %v3606 = vpack.c.b16 %v3038, %v3030
        %v3607 = vpack.c.b16 %v3039, %v3031
        %v3608 = vpack.c.b16 %v3040, %v3032
        %v3609 = vpack.c.b16 %v3041, %v3033
        %v3610 = vpack.c.b16 %v3050, %v3042
        %v3611 = vpack.c.b16 %v3051, %v3043
        %v3612 = vpack.c.b16 %v3052, %v3044
        %v3613 = vpack.c.b16 %v3053, %v3045
        %v3614 = vpack.c.b16 %v3054, %v3046
        %v3615 = vpack.c.b16 %v3055, %v3047
        %v3616 = vpack.c.b16 %v3056, %v3048
        %v3617 = vpack.c.b16 %v3057, %v3049
        %v3618 = vpack.c.b16 %v3066, %v3058
        %v3619 = vpack.c.b16 %v3067, %v3059
        %v3620 = vpack.c.b16 %v3068, %v3060
        %v3621 = vpack.c.b16 %v3069, %v3061
        %v3622 = vpack.c.b16 %v3070, %v3062
        %v3623 = vpack.c.b16 %v3071, %v3063
        %v3624 = vpack.c.b16 %v3072, %v3064
        %v3625 = vpack.c.b16 %v3073, %v3065
        %v3626 = vpack.c.b16 %v3082, %v3074
        %v3627 = vpack.c.b16 %v3083, %v3075
        %v3628 = vpack.c.b16 %v3084, %v3076
        %v3629 = vpack.c.b16 %v3085, %v3077
        %v3630 = vpack.c.b16 %v3086, %v3078
        %v3631 = vpack.c.b16 %v3087, %v3079
        %v3632 = vpack.c.b16 %v3088, %v3080
        %v3633 = vpack.c.b16 %v3089, %v3081
        %v3634 = vpack.c.b16 %v3098, %v3090
        %v3635 = vpack.c.b16 %v3099, %v3091
        %v3636 = vpack.c.b16 %v3100, %v3092
        %v3637 = vpack.c.b16 %v3101, %v3093
        %v3638 = vpack.c.b16 %v3102, %v3094
        %v3639 = vpack.c.b16 %v3103, %v3095
        %v3640 = vpack.c.b16 %v3104, %v3096
        %v3641 = vpack.c.b16 %v3105, %v3097
        %v3642 = vpack.c.b16 %v3114, %v3106
        %v3643 = vpack.c.b16 %v3115, %v3107
        %v3644 = vpack.c.b16 %v3116, %v3108
        %v3645 = vpack.c.b16 %v3117, %v3109
        %v3646 = vpack.c.b16 %v3118, %v3110
        %v3647 = vpack.c.b16 %v3119, %v3111
        %v3648 = vpack.c.b16 %v3120, %v3112
        %v3649 = vpack.c.b16 %v3121, %v3113
        %v3650 = vpack.c.b16 %v3130, %v3122
        %v3651 = vpack.c.b16 %v3131, %v3123
        %v3652 = vpack.c.b16 %v3132, %v3124
        %v3653 = vpack.c.b16 %v3133, %v3125
        %v3654 = vpack.c.b16 %v3134, %v3126
        %v3655 = vpack.c.b16 %v3135, %v3127
        %v3656 = vpack.c.b16 %v3136, %v3128
        %v3657 = vpack.c.b16 %v3137, %v3129
        %v3658 = vpack.c.b16 %v3146, %v3138
        %v3659 = vpack.c.b16 %v3147, %v3139
        %v3660 = vpack.c.b16 %v3148, %v3140
        %v3661 = vpack.c.b16 %v3149, %v3141
        %v3662 = vpack.c.b16 %v3150, %v3142
        %v3663 = vpack.c.b16 %v3151, %v3143
        %v3664 = vpack.c.b16 %v3152, %v3144
        %v3665 = vpack.c.b16 %v3153, %v3145
        %4178 = vmatprep.subr.bf16.mxu0 %v3155
        %4179 = vmatpush1.bf16.msra.mxu0 %v3154
        %4180 = vmatprep.subr.bf16.mxu0 %v3163
        %4181 = vmatpush1.bf16.msra.mxu0 %v3162
        %4182 = vmatprep.subr.bf16.mxu0 %v3171
        %4183 = vmatpush1.bf16.msra.mxu0 %v3170
        %4184 = vmatprep.subr.bf16.mxu0 %v3179
        %4185 = vmatpush1.bf16.msra.mxu0 %v3178
        %4186 = vmatprep.subr.bf16.mxu0 %v3187
        %4187 = vmatpush1.bf16.msra.mxu0 %v3186
        %4188 = vmatprep.subr.bf16.mxu0 %v3195
        %4189 = vmatpush1.bf16.msra.mxu0 %v3194
        %4190 = vmatprep.subr.bf16.mxu0 %v3203
        %4191 = vmatpush1.bf16.msra.mxu0 %v3202
        %4192 = vmatprep.subr.bf16.mxu0 %v3211
        %4193 = vmatpush1.bf16.msra.mxu0 %v3210
        %4194 = vmatprep.subr.bf16.mxu0 %v3219
        %4195 = vmatpush1.bf16.msra.mxu0 %v3218
        %4196 = vmatprep.subr.bf16.mxu0 %v3227
        %4197 = vmatpush1.bf16.msra.mxu0 %v3226
        %4198 = vmatprep.subr.bf16.mxu0 %v3235
        %4199 = vmatpush1.bf16.msra.mxu0 %v3234
        %4200 = vmatprep.subr.bf16.mxu0 %v3243
        %4201 = vmatpush1.bf16.msra.mxu0 %v3242
        %4202 = vmatprep.subr.bf16.mxu0 %v3251
        %4203 = vmatpush1.bf16.msra.mxu0 %v3250
        %4204 = vmatprep.subr.bf16.mxu0 %v3259
        %4205 = vmatpush1.bf16.msra.mxu0 %v3258
        %4206 = vmatprep.subr.bf16.mxu0 %v3267
        %4207 = vmatpush1.bf16.msra.mxu0 %v3266
        %4208 = vmatprep.subr.bf16.mxu0 %v3275
        %4209 = vmatpush1.bf16.msra.mxu0 %v3274
        %4210 = vmatprep.mubr.bf16.mxu0 %v1057
        %4211 = vmatmul.mubr.bf16.gmra.mrb[0].mxu0 %v1056
        %v4212 = vpop.f32.mrb[0].mxu0
        %v4213 = vadd.f32 %v1581, %v4212
        %v4214 = vpop.f32.mrb[0].mxu0
        %v4215 = vadd.f32 %v1585, %v4214
        %v4216 = vpop.f32.mrb[0].mxu0
        %v4217 = vpop.f32.mrb[0].mxu0
        %4218 = vdwg.mxu0
        %4219 = vmatprep.subr.bf16.mxu0 %v3283
        %4220 = vmatpush1.bf16.msra.mxu0 %v3282
        %4221 = vmatprep.subr.bf16.mxu0 %v3291
        %4222 = vmatpush1.bf16.msra.mxu0 %v3290
        %4223 = vmatprep.subr.bf16.mxu0 %v3299
        %4224 = vmatpush1.bf16.msra.mxu0 %v3298
        %4225 = vmatprep.subr.bf16.mxu0 %v3307
        %4226 = vmatpush1.bf16.msra.mxu0 %v3306
        %4227 = vmatprep.subr.bf16.mxu0 %v3315
        %4228 = vmatpush1.bf16.msra.mxu0 %v3314
        %4229 = vmatprep.subr.bf16.mxu0 %v3323
        %4230 = vmatpush1.bf16.msra.mxu0 %v3322
        %4231 = vmatprep.subr.bf16.mxu0 %v3331
        %4232 = vmatpush1.bf16.msra.mxu0 %v3330
        %4233 = vmatprep.subr.bf16.mxu0 %v3339
        %4234 = vmatpush1.bf16.msra.mxu0 %v3338
        %4235 = vmatprep.subr.bf16.mxu0 %v3347
        %4236 = vmatpush1.bf16.msra.mxu0 %v3346
        %4237 = vmatprep.subr.bf16.mxu0 %v3355
        %4238 = vmatpush1.bf16.msra.mxu0 %v3354
        %4239 = vmatprep.subr.bf16.mxu0 %v3363
        %4240 = vmatpush1.bf16.msra.mxu0 %v3362
        %4241 = vmatprep.subr.bf16.mxu0 %v3371
        %4242 = vmatpush1.bf16.msra.mxu0 %v3370
        %4243 = vmatprep.subr.bf16.mxu0 %v3379
        %4244 = vmatpush1.bf16.msra.mxu0 %v3378
        %4245 = vmatprep.subr.bf16.mxu0 %v3387
        %4246 = vmatpush1.bf16.msra.mxu0 %v3386
        %4247 = vmatprep.subr.bf16.mxu0 %v3395
        %4248 = vmatpush1.bf16.msra.mxu0 %v3394
        %4249 = vmatprep.subr.bf16.mxu0 %v3403
        %4250 = vmatpush1.bf16.msra.mxu0 %v3402
        %4251 = vmatprep.mubr.bf16.mxu0 %v1059
        %4252 = vmatmul.mubr.bf16.gmra.mrb[0].mxu0 %v1058
        %v4253 = vpop.f32.mrb[0].mxu0
        %v4254 = vadd.f32 %v4213, %v4253
        %v4255 = vpop.f32.mrb[0].mxu0
        %v4256 = vadd.f32 %v4215, %v4255
        %v4257 = vpop.f32.mrb[0].mxu0
        %v4258 = vpop.f32.mrb[0].mxu0
        %4259 = vdwg.mxu0
        %4260 = vmatprep.subr.bf16.mxu0 %v3411
        %4261 = vmatpush1.bf16.msra.mxu0 %v3410
        %4262 = vmatprep.subr.bf16.mxu0 %v3419
        %4263 = vmatpush1.bf16.msra.mxu0 %v3418
        %4264 = vmatprep.subr.bf16.mxu0 %v3427
        %4265 = vmatpush1.bf16.msra.mxu0 %v3426
        %4266 = vmatprep.subr.bf16.mxu0 %v3435
        %4267 = vmatpush1.bf16.msra.mxu0 %v3434
        %4268 = vmatprep.subr.bf16.mxu0 %v3443
        %4269 = vmatpush1.bf16.msra.mxu0 %v3442
        %4270 = vmatprep.subr.bf16.mxu0 %v3451
        %4271 = vmatpush1.bf16.msra.mxu0 %v3450
        %4272 = vmatprep.subr.bf16.mxu0 %v3459
        %4273 = vmatpush1.bf16.msra.mxu0 %v3458
        %4274 = vmatprep.subr.bf16.mxu0 %v3467
        %4275 = vmatpush1.bf16.msra.mxu0 %v3466
        %4276 = vmatprep.subr.bf16.mxu0 %v3475
        %4277 = vmatpush1.bf16.msra.mxu0 %v3474
        %4278 = vmatprep.subr.bf16.mxu0 %v3483
        %4279 = vmatpush1.bf16.msra.mxu0 %v3482
        %4280 = vmatprep.subr.bf16.mxu0 %v3491
        %4281 = vmatpush1.bf16.msra.mxu0 %v3490
        %4282 = vmatprep.subr.bf16.mxu0 %v3499
        %4283 = vmatpush1.bf16.msra.mxu0 %v3498
        %4284 = vmatprep.subr.bf16.mxu0 %v3507
        %4285 = vmatpush1.bf16.msra.mxu0 %v3506
        %4286 = vmatprep.subr.bf16.mxu0 %v3515
        %4287 = vmatpush1.bf16.msra.mxu0 %v3514
        %4288 = vmatprep.subr.bf16.mxu0 %v3523
        %4289 = vmatpush1.bf16.msra.mxu0 %v3522
        %4290 = vmatprep.subr.bf16.mxu0 %v3531
        %4291 = vmatpush1.bf16.msra.mxu0 %v3530
        %4292 = vmatprep.mubr.bf16.mxu0 %v1061
        %4293 = vmatmul.mubr.bf16.gmra.mrb[0].mxu0 %v1060
        %v4294 = vpop.f32.mrb[0].mxu0
        %v4295 = vadd.f32 %v4254, %v4294
        %v4296 = vpop.f32.mrb[0].mxu0
        %v4297 = vadd.f32 %v4256, %v4296
        %v4298 = vpop.f32.mrb[0].mxu0
        %v4299 = vpop.f32.mrb[0].mxu0
        %4300 = vdwg.mxu0
        %4301 = vmatprep.subr.bf16.mxu0 %v3539
        %4302 = vmatpush1.bf16.msra.mxu0 %v3538
        %4303 = vmatprep.subr.bf16.mxu0 %v3547
        %4304 = vmatpush1.bf16.msra.mxu0 %v3546
        %4305 = vmatprep.subr.bf16.mxu0 %v3555
        %4306 = vmatpush1.bf16.msra.mxu0 %v3554
        %4307 = vmatprep.subr.bf16.mxu0 %v3563
        %4308 = vmatpush1.bf16.msra.mxu0 %v3562
        %4309 = vmatprep.subr.bf16.mxu0 %v3571
        %4310 = vmatpush1.bf16.msra.mxu0 %v3570
        %4311 = vmatprep.subr.bf16.mxu0 %v3579
        %4312 = vmatpush1.bf16.msra.mxu0 %v3578
        %4313 = vmatprep.subr.bf16.mxu0 %v3587
        %4314 = vmatpush1.bf16.msra.mxu0 %v3586
        %4315 = vmatprep.subr.bf16.mxu0 %v3595
        %4316 = vmatpush1.bf16.msra.mxu0 %v3594
        %4317 = vmatprep.subr.bf16.mxu0 %v3603
        %4318 = vmatpush1.bf16.msra.mxu0 %v3602
        %4319 = vmatprep.subr.bf16.mxu0 %v3611
        %4320 = vmatpush1.bf16.msra.mxu0 %v3610
        %4321 = vmatprep.subr.bf16.mxu0 %v3619
        %4322 = vmatpush1.bf16.msra.mxu0 %v3618
        %4323 = vmatprep.subr.bf16.mxu0 %v3627
        %4324 = vmatpush1.bf16.msra.mxu0 %v3626
        %4325 = vmatprep.subr.bf16.mxu0 %v3635
        %4326 = vmatpush1.bf16.msra.mxu0 %v3634
        %4327 = vmatprep.subr.bf16.mxu0 %v3643
        %4328 = vmatpush1.bf16.msra.mxu0 %v3642
        %4329 = vmatprep.subr.bf16.mxu0 %v3651
        %4330 = vmatpush1.bf16.msra.mxu0 %v3650
        %4331 = vmatprep.subr.bf16.mxu0 %v3659
        %4332 = vmatpush1.bf16.msra.mxu0 %v3658
        %4333 = vmatprep.mubr.bf16.mxu0 %v1063
        %4334 = vmatmul.mubr.bf16.gmra.mrb[0].mxu0 %v1062
        %v4335 = vpop.f32.mrb[0].mxu0
        %v4336 = vadd.f32 %v4295, %v4335
        %v4337 = vpop.f32.mrb[0].mxu0
        %v4338 = vadd.f32 %v4297, %v4337
        %v4339 = vpop.f32.mrb[0].mxu0
        %v4340 = vpop.f32.mrb[0].mxu0
        %4341 = vdwg.mxu0
        %4342 = vmatprep.subr.bf16.mxu0 %v3157
        %4343 = vmatpush1.bf16.msra.mxu0 %v3156
        %4344 = vmatprep.subr.bf16.mxu0 %v3165
        %4345 = vmatpush1.bf16.msra.mxu0 %v3164
        %4346 = vmatprep.subr.bf16.mxu0 %v3173
        %4347 = vmatpush1.bf16.msra.mxu0 %v3172
        %4348 = vmatprep.subr.bf16.mxu0 %v3181
        %4349 = vmatpush1.bf16.msra.mxu0 %v3180
        %4350 = vmatprep.subr.bf16.mxu0 %v3189
        %4351 = vmatpush1.bf16.msra.mxu0 %v3188
        %4352 = vmatprep.subr.bf16.mxu0 %v3197
        %4353 = vmatpush1.bf16.msra.mxu0 %v3196
        %4354 = vmatprep.subr.bf16.mxu0 %v3205
        %4355 = vmatpush1.bf16.msra.mxu0 %v3204
        %4356 = vmatprep.subr.bf16.mxu0 %v3213
        %4357 = vmatpush1.bf16.msra.mxu0 %v3212
        %4358 = vmatprep.subr.bf16.mxu0 %v3221
        %4359 = vmatpush1.bf16.msra.mxu0 %v3220
        %4360 = vmatprep.subr.bf16.mxu0 %v3229
        %4361 = vmatpush1.bf16.msra.mxu0 %v3228
        %4362 = vmatprep.subr.bf16.mxu0 %v3237
        %4363 = vmatpush1.bf16.msra.mxu0 %v3236
        %4364 = vmatprep.subr.bf16.mxu0 %v3245
        %4365 = vmatpush1.bf16.msra.mxu0 %v3244
        %4366 = vmatprep.subr.bf16.mxu0 %v3253
        %4367 = vmatpush1.bf16.msra.mxu0 %v3252
        %4368 = vmatprep.subr.bf16.mxu0 %v3261
        %4369 = vmatpush1.bf16.msra.mxu0 %v3260
        %4370 = vmatprep.subr.bf16.mxu0 %v3269
        %4371 = vmatpush1.bf16.msra.mxu0 %v3268
        %4372 = vmatprep.subr.bf16.mxu0 %v3277
        %4373 = vmatpush1.bf16.msra.mxu0 %v3276
        %4374 = vmatprep.mubr.bf16.mxu0 %v1057
        %4375 = vmatmul.mubr.bf16.gmra.mrb[0].mxu0 %v1056
        %v4376 = vpop.f32.mrb[0].mxu0
        %v4377 = vadd.f32 %v1589, %v4376
        %v4378 = vpop.f32.mrb[0].mxu0
        %v4379 = vadd.f32 %v1593, %v4378
        %v4380 = vpop.f32.mrb[0].mxu0
        %v4381 = vpop.f32.mrb[0].mxu0
        %4382 = vdwg.mxu0
        %4383 = vmatprep.subr.bf16.mxu0 %v3285
        %4384 = vmatpush1.bf16.msra.mxu0 %v3284
        %4385 = vmatprep.subr.bf16.mxu0 %v3293
        %4386 = vmatpush1.bf16.msra.mxu0 %v3292
        %4387 = vmatprep.subr.bf16.mxu0 %v3301
        %4388 = vmatpush1.bf16.msra.mxu0 %v3300
        %4389 = vmatprep.subr.bf16.mxu0 %v3309
        %4390 = vmatpush1.bf16.msra.mxu0 %v3308
        %4391 = vmatprep.subr.bf16.mxu0 %v3317
        %4392 = vmatpush1.bf16.msra.mxu0 %v3316
        %4393 = vmatprep.subr.bf16.mxu0 %v3325
        %4394 = vmatpush1.bf16.msra.mxu0 %v3324
        %4395 = vmatprep.subr.bf16.mxu0 %v3333
        %4396 = vmatpush1.bf16.msra.mxu0 %v3332
        %4397 = vmatprep.subr.bf16.mxu0 %v3341
        %4398 = vmatpush1.bf16.msra.mxu0 %v3340
        %4399 = vmatprep.subr.bf16.mxu0 %v3349
        %4400 = vmatpush1.bf16.msra.mxu0 %v3348
        %4401 = vmatprep.subr.bf16.mxu0 %v3357
        %4402 = vmatpush1.bf16.msra.mxu0 %v3356
        %4403 = vmatprep.subr.bf16.mxu0 %v3365
        %4404 = vmatpush1.bf16.msra.mxu0 %v3364
        %4405 = vmatprep.subr.bf16.mxu0 %v3373
        %4406 = vmatpush1.bf16.msra.mxu0 %v3372
        %4407 = vmatprep.subr.bf16.mxu0 %v3381
        %4408 = vmatpush1.bf16.msra.mxu0 %v3380
        %4409 = vmatprep.subr.bf16.mxu0 %v3389
        %4410 = vmatpush1.bf16.msra.mxu0 %v3388
        %4411 = vmatprep.subr.bf16.mxu0 %v3397
        %4412 = vmatpush1.bf16.msra.mxu0 %v3396
        %4413 = vmatprep.subr.bf16.mxu0 %v3405
        %4414 = vmatpush1.bf16.msra.mxu0 %v3404
        %4415 = vmatprep.mubr.bf16.mxu0 %v1059
        %4416 = vmatmul.mubr.bf16.gmra.mrb[0].mxu0 %v1058
        %v4417 = vpop.f32.mrb[0].mxu0
        %v4418 = vadd.f32 %v4377, %v4417
        %v4419 = vpop.f32.mrb[0].mxu0
        %v4420 = vadd.f32 %v4379, %v4419
        %v4421 = vpop.f32.mrb[0].mxu0
        %v4422 = vpop.f32.mrb[0].mxu0
        %4423 = vdwg.mxu0
        %4424 = vmatprep.subr.bf16.mxu0 %v3413
        %4425 = vmatpush1.bf16.msra.mxu0 %v3412
        %4426 = vmatprep.subr.bf16.mxu0 %v3421
        %4427 = vmatpush1.bf16.msra.mxu0 %v3420
        %4428 = vmatprep.subr.bf16.mxu0 %v3429
        %4429 = vmatpush1.bf16.msra.mxu0 %v3428
        %4430 = vmatprep.subr.bf16.mxu0 %v3437
        %4431 = vmatpush1.bf16.msra.mxu0 %v3436
        %4432 = vmatprep.subr.bf16.mxu0 %v3445
        %4433 = vmatpush1.bf16.msra.mxu0 %v3444
        %4434 = vmatprep.subr.bf16.mxu0 %v3453
        %4435 = vmatpush1.bf16.msra.mxu0 %v3452
        %4436 = vmatprep.subr.bf16.mxu0 %v3461
        %4437 = vmatpush1.bf16.msra.mxu0 %v3460
        %4438 = vmatprep.subr.bf16.mxu0 %v3469
        %4439 = vmatpush1.bf16.msra.mxu0 %v3468
        %4440 = vmatprep.subr.bf16.mxu0 %v3477
        %4441 = vmatpush1.bf16.msra.mxu0 %v3476
        %4442 = vmatprep.subr.bf16.mxu0 %v3485
        %4443 = vmatpush1.bf16.msra.mxu0 %v3484
        %4444 = vmatprep.subr.bf16.mxu0 %v3493
        %4445 = vmatpush1.bf16.msra.mxu0 %v3492
        %4446 = vmatprep.subr.bf16.mxu0 %v3501
        %4447 = vmatpush1.bf16.msra.mxu0 %v3500
        %4448 = vmatprep.subr.bf16.mxu0 %v3509
        %4449 = vmatpush1.bf16.msra.mxu0 %v3508
        %4450 = vmatprep.subr.bf16.mxu0 %v3517
        %4451 = vmatpush1.bf16.msra.mxu0 %v3516
        %4452 = vmatprep.subr.bf16.mxu0 %v3525
        %4453 = vmatpush1.bf16.msra.mxu0 %v3524
        %4454 = vmatprep.subr.bf16.mxu0 %v3533
        %4455 = vmatpush1.bf16.msra.mxu0 %v3532
        %4456 = vmatprep.mubr.bf16.mxu0 %v1061
        %4457 = vmatmul.mubr.bf16.gmra.mrb[0].mxu0 %v1060
        %v4458 = vpop.f32.mrb[0].mxu0
        %v4459 = vadd.f32 %v4418, %v4458
        %v4460 = vpop.f32.mrb[0].mxu0
        %v4461 = vadd.f32 %v4420, %v4460
        %v4462 = vpop.f32.mrb[0].mxu0
        %v4463 = vpop.f32.mrb[0].mxu0
        %4464 = vdwg.mxu0
        %4465 = vmatprep.subr.bf16.mxu0 %v3541
        %4466 = vmatpush1.bf16.msra.mxu0 %v3540
        %4467 = vmatprep.subr.bf16.mxu0 %v3549
        %4468 = vmatpush1.bf16.msra.mxu0 %v3548
        %4469 = vmatprep.subr.bf16.mxu0 %v3557
        %4470 = vmatpush1.bf16.msra.mxu0 %v3556
        %4471 = vmatprep.subr.bf16.mxu0 %v3565
        %4472 = vmatpush1.bf16.msra.mxu0 %v3564
        %4473 = vmatprep.subr.bf16.mxu0 %v3573
        %4474 = vmatpush1.bf16.msra.mxu0 %v3572
        %4475 = vmatprep.subr.bf16.mxu0 %v3581
        %4476 = vmatpush1.bf16.msra.mxu0 %v3580
        %4477 = vmatprep.subr.bf16.mxu0 %v3589
        %4478 = vmatpush1.bf16.msra.mxu0 %v3588
        %4479 = vmatprep.subr.bf16.mxu0 %v3597
        %4480 = vmatpush1.bf16.msra.mxu0 %v3596
        %4481 = vmatprep.subr.bf16.mxu0 %v3605
        %4482 = vmatpush1.bf16.msra.mxu0 %v3604
        %4483 = vmatprep.subr.bf16.mxu0 %v3613
        %4484 = vmatpush1.bf16.msra.mxu0 %v3612
        %4485 = vmatprep.subr.bf16.mxu0 %v3621
        %4486 = vmatpush1.bf16.msra.mxu0 %v3620
        %4487 = vmatprep.subr.bf16.mxu0 %v3629
        %4488 = vmatpush1.bf16.msra.mxu0 %v3628
        %4489 = vmatprep.subr.bf16.mxu0 %v3637
        %4490 = vmatpush1.bf16.msra.mxu0 %v3636
        %4491 = vmatprep.subr.bf16.mxu0 %v3645
        %4492 = vmatpush1.bf16.msra.mxu0 %v3644
        %4493 = vmatprep.subr.bf16.mxu0 %v3653
        %4494 = vmatpush1.bf16.msra.mxu0 %v3652
        %4495 = vmatprep.subr.bf16.mxu0 %v3661
        %4496 = vmatpush1.bf16.msra.mxu0 %v3660
        %4497 = vmatprep.mubr.bf16.mxu0 %v1063
        %4498 = vmatmul.mubr.bf16.gmra.mrb[0].mxu0 %v1062
        %v4499 = vpop.f32.mrb[0].mxu0
        %v4500 = vadd.f32 %v4459, %v4499
        %v4501 = vpop.f32.mrb[0].mxu0
        %v4502 = vadd.f32 %v4461, %v4501
        %v4503 = vpop.f32.mrb[0].mxu0
        %v4504 = vpop.f32.mrb[0].mxu0
        %4505 = vdwg.mxu0
        %4506 = vmatprep.subr.bf16.mxu0 %v3159
        %4507 = vmatpush1.bf16.msra.mxu0 %v3158
        %4508 = vmatprep.subr.bf16.mxu0 %v3167
        %4509 = vmatpush1.bf16.msra.mxu0 %v3166
        %4510 = vmatprep.subr.bf16.mxu0 %v3175
        %4511 = vmatpush1.bf16.msra.mxu0 %v3174
        %4512 = vmatprep.subr.bf16.mxu0 %v3183
        %4513 = vmatpush1.bf16.msra.mxu0 %v3182
        %4514 = vmatprep.subr.bf16.mxu0 %v3191
        %4515 = vmatpush1.bf16.msra.mxu0 %v3190
        %4516 = vmatprep.subr.bf16.mxu0 %v3199
        %4517 = vmatpush1.bf16.msra.mxu0 %v3198
        %4518 = vmatprep.subr.bf16.mxu0 %v3207
        %4519 = vmatpush1.bf16.msra.mxu0 %v3206
        %4520 = vmatprep.subr.bf16.mxu0 %v3215
        %4521 = vmatpush1.bf16.msra.mxu0 %v3214
        %4522 = vmatprep.subr.bf16.mxu0 %v3223
        %4523 = vmatpush1.bf16.msra.mxu0 %v3222
        %4524 = vmatprep.subr.bf16.mxu0 %v3231
        %4525 = vmatpush1.bf16.msra.mxu0 %v3230
        %4526 = vmatprep.subr.bf16.mxu0 %v3239
        %4527 = vmatpush1.bf16.msra.mxu0 %v3238
        %4528 = vmatprep.subr.bf16.mxu0 %v3247
        %4529 = vmatpush1.bf16.msra.mxu0 %v3246
        %4530 = vmatprep.subr.bf16.mxu0 %v3255
        %4531 = vmatpush1.bf16.msra.mxu0 %v3254
        %4532 = vmatprep.subr.bf16.mxu0 %v3263
        %4533 = vmatpush1.bf16.msra.mxu0 %v3262
        %4534 = vmatprep.subr.bf16.mxu0 %v3271
        %4535 = vmatpush1.bf16.msra.mxu0 %v3270
        %4536 = vmatprep.subr.bf16.mxu0 %v3279
        %4537 = vmatpush1.bf16.msra.mxu0 %v3278
        %4538 = vmatprep.mubr.bf16.mxu0 %v1057
        %4539 = vmatmul.mubr.bf16.gmra.mrb[0].mxu0 %v1056
        %v4540 = vpop.f32.mrb[0].mxu0
        %v4541 = vadd.f32 %v1597, %v4540
        %v4542 = vpop.f32.mrb[0].mxu0
        %v4543 = vadd.f32 %v1601, %v4542
        %v4544 = vpop.f32.mrb[0].mxu0
        %v4545 = vpop.f32.mrb[0].mxu0
        %4546 = vdwg.mxu0
        %4547 = vmatprep.subr.bf16.mxu0 %v3287
        %4548 = vmatpush1.bf16.msra.mxu0 %v3286
        %4549 = vmatprep.subr.bf16.mxu0 %v3295
        %4550 = vmatpush1.bf16.msra.mxu0 %v3294
        %4551 = vmatprep.subr.bf16.mxu0 %v3303
        %4552 = vmatpush1.bf16.msra.mxu0 %v3302
        %4553 = vmatprep.subr.bf16.mxu0 %v3311
        %4554 = vmatpush1.bf16.msra.mxu0 %v3310
        %4555 = vmatprep.subr.bf16.mxu0 %v3319
        %4556 = vmatpush1.bf16.msra.mxu0 %v3318
        %4557 = vmatprep.subr.bf16.mxu0 %v3327
        %4558 = vmatpush1.bf16.msra.mxu0 %v3326
        %4559 = vmatprep.subr.bf16.mxu0 %v3335
        %4560 = vmatpush1.bf16.msra.mxu0 %v3334
        %4561 = vmatprep.subr.bf16.mxu0 %v3343
        %4562 = vmatpush1.bf16.msra.mxu0 %v3342
        %4563 = vmatprep.subr.bf16.mxu0 %v3351
        %4564 = vmatpush1.bf16.msra.mxu0 %v3350
        %4565 = vmatprep.subr.bf16.mxu0 %v3359
        %4566 = vmatpush1.bf16.msra.mxu0 %v3358
        %4567 = vmatprep.subr.bf16.mxu0 %v3367
        %4568 = vmatpush1.bf16.msra.mxu0 %v3366
        %4569 = vmatprep.subr.bf16.mxu0 %v3375
        %4570 = vmatpush1.bf16.msra.mxu0 %v3374
        %4571 = vmatprep.subr.bf16.mxu0 %v3383
        %4572 = vmatpush1.bf16.msra.mxu0 %v3382
        %4573 = vmatprep.subr.bf16.mxu0 %v3391
        %4574 = vmatpush1.bf16.msra.mxu0 %v3390
        %4575 = vmatprep.subr.bf16.mxu0 %v3399
        %4576 = vmatpush1.bf16.msra.mxu0 %v3398
        %4577 = vmatprep.subr.bf16.mxu0 %v3407
        %4578 = vmatpush1.bf16.msra.mxu0 %v3406
        %4579 = vmatprep.mubr.bf16.mxu0 %v1059
        %4580 = vmatmul.mubr.bf16.gmra.mrb[0].mxu0 %v1058
        %v4581 = vpop.f32.mrb[0].mxu0
        %v4582 = vadd.f32 %v4541, %v4581
        %v4583 = vpop.f32.mrb[0].mxu0
        %v4584 = vadd.f32 %v4543, %v4583
        %v4585 = vpop.f32.mrb[0].mxu0
        %v4586 = vpop.f32.mrb[0].mxu0
        %4587 = vdwg.mxu0
        %4588 = vmatprep.subr.bf16.mxu0 %v3415
        %4589 = vmatpush1.bf16.msra.mxu0 %v3414
        %4590 = vmatprep.subr.bf16.mxu0 %v3423
        %4591 = vmatpush1.bf16.msra.mxu0 %v3422
        %4592 = vmatprep.subr.bf16.mxu0 %v3431
        %4593 = vmatpush1.bf16.msra.mxu0 %v3430
        %4594 = vmatprep.subr.bf16.mxu0 %v3439
        %4595 = vmatpush1.bf16.msra.mxu0 %v3438
        %4596 = vmatprep.subr.bf16.mxu0 %v3447
        %4597 = vmatpush1.bf16.msra.mxu0 %v3446
        %4598 = vmatprep.subr.bf16.mxu0 %v3455
        %4599 = vmatpush1.bf16.msra.mxu0 %v3454
        %4600 = vmatprep.subr.bf16.mxu0 %v3463
        %4601 = vmatpush1.bf16.msra.mxu0 %v3462
        %4602 = vmatprep.subr.bf16.mxu0 %v3471
        %4603 = vmatpush1.bf16.msra.mxu0 %v3470
        %4604 = vmatprep.subr.bf16.mxu0 %v3479
        %4605 = vmatpush1.bf16.msra.mxu0 %v3478
        %4606 = vmatprep.subr.bf16.mxu0 %v3487
        %4607 = vmatpush1.bf16.msra.mxu0 %v3486
        %4608 = vmatprep.subr.bf16.mxu0 %v3495
        %4609 = vmatpush1.bf16.msra.mxu0 %v3494
        %4610 = vmatprep.subr.bf16.mxu0 %v3503
        %4611 = vmatpush1.bf16.msra.mxu0 %v3502
        %4612 = vmatprep.subr.bf16.mxu0 %v3511
        %4613 = vmatpush1.bf16.msra.mxu0 %v3510
        %4614 = vmatprep.subr.bf16.mxu0 %v3519
        %4615 = vmatpush1.bf16.msra.mxu0 %v3518
        %4616 = vmatprep.subr.bf16.mxu0 %v3527
        %4617 = vmatpush1.bf16.msra.mxu0 %v3526
        %4618 = vmatprep.subr.bf16.mxu0 %v3535
        %4619 = vmatpush1.bf16.msra.mxu0 %v3534
        %4620 = vmatprep.mubr.bf16.mxu0 %v1061
        %4621 = vmatmul.mubr.bf16.gmra.mrb[0].mxu0 %v1060
        %v4622 = vpop.f32.mrb[0].mxu0
        %v4623 = vadd.f32 %v4582, %v4622
        %v4624 = vpop.f32.mrb[0].mxu0
        %v4625 = vadd.f32 %v4584, %v4624
        %v4626 = vpop.f32.mrb[0].mxu0
        %v4627 = vpop.f32.mrb[0].mxu0
        %4628 = vdwg.mxu0
        %4629 = vmatprep.subr.bf16.mxu0 %v3543
        %4630 = vmatpush1.bf16.msra.mxu0 %v3542
        %4631 = vmatprep.subr.bf16.mxu0 %v3551
        %4632 = vmatpush1.bf16.msra.mxu0 %v3550
        %4633 = vmatprep.subr.bf16.mxu0 %v3559
        %4634 = vmatpush1.bf16.msra.mxu0 %v3558
        %4635 = vmatprep.subr.bf16.mxu0 %v3567
        %4636 = vmatpush1.bf16.msra.mxu0 %v3566
        %4637 = vmatprep.subr.bf16.mxu0 %v3575
        %4638 = vmatpush1.bf16.msra.mxu0 %v3574
        %4639 = vmatprep.subr.bf16.mxu0 %v3583
        %4640 = vmatpush1.bf16.msra.mxu0 %v3582
        %4641 = vmatprep.subr.bf16.mxu0 %v3591
        %4642 = vmatpush1.bf16.msra.mxu0 %v3590
        %4643 = vmatprep.subr.bf16.mxu0 %v3599
        %4644 = vmatpush1.bf16.msra.mxu0 %v3598
        %4645 = vmatprep.subr.bf16.mxu0 %v3607
        %4646 = vmatpush1.bf16.msra.mxu0 %v3606
        %4647 = vmatprep.subr.bf16.mxu0 %v3615
        %4648 = vmatpush1.bf16.msra.mxu0 %v3614
        %4649 = vmatprep.subr.bf16.mxu0 %v3623
        %4650 = vmatpush1.bf16.msra.mxu0 %v3622
        %4651 = vmatprep.subr.bf16.mxu0 %v3631
        %4652 = vmatpush1.bf16.msra.mxu0 %v3630
        %4653 = vmatprep.subr.bf16.mxu0 %v3639
        %4654 = vmatpush1.bf16.msra.mxu0 %v3638
        %4655 = vmatprep.subr.bf16.mxu0 %v3647
        %4656 = vmatpush1.bf16.msra.mxu0 %v3646
        %4657 = vmatprep.subr.bf16.mxu0 %v3655
        %4658 = vmatpush1.bf16.msra.mxu0 %v3654
        %4659 = vmatprep.subr.bf16.mxu0 %v3663
        %4660 = vmatpush1.bf16.msra.mxu0 %v3662
        %4661 = vmatprep.mubr.bf16.mxu0 %v1063
        %4662 = vmatmul.mubr.bf16.gmra.mrb[0].mxu0 %v1062
        %v4663 = vpop.f32.mrb[0].mxu0
        %v4664 = vadd.f32 %v4623, %v4663
        %v4665 = vpop.f32.mrb[0].mxu0
        %v4666 = vadd.f32 %v4625, %v4665
        %v4667 = vpop.f32.mrb[0].mxu0
        %v4668 = vpop.f32.mrb[0].mxu0
        %4669 = vdwg.mxu0
        %4670 = vmatprep.subr.bf16.mxu0 %v3161
        %4671 = vmatpush1.bf16.msra.mxu0 %v3160
        %4672 = vmatprep.subr.bf16.mxu0 %v3169
        %4673 = vmatpush1.bf16.msra.mxu0 %v3168
        %4674 = vmatprep.subr.bf16.mxu0 %v3177
        %4675 = vmatpush1.bf16.msra.mxu0 %v3176
        %4676 = vmatprep.subr.bf16.mxu0 %v3185
        %4677 = vmatpush1.bf16.msra.mxu0 %v3184
        %4678 = vmatprep.subr.bf16.mxu0 %v3193
        %4679 = vmatpush1.bf16.msra.mxu0 %v3192
        %4680 = vmatprep.subr.bf16.mxu0 %v3201
        %4681 = vmatpush1.bf16.msra.mxu0 %v3200
        %4682 = vmatprep.subr.bf16.mxu0 %v3209
        %4683 = vmatpush1.bf16.msra.mxu0 %v3208
        %4684 = vmatprep.subr.bf16.mxu0 %v3217
        %4685 = vmatpush1.bf16.msra.mxu0 %v3216
        %4686 = vmatprep.subr.bf16.mxu0 %v3225
        %4687 = vmatpush1.bf16.msra.mxu0 %v3224
        %4688 = vmatprep.subr.bf16.mxu0 %v3233
        %4689 = vmatpush1.bf16.msra.mxu0 %v3232
        %4690 = vmatprep.subr.bf16.mxu0 %v3241
        %4691 = vmatpush1.bf16.msra.mxu0 %v3240
        %4692 = vmatprep.subr.bf16.mxu0 %v3249
        %4693 = vmatpush1.bf16.msra.mxu0 %v3248
        %4694 = vmatprep.subr.bf16.mxu0 %v3257
        %4695 = vmatpush1.bf16.msra.mxu0 %v3256
        %4696 = vmatprep.subr.bf16.mxu0 %v3265
        %4697 = vmatpush1.bf16.msra.mxu0 %v3264
        %4698 = vmatprep.subr.bf16.mxu0 %v3273
        %4699 = vmatpush1.bf16.msra.mxu0 %v3272
        %4700 = vmatprep.subr.bf16.mxu0 %v3281
        %4701 = vmatpush1.bf16.msra.mxu0 %v3280
        %4702 = vmatprep.mubr.bf16.mxu0 %v1057
        %4703 = vmatmul.mubr.bf16.gmra.mrb[0].mxu0 %v1056
        %v4704 = vpop.f32.mrb[0].mxu0
        %v4705 = vadd.f32 %v1605, %v4704
        %v4706 = vpop.f32.mrb[0].mxu0
        %v4707 = vadd.f32 %v1609, %v4706
        %v4708 = vpop.f32.mrb[0].mxu0
        %v4709 = vpop.f32.mrb[0].mxu0
        %4710 = vdwg.mxu0
        %4711 = vmatprep.subr.bf16.mxu0 %v3289
        %4712 = vmatpush1.bf16.msra.mxu0 %v3288
        %4713 = vmatprep.subr.bf16.mxu0 %v3297
        %4714 = vmatpush1.bf16.msra.mxu0 %v3296
        %4715 = vmatprep.subr.bf16.mxu0 %v3305
        %4716 = vmatpush1.bf16.msra.mxu0 %v3304
        %4717 = vmatprep.subr.bf16.mxu0 %v3313
        %4718 = vmatpush1.bf16.msra.mxu0 %v3312
        %4719 = vmatprep.subr.bf16.mxu0 %v3321
        %4720 = vmatpush1.bf16.msra.mxu0 %v3320
        %4721 = vmatprep.subr.bf16.mxu0 %v3329
        %4722 = vmatpush1.bf16.msra.mxu0 %v3328
        %4723 = vmatprep.subr.bf16.mxu0 %v3337
        %4724 = vmatpush1.bf16.msra.mxu0 %v3336
        %4725 = vmatprep.subr.bf16.mxu0 %v3345
        %4726 = vmatpush1.bf16.msra.mxu0 %v3344
        %4727 = vmatprep.subr.bf16.mxu0 %v3353
        %4728 = vmatpush1.bf16.msra.mxu0 %v3352
        %4729 = vmatprep.subr.bf16.mxu0 %v3361
        %4730 = vmatpush1.bf16.msra.mxu0 %v3360
        %4731 = vmatprep.subr.bf16.mxu0 %v3369
        %4732 = vmatpush1.bf16.msra.mxu0 %v3368
        %4733 = vmatprep.subr.bf16.mxu0 %v3377
        %4734 = vmatpush1.bf16.msra.mxu0 %v3376
        %4735 = vmatprep.subr.bf16.mxu0 %v3385
        %4736 = vmatpush1.bf16.msra.mxu0 %v3384
        %4737 = vmatprep.subr.bf16.mxu0 %v3393
        %4738 = vmatpush1.bf16.msra.mxu0 %v3392
        %4739 = vmatprep.subr.bf16.mxu0 %v3401
        %4740 = vmatpush1.bf16.msra.mxu0 %v3400
        %4741 = vmatprep.subr.bf16.mxu0 %v3409
        %4742 = vmatpush1.bf16.msra.mxu0 %v3408
        %4743 = vmatprep.mubr.bf16.mxu0 %v1059
        %4744 = vmatmul.mubr.bf16.gmra.mrb[0].mxu0 %v1058
        %v4745 = vpop.f32.mrb[0].mxu0
        %v4746 = vadd.f32 %v4705, %v4745
        %v4747 = vpop.f32.mrb[0].mxu0
        %v4748 = vadd.f32 %v4707, %v4747
        %v4749 = vpop.f32.mrb[0].mxu0
        %v4750 = vpop.f32.mrb[0].mxu0
        %4751 = vdwg.mxu0
        %4752 = vmatprep.subr.bf16.mxu0 %v3417
        %4753 = vmatpush1.bf16.msra.mxu0 %v3416
        %4754 = vmatprep.subr.bf16.mxu0 %v3425
        %4755 = vmatpush1.bf16.msra.mxu0 %v3424
        %4756 = vmatprep.subr.bf16.mxu0 %v3433
        %4757 = vmatpush1.bf16.msra.mxu0 %v3432
        %4758 = vmatprep.subr.bf16.mxu0 %v3441
        %4759 = vmatpush1.bf16.msra.mxu0 %v3440
        %4760 = vmatprep.subr.bf16.mxu0 %v3449
        %4761 = vmatpush1.bf16.msra.mxu0 %v3448
        %4762 = vmatprep.subr.bf16.mxu0 %v3457
        %4763 = vmatpush1.bf16.msra.mxu0 %v3456
        %4764 = vmatprep.subr.bf16.mxu0 %v3465
        %4765 = vmatpush1.bf16.msra.mxu0 %v3464
        %4766 = vmatprep.subr.bf16.mxu0 %v3473
        %4767 = vmatpush1.bf16.msra.mxu0 %v3472
        %4768 = vmatprep.subr.bf16.mxu0 %v3481
        %4769 = vmatpush1.bf16.msra.mxu0 %v3480
        %4770 = vmatprep.subr.bf16.mxu0 %v3489
        %4771 = vmatpush1.bf16.msra.mxu0 %v3488
        %4772 = vmatprep.subr.bf16.mxu0 %v3497
        %4773 = vmatpush1.bf16.msra.mxu0 %v3496
        %4774 = vmatprep.subr.bf16.mxu0 %v3505
        %4775 = vmatpush1.bf16.msra.mxu0 %v3504
        %4776 = vmatprep.subr.bf16.mxu0 %v3513
        %4777 = vmatpush1.bf16.msra.mxu0 %v3512
        %4778 = vmatprep.subr.bf16.mxu0 %v3521
        %4779 = vmatpush1.bf16.msra.mxu0 %v3520
        %4780 = vmatprep.subr.bf16.mxu0 %v3529
        %4781 = vmatpush1.bf16.msra.mxu0 %v3528
        %4782 = vmatprep.subr.bf16.mxu0 %v3537
        %4783 = vmatpush1.bf16.msra.mxu0 %v3536
        %4784 = vmatprep.mubr.bf16.mxu0 %v1061
        %4785 = vmatmul.mubr.bf16.gmra.mrb[0].mxu0 %v1060
        %v4786 = vpop.f32.mrb[0].mxu0
        %v4787 = vadd.f32 %v4746, %v4786
        %v4788 = vpop.f32.mrb[0].mxu0
        %v4789 = vadd.f32 %v4748, %v4788
        %v4790 = vpop.f32.mrb[0].mxu0
        %v4791 = vpop.f32.mrb[0].mxu0
        %4792 = vdwg.mxu0
        %4793 = vmatprep.subr.bf16.mxu0 %v3545
        %4794 = vmatpush1.bf16.msra.mxu0 %v3544
        %4795 = vmatprep.subr.bf16.mxu0 %v3553
        %4796 = vmatpush1.bf16.msra.mxu0 %v3552
        %4797 = vmatprep.subr.bf16.mxu0 %v3561
        %4798 = vmatpush1.bf16.msra.mxu0 %v3560
        %4799 = vmatprep.subr.bf16.mxu0 %v3569
        %4800 = vmatpush1.bf16.msra.mxu0 %v3568
        %4801 = vmatprep.subr.bf16.mxu0 %v3577
        %4802 = vmatpush1.bf16.msra.mxu0 %v3576
        %4803 = vmatprep.subr.bf16.mxu0 %v3585
        %4804 = vmatpush1.bf16.msra.mxu0 %v3584
        %4805 = vmatprep.subr.bf16.mxu0 %v3593
        %4806 = vmatpush1.bf16.msra.mxu0 %v3592
        %4807 = vmatprep.subr.bf16.mxu0 %v3601
        %4808 = vmatpush1.bf16.msra.mxu0 %v3600
        %4809 = vmatprep.subr.bf16.mxu0 %v3609
        %4810 = vmatpush1.bf16.msra.mxu0 %v3608
        %4811 = vmatprep.subr.bf16.mxu0 %v3617
        %4812 = vmatpush1.bf16.msra.mxu0 %v3616
        %4813 = vmatprep.subr.bf16.mxu0 %v3625
        %4814 = vmatpush1.bf16.msra.mxu0 %v3624
        %4815 = vmatprep.subr.bf16.mxu0 %v3633
        %4816 = vmatpush1.bf16.msra.mxu0 %v3632
        %4817 = vmatprep.subr.bf16.mxu0 %v3641
        %4818 = vmatpush1.bf16.msra.mxu0 %v3640
        %4819 = vmatprep.subr.bf16.mxu0 %v3649
        %4820 = vmatpush1.bf16.msra.mxu0 %v3648
        %4821 = vmatprep.subr.bf16.mxu0 %v3657
        %4822 = vmatpush1.bf16.msra.mxu0 %v3656
        %4823 = vmatprep.subr.bf16.mxu0 %v3665
        %4824 = vmatpush1.bf16.msra.mxu0 %v3664
        %4825 = vmatprep.mubr.bf16.mxu0 %v1063
        %4826 = vmatmul.mubr.bf16.gmra.mrb[0].mxu0 %v1062
        %v4827 = vpop.f32.mrb[0].mxu0
        %v4828 = vadd.f32 %v4787, %v4827
        %v4829 = vpop.f32.mrb[0].mxu0
        %v4830 = vadd.f32 %v4789, %v4829
        %v4831 = vpop.f32.mrb[0].mxu0
        %v4832 = vpop.f32.mrb[0].mxu0
        %4833 = vdwg.mxu0
        %v4834 = vmax.f32 %v4336, 0.0
        %v4835 = vmax.f32 %v4338, 0.0
        %v4836 = vmax.f32 %v4500, 0.0
        %v4837 = vmax.f32 %v4502, 0.0
        %v4838 = vmax.f32 %v4664, 0.0
        %v4839 = vmax.f32 %v4666, 0.0
        %v4840 = vmax.f32 %v4828, 0.0
        %v4841 = vmax.f32 %v4830, 0.0
        %v4842 = vpack.c.bf16 %v4834, %v4834
        %v4843 = vpack.c.bf16 %v4835, %v4835
        %v4844 = vpack.c.bf16 %v4836, %v4836
        %v4845 = vpack.c.bf16 %v4837, %v4837
        %v4846 = vpack.c.bf16 %v4838, %v4838
        %v4847 = vpack.c.bf16 %v4839, %v4839
        %v4848 = vpack.c.bf16 %v4840, %v4840
        %v4849 = vpack.c.bf16 %v4841, %v4841
        %v4850 = vld [vmem:[#allocation11] sm:$0xff]
        %v4851 = vld [vmem:[#allocation11 + $0x8] sm:$0xff]
        %v4852 = vld [vmem:[#allocation11 + $0x10] sm:$0xff]
        %v4853 = vld [vmem:[#allocation11 + $0x18] sm:$0xff]
        %v4854 = vld [vmem:[#allocation11 + $0x20] sm:$0xff]
        %v4855 = vld [vmem:[#allocation11 + $0x28] sm:$0xff]
        %v4856 = vld [vmem:[#allocation11 + $0x30] sm:$0xff]
        %v4857 = vld [vmem:[#allocation11 + $0x38] sm:$0xff]
        %v4858 = vld [vmem:[#allocation11 + $0x40] sm:$0xff]
        %v4859 = vld [vmem:[#allocation11 + $0x48] sm:$0xff]
        %v4860 = vld [vmem:[#allocation11 + $0x50] sm:$0xff]
        %v4861 = vld [vmem:[#allocation11 + $0x58] sm:$0xff]
        %v4862 = vld [vmem:[#allocation11 + $0x60] sm:$0xff]
        %v4863 = vld [vmem:[#allocation11 + $0x68] sm:$0xff]
        %v4864 = vld [vmem:[#allocation11 + $0x70] sm:$0xff]
        %v4865 = vld [vmem:[#allocation11 + $0x78] sm:$0xff]
        %v4866 = vld [vmem:[#allocation11 + $0x80] sm:$0xff]
        %v4867 = vld [vmem:[#allocation11 + $0x88] sm:$0xff]
        %v4868 = vld [vmem:[#allocation11 + $0x90] sm:$0xff]
        %v4869 = vld [vmem:[#allocation11 + $0x98] sm:$0xff]
        %v4870 = vld [vmem:[#allocation11 + $0xa0] sm:$0xff]
        %v4871 = vld [vmem:[#allocation11 + $0xa8] sm:$0xff]
        %v4872 = vld [vmem:[#allocation11 + $0xb0] sm:$0xff]
        %v4873 = vld [vmem:[#allocation11 + $0xb8] sm:$0xff]
        %v4874 = vld [vmem:[#allocation11 + $0xc0] sm:$0xff]
        %v4875 = vld [vmem:[#allocation11 + $0xc8] sm:$0xff]
        %v4876 = vld [vmem:[#allocation11 + $0xd0] sm:$0xff]
        %v4877 = vld [vmem:[#allocation11 + $0xd8] sm:$0xff]
        %v4878 = vld [vmem:[#allocation11 + $0xe0] sm:$0xff]
        %v4879 = vld [vmem:[#allocation11 + $0xe8] sm:$0xff]
        %v4880 = vld [vmem:[#allocation11 + $0xf0] sm:$0xff]
        %v4881 = vld [vmem:[#allocation11 + $0xf8] sm:$0xff]
        %v4882 = vld [vmem:[#allocation11 + $0x100] sm:$0xff]
        %v4883 = vld [vmem:[#allocation11 + $0x108] sm:$0xff]
        %v4884 = vld [vmem:[#allocation11 + $0x110] sm:$0xff]
        %v4885 = vld [vmem:[#allocation11 + $0x118] sm:$0xff]
        %v4886 = vld [vmem:[#allocation11 + $0x120] sm:$0xff]
        %v4887 = vld [vmem:[#allocation11 + $0x128] sm:$0xff]
        %v4888 = vld [vmem:[#allocation11 + $0x130] sm:$0xff]
        %v4889 = vld [vmem:[#allocation11 + $0x138] sm:$0xff]
        %v4890 = vld [vmem:[#allocation11 + $0x140] sm:$0xff]
        %v4891 = vld [vmem:[#allocation11 + $0x148] sm:$0xff]
        %v4892 = vld [vmem:[#allocation11 + $0x150] sm:$0xff]
        %v4893 = vld [vmem:[#allocation11 + $0x158] sm:$0xff]
        %v4894 = vld [vmem:[#allocation11 + $0x160] sm:$0xff]
        %v4895 = vld [vmem:[#allocation11 + $0x168] sm:$0xff]
        %v4896 = vld [vmem:[#allocation11 + $0x170] sm:$0xff]
        %v4897 = vld [vmem:[#allocation11 + $0x178] sm:$0xff]
        %v4898 = vld [vmem:[#allocation11 + $0x180] sm:$0xff]
        %v4899 = vld [vmem:[#allocation11 + $0x188] sm:$0xff]
        %v4900 = vld [vmem:[#allocation11 + $0x190] sm:$0xff]
        %v4901 = vld [vmem:[#allocation11 + $0x198] sm:$0xff]
        %v4902 = vld [vmem:[#allocation11 + $0x1a0] sm:$0xff]
        %v4903 = vld [vmem:[#allocation11 + $0x1a8] sm:$0xff]
        %v4904 = vld [vmem:[#allocation11 + $0x1b0] sm:$0xff]
        %v4905 = vld [vmem:[#allocation11 + $0x1b8] sm:$0xff]
        %v4906 = vld [vmem:[#allocation11 + $0x1c0] sm:$0xff]
        %v4907 = vld [vmem:[#allocation11 + $0x1c8] sm:$0xff]
        %v4908 = vld [vmem:[#allocation11 + $0x1d0] sm:$0xff]
        %v4909 = vld [vmem:[#allocation11 + $0x1d8] sm:$0xff]
        %v4910 = vld [vmem:[#allocation11 + $0x1e0] sm:$0xff]
        %v4911 = vld [vmem:[#allocation11 + $0x1e8] sm:$0xff]
        %v4912 = vld [vmem:[#allocation11 + $0x1f0] sm:$0xff]
        %v4913 = vld [vmem:[#allocation11 + $0x1f8] sm:$0xff]
        %v4914 = vld [vmem:[#allocation11 + $0x200] sm:$0xff]
        %v4915 = vld [vmem:[#allocation11 + $0x208] sm:$0xff]
        %v4916 = vld [vmem:[#allocation11 + $0x210] sm:$0xff]
        %v4917 = vld [vmem:[#allocation11 + $0x218] sm:$0xff]
        %v4918 = vld [vmem:[#allocation11 + $0x220] sm:$0xff]
        %v4919 = vld [vmem:[#allocation11 + $0x228] sm:$0xff]
        %v4920 = vld [vmem:[#allocation11 + $0x230] sm:$0xff]
        %v4921 = vld [vmem:[#allocation11 + $0x238] sm:$0xff]
        %v4922 = vld [vmem:[#allocation11 + $0x240] sm:$0xff]
        %v4923 = vld [vmem:[#allocation11 + $0x248] sm:$0xff]
        %v4924 = vld [vmem:[#allocation11 + $0x250] sm:$0xff]
        %v4925 = vld [vmem:[#allocation11 + $0x258] sm:$0xff]
        %v4926 = vld [vmem:[#allocation11 + $0x260] sm:$0xff]
        %v4927 = vld [vmem:[#allocation11 + $0x268] sm:$0xff]
        %v4928 = vld [vmem:[#allocation11 + $0x270] sm:$0xff]
        %v4929 = vld [vmem:[#allocation11 + $0x278] sm:$0xff]
        %v4930 = vld [vmem:[#allocation11 + $0x280] sm:$0xff]
        %v4931 = vld [vmem:[#allocation11 + $0x288] sm:$0xff]
        %v4932 = vld [vmem:[#allocation11 + $0x290] sm:$0xff]
        %v4933 = vld [vmem:[#allocation11 + $0x298] sm:$0xff]
        %v4934 = vld [vmem:[#allocation11 + $0x2a0] sm:$0xff]
        %v4935 = vld [vmem:[#allocation11 + $0x2a8] sm:$0xff]
        %v4936 = vld [vmem:[#allocation11 + $0x2b0] sm:$0xff]
        %v4937 = vld [vmem:[#allocation11 + $0x2b8] sm:$0xff]
        %v4938 = vld [vmem:[#allocation11 + $0x2c0] sm:$0xff]
        %v4939 = vld [vmem:[#allocation11 + $0x2c8] sm:$0xff]
        %v4940 = vld [vmem:[#allocation11 + $0x2d0] sm:$0xff]
        %v4941 = vld [vmem:[#allocation11 + $0x2d8] sm:$0xff]
        %v4942 = vld [vmem:[#allocation11 + $0x2e0] sm:$0xff]
        %v4943 = vld [vmem:[#allocation11 + $0x2e8] sm:$0xff]
        %v4944 = vld [vmem:[#allocation11 + $0x2f0] sm:$0xff]
        %v4945 = vld [vmem:[#allocation11 + $0x2f8] sm:$0xff]
        %v4946 = vld [vmem:[#allocation11 + $0x300] sm:$0xff]
        %v4947 = vld [vmem:[#allocation11 + $0x308] sm:$0xff]
        %v4948 = vld [vmem:[#allocation11 + $0x310] sm:$0xff]
        %v4949 = vld [vmem:[#allocation11 + $0x318] sm:$0xff]
        %v4950 = vld [vmem:[#allocation11 + $0x320] sm:$0xff]
        %v4951 = vld [vmem:[#allocation11 + $0x328] sm:$0xff]
        %v4952 = vld [vmem:[#allocation11 + $0x330] sm:$0xff]
        %v4953 = vld [vmem:[#allocation11 + $0x338] sm:$0xff]
        %v4954 = vld [vmem:[#allocation11 + $0x340] sm:$0xff]
        %v4955 = vld [vmem:[#allocation11 + $0x348] sm:$0xff]
        %v4956 = vld [vmem:[#allocation11 + $0x350] sm:$0xff]
        %v4957 = vld [vmem:[#allocation11 + $0x358] sm:$0xff]
        %v4958 = vld [vmem:[#allocation11 + $0x360] sm:$0xff]
        %v4959 = vld [vmem:[#allocation11 + $0x368] sm:$0xff]
        %v4960 = vld [vmem:[#allocation11 + $0x370] sm:$0xff]
        %v4961 = vld [vmem:[#allocation11 + $0x378] sm:$0xff]
        %v4962 = vld [vmem:[#allocation11 + $0x380] sm:$0xff]
        %v4963 = vld [vmem:[#allocation11 + $0x388] sm:$0xff]
        %v4964 = vld [vmem:[#allocation11 + $0x390] sm:$0xff]
        %v4965 = vld [vmem:[#allocation11 + $0x398] sm:$0xff]
        %v4966 = vld [vmem:[#allocation11 + $0x3a0] sm:$0xff]
        %v4967 = vld [vmem:[#allocation11 + $0x3a8] sm:$0xff]
        %v4968 = vld [vmem:[#allocation11 + $0x3b0] sm:$0xff]
        %v4969 = vld [vmem:[#allocation11 + $0x3b8] sm:$0xff]
        %v4970 = vld [vmem:[#allocation11 + $0x3c0] sm:$0xff]
        %v4971 = vld [vmem:[#allocation11 + $0x3c8] sm:$0xff]
        %v4972 = vld [vmem:[#allocation11 + $0x3d0] sm:$0xff]
        %v4973 = vld [vmem:[#allocation11 + $0x3d8] sm:$0xff]
        %v4974 = vld [vmem:[#allocation11 + $0x3e0] sm:$0xff]
        %v4975 = vld [vmem:[#allocation11 + $0x3e8] sm:$0xff]
        %v4976 = vld [vmem:[#allocation11 + $0x3f0] sm:$0xff]
        %v4977 = vld [vmem:[#allocation11 + $0x3f8] sm:$0xff]
        %v4978 = vld [vmem:[#allocation11 + $0x400] sm:$0xff]
        %v4979 = vld [vmem:[#allocation11 + $0x408] sm:$0xff]
        %v4980 = vld [vmem:[#allocation11 + $0x410] sm:$0xff]
        %v4981 = vld [vmem:[#allocation11 + $0x418] sm:$0xff]
        %v4982 = vld [vmem:[#allocation11 + $0x420] sm:$0xff]
        %v4983 = vld [vmem:[#allocation11 + $0x428] sm:$0xff]
        %v4984 = vld [vmem:[#allocation11 + $0x430] sm:$0xff]
        %v4985 = vld [vmem:[#allocation11 + $0x438] sm:$0xff]
        %v4986 = vld [vmem:[#allocation11 + $0x440] sm:$0xff]
        %v4987 = vld [vmem:[#allocation11 + $0x448] sm:$0xff]
        %v4988 = vld [vmem:[#allocation11 + $0x450] sm:$0xff]
        %v4989 = vld [vmem:[#allocation11 + $0x458] sm:$0xff]
        %v4990 = vld [vmem:[#allocation11 + $0x460] sm:$0xff]
        %v4991 = vld [vmem:[#allocation11 + $0x468] sm:$0xff]
        %v4992 = vld [vmem:[#allocation11 + $0x470] sm:$0xff]
        %v4993 = vld [vmem:[#allocation11 + $0x478] sm:$0xff]
        %v4994 = vld [vmem:[#allocation11 + $0x480] sm:$0xff]
        %v4995 = vld [vmem:[#allocation11 + $0x488] sm:$0xff]
        %v4996 = vld [vmem:[#allocation11 + $0x490] sm:$0xff]
        %v4997 = vld [vmem:[#allocation11 + $0x498] sm:$0xff]
        %v4998 = vld [vmem:[#allocation11 + $0x4a0] sm:$0xff]
        %v4999 = vld [vmem:[#allocation11 + $0x4a8] sm:$0xff]
        %v5000 = vld [vmem:[#allocation11 + $0x4b0] sm:$0xff]
        %v5001 = vld [vmem:[#allocation11 + $0x4b8] sm:$0xff]
        %v5002 = vld [vmem:[#allocation11 + $0x4c0] sm:$0xff]
        %v5003 = vld [vmem:[#allocation11 + $0x4c8] sm:$0xff]
        %v5004 = vld [vmem:[#allocation11 + $0x4d0] sm:$0xff]
        %v5005 = vld [vmem:[#allocation11 + $0x4d8] sm:$0xff]
        %v5006 = vld [vmem:[#allocation11 + $0x4e0] sm:$0xff]
        %v5007 = vld [vmem:[#allocation11 + $0x4e8] sm:$0xff]
        %v5008 = vld [vmem:[#allocation11 + $0x4f0] sm:$0xff]
        %v5009 = vld [vmem:[#allocation11 + $0x4f8] sm:$0xff]
        %v5010 = vld [vmem:[#allocation11 + $0x500] sm:$0xff]
        %v5011 = vld [vmem:[#allocation11 + $0x508] sm:$0xff]
        %v5012 = vld [vmem:[#allocation11 + $0x510] sm:$0xff]
        %v5013 = vld [vmem:[#allocation11 + $0x518] sm:$0xff]
        %v5014 = vld [vmem:[#allocation11 + $0x520] sm:$0xff]
        %v5015 = vld [vmem:[#allocation11 + $0x528] sm:$0xff]
        %v5016 = vld [vmem:[#allocation11 + $0x530] sm:$0xff]
        %v5017 = vld [vmem:[#allocation11 + $0x538] sm:$0xff]
        %v5018 = vld [vmem:[#allocation11 + $0x540] sm:$0xff]
        %v5019 = vld [vmem:[#allocation11 + $0x548] sm:$0xff]
        %v5020 = vld [vmem:[#allocation11 + $0x550] sm:$0xff]
        %v5021 = vld [vmem:[#allocation11 + $0x558] sm:$0xff]
        %v5022 = vld [vmem:[#allocation11 + $0x560] sm:$0xff]
        %v5023 = vld [vmem:[#allocation11 + $0x568] sm:$0xff]
        %v5024 = vld [vmem:[#allocation11 + $0x570] sm:$0xff]
        %v5025 = vld [vmem:[#allocation11 + $0x578] sm:$0xff]
        %v5026 = vld [vmem:[#allocation11 + $0x580] sm:$0xff]
        %v5027 = vld [vmem:[#allocation11 + $0x588] sm:$0xff]
        %v5028 = vld [vmem:[#allocation11 + $0x590] sm:$0xff]
        %v5029 = vld [vmem:[#allocation11 + $0x598] sm:$0xff]
        %v5030 = vld [vmem:[#allocation11 + $0x5a0] sm:$0xff]
        %v5031 = vld [vmem:[#allocation11 + $0x5a8] sm:$0xff]
        %v5032 = vld [vmem:[#allocation11 + $0x5b0] sm:$0xff]
        %v5033 = vld [vmem:[#allocation11 + $0x5b8] sm:$0xff]
        %v5034 = vld [vmem:[#allocation11 + $0x5c0] sm:$0xff]
        %v5035 = vld [vmem:[#allocation11 + $0x5c8] sm:$0xff]
        %v5036 = vld [vmem:[#allocation11 + $0x5d0] sm:$0xff]
        %v5037 = vld [vmem:[#allocation11 + $0x5d8] sm:$0xff]
        %v5038 = vld [vmem:[#allocation11 + $0x5e0] sm:$0xff]
        %v5039 = vld [vmem:[#allocation11 + $0x5e8] sm:$0xff]
        %v5040 = vld [vmem:[#allocation11 + $0x5f0] sm:$0xff]
        %v5041 = vld [vmem:[#allocation11 + $0x5f8] sm:$0xff]
        %v5042 = vld [vmem:[#allocation11 + $0x600] sm:$0xff]
        %v5043 = vld [vmem:[#allocation11 + $0x608] sm:$0xff]
        %v5044 = vld [vmem:[#allocation11 + $0x610] sm:$0xff]
        %v5045 = vld [vmem:[#allocation11 + $0x618] sm:$0xff]
        %v5046 = vld [vmem:[#allocation11 + $0x620] sm:$0xff]
        %v5047 = vld [vmem:[#allocation11 + $0x628] sm:$0xff]
        %v5048 = vld [vmem:[#allocation11 + $0x630] sm:$0xff]
        %v5049 = vld [vmem:[#allocation11 + $0x638] sm:$0xff]
        %v5050 = vld [vmem:[#allocation11 + $0x640] sm:$0xff]
        %v5051 = vld [vmem:[#allocation11 + $0x648] sm:$0xff]
        %v5052 = vld [vmem:[#allocation11 + $0x650] sm:$0xff]
        %v5053 = vld [vmem:[#allocation11 + $0x658] sm:$0xff]
        %v5054 = vld [vmem:[#allocation11 + $0x660] sm:$0xff]
        %v5055 = vld [vmem:[#allocation11 + $0x668] sm:$0xff]
        %v5056 = vld [vmem:[#allocation11 + $0x670] sm:$0xff]
        %v5057 = vld [vmem:[#allocation11 + $0x678] sm:$0xff]
        %v5058 = vld [vmem:[#allocation11 + $0x680] sm:$0xff]
        %v5059 = vld [vmem:[#allocation11 + $0x688] sm:$0xff]
        %v5060 = vld [vmem:[#allocation11 + $0x690] sm:$0xff]
        %v5061 = vld [vmem:[#allocation11 + $0x698] sm:$0xff]
        %v5062 = vld [vmem:[#allocation11 + $0x6a0] sm:$0xff]
        %v5063 = vld [vmem:[#allocation11 + $0x6a8] sm:$0xff]
        %v5064 = vld [vmem:[#allocation11 + $0x6b0] sm:$0xff]
        %v5065 = vld [vmem:[#allocation11 + $0x6b8] sm:$0xff]
        %v5066 = vld [vmem:[#allocation11 + $0x6c0] sm:$0xff]
        %v5067 = vld [vmem:[#allocation11 + $0x6c8] sm:$0xff]
        %v5068 = vld [vmem:[#allocation11 + $0x6d0] sm:$0xff]
        %v5069 = vld [vmem:[#allocation11 + $0x6d8] sm:$0xff]
        %v5070 = vld [vmem:[#allocation11 + $0x6e0] sm:$0xff]
        %v5071 = vld [vmem:[#allocation11 + $0x6e8] sm:$0xff]
        %v5072 = vld [vmem:[#allocation11 + $0x6f0] sm:$0xff]
        %v5073 = vld [vmem:[#allocation11 + $0x6f8] sm:$0xff]
        %v5074 = vld [vmem:[#allocation11 + $0x700] sm:$0xff]
        %v5075 = vld [vmem:[#allocation11 + $0x708] sm:$0xff]
        %v5076 = vld [vmem:[#allocation11 + $0x710] sm:$0xff]
        %v5077 = vld [vmem:[#allocation11 + $0x718] sm:$0xff]
        %v5078 = vld [vmem:[#allocation11 + $0x720] sm:$0xff]
        %v5079 = vld [vmem:[#allocation11 + $0x728] sm:$0xff]
        %v5080 = vld [vmem:[#allocation11 + $0x730] sm:$0xff]
        %v5081 = vld [vmem:[#allocation11 + $0x738] sm:$0xff]
        %v5082 = vld [vmem:[#allocation11 + $0x740] sm:$0xff]
        %v5083 = vld [vmem:[#allocation11 + $0x748] sm:$0xff]
        %v5084 = vld [vmem:[#allocation11 + $0x750] sm:$0xff]
        %v5085 = vld [vmem:[#allocation11 + $0x758] sm:$0xff]
        %v5086 = vld [vmem:[#allocation11 + $0x760] sm:$0xff]
        %v5087 = vld [vmem:[#allocation11 + $0x768] sm:$0xff]
        %v5088 = vld [vmem:[#allocation11 + $0x770] sm:$0xff]
        %v5089 = vld [vmem:[#allocation11 + $0x778] sm:$0xff]
        %v5090 = vld [vmem:[#allocation11 + $0x780] sm:$0xff]
        %v5091 = vld [vmem:[#allocation11 + $0x788] sm:$0xff]
        %v5092 = vld [vmem:[#allocation11 + $0x790] sm:$0xff]
        %v5093 = vld [vmem:[#allocation11 + $0x798] sm:$0xff]
        %v5094 = vld [vmem:[#allocation11 + $0x7a0] sm:$0xff]
        %v5095 = vld [vmem:[#allocation11 + $0x7a8] sm:$0xff]
        %v5096 = vld [vmem:[#allocation11 + $0x7b0] sm:$0xff]
        %v5097 = vld [vmem:[#allocation11 + $0x7b8] sm:$0xff]
        %v5098 = vld [vmem:[#allocation11 + $0x7c0] sm:$0xff]
        %v5099 = vld [vmem:[#allocation11 + $0x7c8] sm:$0xff]
        %v5100 = vld [vmem:[#allocation11 + $0x7d0] sm:$0xff]
        %v5101 = vld [vmem:[#allocation11 + $0x7d8] sm:$0xff]
        %v5102 = vld [vmem:[#allocation11 + $0x7e0] sm:$0xff]
        %v5103 = vld [vmem:[#allocation11 + $0x7e8] sm:$0xff]
        %v5104 = vld [vmem:[#allocation11 + $0x7f0] sm:$0xff]
        %v5105 = vld [vmem:[#allocation11 + $0x7f8] sm:$0xff]
        %v5106 = vld [vmem:[#allocation13] sm:$0xf]
        %v5108 = vlaneseq
        %v5109 = vshrl.u32 %v5108, 7
        %v5110 = vsub.s32 0, %v5109
        %v5111 = vrot.slane %v5106, %v5110
        %v5112 = vlaneseq
        %v5113 = vshrl.u32 %v5112, 7
        %v5114 = vsub.s32 1, %v5113
        %v5115 = vrot.slane %v5106, %v5114
        %v5116 = vlaneseq
        %v5117 = vshrl.u32 %v5116, 7
        %v5118 = vsub.s32 2, %v5117
        %v5119 = vrot.slane %v5106, %v5118
        %v5120 = vlaneseq
        %v5121 = vshrl.u32 %v5120, 7
        %v5122 = vsub.s32 3, %v5121
        %v5123 = vrot.slane %v5106, %v5122
        %v5384 = vunpack.c.l.b16 %v4850
        %v5385 = vunpack.c.h.b16 %v4850
        %v5386 = vunpack.c.l.b16 %v4851
        %v5387 = vunpack.c.h.b16 %v4851
        %v5388 = vunpack.c.l.b16 %v4852
        %v5389 = vunpack.c.h.b16 %v4852
        %v5390 = vunpack.c.l.b16 %v4853
        %v5391 = vunpack.c.h.b16 %v4853
        %v5392 = vunpack.c.l.b16 %v4854
        %v5393 = vunpack.c.h.b16 %v4854
        %v5394 = vunpack.c.l.b16 %v4855
        %v5395 = vunpack.c.h.b16 %v4855
        %v5396 = vunpack.c.l.b16 %v4856
        %v5397 = vunpack.c.h.b16 %v4856
        %v5398 = vunpack.c.l.b16 %v4857
        %v5399 = vunpack.c.h.b16 %v4857
        %v5400 = vunpack.c.l.b16 %v4858
        %v5401 = vunpack.c.h.b16 %v4858
        %v5402 = vunpack.c.l.b16 %v4859
        %v5403 = vunpack.c.h.b16 %v4859
        %v5404 = vunpack.c.l.b16 %v4860
        %v5405 = vunpack.c.h.b16 %v4860
        %v5406 = vunpack.c.l.b16 %v4861
        %v5407 = vunpack.c.h.b16 %v4861
        %v5408 = vunpack.c.l.b16 %v4862
        %v5409 = vunpack.c.h.b16 %v4862
        %v5410 = vunpack.c.l.b16 %v4863
        %v5411 = vunpack.c.h.b16 %v4863
        %v5412 = vunpack.c.l.b16 %v4864
        %v5413 = vunpack.c.h.b16 %v4864
        %v5414 = vunpack.c.l.b16 %v4865
        %v5415 = vunpack.c.h.b16 %v4865
        %v5416 = vunpack.c.l.b16 %v4866
        %v5417 = vunpack.c.h.b16 %v4866
        %v5418 = vunpack.c.l.b16 %v4867
        %v5419 = vunpack.c.h.b16 %v4867
        %v5420 = vunpack.c.l.b16 %v4868
        %v5421 = vunpack.c.h.b16 %v4868
        %v5422 = vunpack.c.l.b16 %v4869
        %v5423 = vunpack.c.h.b16 %v4869
        %v5424 = vunpack.c.l.b16 %v4870
        %v5425 = vunpack.c.h.b16 %v4870
        %v5426 = vunpack.c.l.b16 %v4871
        %v5427 = vunpack.c.h.b16 %v4871
        %v5428 = vunpack.c.l.b16 %v4872
        %v5429 = vunpack.c.h.b16 %v4872
        %v5430 = vunpack.c.l.b16 %v4873
        %v5431 = vunpack.c.h.b16 %v4873
        %v5432 = vunpack.c.l.b16 %v4874
        %v5433 = vunpack.c.h.b16 %v4874
        %v5434 = vunpack.c.l.b16 %v4875
        %v5435 = vunpack.c.h.b16 %v4875
        %v5436 = vunpack.c.l.b16 %v4876
        %v5437 = vunpack.c.h.b16 %v4876
        %v5438 = vunpack.c.l.b16 %v4877
        %v5439 = vunpack.c.h.b16 %v4877
        %v5440 = vunpack.c.l.b16 %v4878
        %v5441 = vunpack.c.h.b16 %v4878
        %v5442 = vunpack.c.l.b16 %v4879
        %v5443 = vunpack.c.h.b16 %v4879
        %v5444 = vunpack.c.l.b16 %v4880
        %v5445 = vunpack.c.h.b16 %v4880
        %v5446 = vunpack.c.l.b16 %v4881
        %v5447 = vunpack.c.h.b16 %v4881
        %v5448 = vunpack.c.l.b16 %v4882
        %v5449 = vunpack.c.h.b16 %v4882
        %v5450 = vunpack.c.l.b16 %v4883
        %v5451 = vunpack.c.h.b16 %v4883
        %v5452 = vunpack.c.l.b16 %v4884
        %v5453 = vunpack.c.h.b16 %v4884
        %v5454 = vunpack.c.l.b16 %v4885
        %v5455 = vunpack.c.h.b16 %v4885
        %v5456 = vunpack.c.l.b16 %v4886
        %v5457 = vunpack.c.h.b16 %v4886
        %v5458 = vunpack.c.l.b16 %v4887
        %v5459 = vunpack.c.h.b16 %v4887
        %v5460 = vunpack.c.l.b16 %v4888
        %v5461 = vunpack.c.h.b16 %v4888
        %v5462 = vunpack.c.l.b16 %v4889
        %v5463 = vunpack.c.h.b16 %v4889
        %v5464 = vunpack.c.l.b16 %v4890
        %v5465 = vunpack.c.h.b16 %v4890
        %v5466 = vunpack.c.l.b16 %v4891
        %v5467 = vunpack.c.h.b16 %v4891
        %v5468 = vunpack.c.l.b16 %v4892
        %v5469 = vunpack.c.h.b16 %v4892
        %v5470 = vunpack.c.l.b16 %v4893
        %v5471 = vunpack.c.h.b16 %v4893
        %v5472 = vunpack.c.l.b16 %v4894
        %v5473 = vunpack.c.h.b16 %v4894
        %v5474 = vunpack.c.l.b16 %v4895
        %v5475 = vunpack.c.h.b16 %v4895
        %v5476 = vunpack.c.l.b16 %v4896
        %v5477 = vunpack.c.h.b16 %v4896
        %v5478 = vunpack.c.l.b16 %v4897
        %v5479 = vunpack.c.h.b16 %v4897
        %v5480 = vunpack.c.l.b16 %v4898
        %v5481 = vunpack.c.h.b16 %v4898
        %v5482 = vunpack.c.l.b16 %v4899
        %v5483 = vunpack.c.h.b16 %v4899
        %v5484 = vunpack.c.l.b16 %v4900
        %v5485 = vunpack.c.h.b16 %v4900
        %v5486 = vunpack.c.l.b16 %v4901
        %v5487 = vunpack.c.h.b16 %v4901
        %v5488 = vunpack.c.l.b16 %v4902
        %v5489 = vunpack.c.h.b16 %v4902
        %v5490 = vunpack.c.l.b16 %v4903
        %v5491 = vunpack.c.h.b16 %v4903
        %v5492 = vunpack.c.l.b16 %v4904
        %v5493 = vunpack.c.h.b16 %v4904
        %v5494 = vunpack.c.l.b16 %v4905
        %v5495 = vunpack.c.h.b16 %v4905
        %v5496 = vunpack.c.l.b16 %v4906
        %v5497 = vunpack.c.h.b16 %v4906
        %v5498 = vunpack.c.l.b16 %v4907
        %v5499 = vunpack.c.h.b16 %v4907
        %v5500 = vunpack.c.l.b16 %v4908
        %v5501 = vunpack.c.h.b16 %v4908
        %v5502 = vunpack.c.l.b16 %v4909
        %v5503 = vunpack.c.h.b16 %v4909
        %v5504 = vunpack.c.l.b16 %v4910
        %v5505 = vunpack.c.h.b16 %v4910
        %v5506 = vunpack.c.l.b16 %v4911
        %v5507 = vunpack.c.h.b16 %v4911
        %v5508 = vunpack.c.l.b16 %v4912
        %v5509 = vunpack.c.h.b16 %v4912
        %v5510 = vunpack.c.l.b16 %v4913
        %v5511 = vunpack.c.h.b16 %v4913
        %v5512 = vunpack.c.l.b16 %v4914
        %v5513 = vunpack.c.h.b16 %v4914
        %v5514 = vunpack.c.l.b16 %v4915
        %v5515 = vunpack.c.h.b16 %v4915
        %v5516 = vunpack.c.l.b16 %v4916
        %v5517 = vunpack.c.h.b16 %v4916
        %v5518 = vunpack.c.l.b16 %v4917
        %v5519 = vunpack.c.h.b16 %v4917
        %v5520 = vunpack.c.l.b16 %v4918
        %v5521 = vunpack.c.h.b16 %v4918
        %v5522 = vunpack.c.l.b16 %v4919
        %v5523 = vunpack.c.h.b16 %v4919
        %v5524 = vunpack.c.l.b16 %v4920
        %v5525 = vunpack.c.h.b16 %v4920
        %v5526 = vunpack.c.l.b16 %v4921
        %v5527 = vunpack.c.h.b16 %v4921
        %v5528 = vunpack.c.l.b16 %v4922
        %v5529 = vunpack.c.h.b16 %v4922
        %v5530 = vunpack.c.l.b16 %v4923
        %v5531 = vunpack.c.h.b16 %v4923
        %v5532 = vunpack.c.l.b16 %v4924
        %v5533 = vunpack.c.h.b16 %v4924
        %v5534 = vunpack.c.l.b16 %v4925
        %v5535 = vunpack.c.h.b16 %v4925
        %v5536 = vunpack.c.l.b16 %v4926
        %v5537 = vunpack.c.h.b16 %v4926
        %v5538 = vunpack.c.l.b16 %v4927
        %v5539 = vunpack.c.h.b16 %v4927
        %v5540 = vunpack.c.l.b16 %v4928
        %v5541 = vunpack.c.h.b16 %v4928
        %v5542 = vunpack.c.l.b16 %v4929
        %v5543 = vunpack.c.h.b16 %v4929
        %v5544 = vunpack.c.l.b16 %v4930
        %v5545 = vunpack.c.h.b16 %v4930
        %v5546 = vunpack.c.l.b16 %v4931
        %v5547 = vunpack.c.h.b16 %v4931
        %v5548 = vunpack.c.l.b16 %v4932
        %v5549 = vunpack.c.h.b16 %v4932
        %v5550 = vunpack.c.l.b16 %v4933
        %v5551 = vunpack.c.h.b16 %v4933
        %v5552 = vunpack.c.l.b16 %v4934
        %v5553 = vunpack.c.h.b16 %v4934
        %v5554 = vunpack.c.l.b16 %v4935
        %v5555 = vunpack.c.h.b16 %v4935
        %v5556 = vunpack.c.l.b16 %v4936
        %v5557 = vunpack.c.h.b16 %v4936
        %v5558 = vunpack.c.l.b16 %v4937
        %v5559 = vunpack.c.h.b16 %v4937
        %v5560 = vunpack.c.l.b16 %v4938
        %v5561 = vunpack.c.h.b16 %v4938
        %v5562 = vunpack.c.l.b16 %v4939
        %v5563 = vunpack.c.h.b16 %v4939
        %v5564 = vunpack.c.l.b16 %v4940
        %v5565 = vunpack.c.h.b16 %v4940
        %v5566 = vunpack.c.l.b16 %v4941
        %v5567 = vunpack.c.h.b16 %v4941
        %v5568 = vunpack.c.l.b16 %v4942
        %v5569 = vunpack.c.h.b16 %v4942
        %v5570 = vunpack.c.l.b16 %v4943
        %v5571 = vunpack.c.h.b16 %v4943
        %v5572 = vunpack.c.l.b16 %v4944
        %v5573 = vunpack.c.h.b16 %v4944
        %v5574 = vunpack.c.l.b16 %v4945
        %v5575 = vunpack.c.h.b16 %v4945
        %v5576 = vunpack.c.l.b16 %v4946
        %v5577 = vunpack.c.h.b16 %v4946
        %v5578 = vunpack.c.l.b16 %v4947
        %v5579 = vunpack.c.h.b16 %v4947
        %v5580 = vunpack.c.l.b16 %v4948
        %v5581 = vunpack.c.h.b16 %v4948
        %v5582 = vunpack.c.l.b16 %v4949
        %v5583 = vunpack.c.h.b16 %v4949
        %v5584 = vunpack.c.l.b16 %v4950
        %v5585 = vunpack.c.h.b16 %v4950
        %v5586 = vunpack.c.l.b16 %v4951
        %v5587 = vunpack.c.h.b16 %v4951
        %v5588 = vunpack.c.l.b16 %v4952
        %v5589 = vunpack.c.h.b16 %v4952
        %v5590 = vunpack.c.l.b16 %v4953
        %v5591 = vunpack.c.h.b16 %v4953
        %v5592 = vunpack.c.l.b16 %v4954
        %v5593 = vunpack.c.h.b16 %v4954
        %v5594 = vunpack.c.l.b16 %v4955
        %v5595 = vunpack.c.h.b16 %v4955
        %v5596 = vunpack.c.l.b16 %v4956
        %v5597 = vunpack.c.h.b16 %v4956
        %v5598 = vunpack.c.l.b16 %v4957
        %v5599 = vunpack.c.h.b16 %v4957
        %v5600 = vunpack.c.l.b16 %v4958
        %v5601 = vunpack.c.h.b16 %v4958
        %v5602 = vunpack.c.l.b16 %v4959
        %v5603 = vunpack.c.h.b16 %v4959
        %v5604 = vunpack.c.l.b16 %v4960
        %v5605 = vunpack.c.h.b16 %v4960
        %v5606 = vunpack.c.l.b16 %v4961
        %v5607 = vunpack.c.h.b16 %v4961
        %v5608 = vunpack.c.l.b16 %v4962
        %v5609 = vunpack.c.h.b16 %v4962
        %v5610 = vunpack.c.l.b16 %v4963
        %v5611 = vunpack.c.h.b16 %v4963
        %v5612 = vunpack.c.l.b16 %v4964
        %v5613 = vunpack.c.h.b16 %v4964
        %v5614 = vunpack.c.l.b16 %v4965
        %v5615 = vunpack.c.h.b16 %v4965
        %v5616 = vunpack.c.l.b16 %v4966
        %v5617 = vunpack.c.h.b16 %v4966
        %v5618 = vunpack.c.l.b16 %v4967
        %v5619 = vunpack.c.h.b16 %v4967
        %v5620 = vunpack.c.l.b16 %v4968
        %v5621 = vunpack.c.h.b16 %v4968
        %v5622 = vunpack.c.l.b16 %v4969
        %v5623 = vunpack.c.h.b16 %v4969
        %v5624 = vunpack.c.l.b16 %v4970
        %v5625 = vunpack.c.h.b16 %v4970
        %v5626 = vunpack.c.l.b16 %v4971
        %v5627 = vunpack.c.h.b16 %v4971
        %v5628 = vunpack.c.l.b16 %v4972
        %v5629 = vunpack.c.h.b16 %v4972
        %v5630 = vunpack.c.l.b16 %v4973
        %v5631 = vunpack.c.h.b16 %v4973
        %v5632 = vunpack.c.l.b16 %v4974
        %v5633 = vunpack.c.h.b16 %v4974
        %v5634 = vunpack.c.l.b16 %v4975
        %v5635 = vunpack.c.h.b16 %v4975
        %v5636 = vunpack.c.l.b16 %v4976
        %v5637 = vunpack.c.h.b16 %v4976
        %v5638 = vunpack.c.l.b16 %v4977
        %v5639 = vunpack.c.h.b16 %v4977
        %v5640 = vunpack.c.l.b16 %v4978
        %v5641 = vunpack.c.h.b16 %v4978
        %v5642 = vunpack.c.l.b16 %v4979
        %v5643 = vunpack.c.h.b16 %v4979
        %v5644 = vunpack.c.l.b16 %v4980
        %v5645 = vunpack.c.h.b16 %v4980
        %v5646 = vunpack.c.l.b16 %v4981
        %v5647 = vunpack.c.h.b16 %v4981
        %v5648 = vunpack.c.l.b16 %v4982
        %v5649 = vunpack.c.h.b16 %v4982
        %v5650 = vunpack.c.l.b16 %v4983
        %v5651 = vunpack.c.h.b16 %v4983
        %v5652 = vunpack.c.l.b16 %v4984
        %v5653 = vunpack.c.h.b16 %v4984
        %v5654 = vunpack.c.l.b16 %v4985
        %v5655 = vunpack.c.h.b16 %v4985
        %v5656 = vunpack.c.l.b16 %v4986
        %v5657 = vunpack.c.h.b16 %v4986
        %v5658 = vunpack.c.l.b16 %v4987
        %v5659 = vunpack.c.h.b16 %v4987
        %v5660 = vunpack.c.l.b16 %v4988
        %v5661 = vunpack.c.h.b16 %v4988
        %v5662 = vunpack.c.l.b16 %v4989
        %v5663 = vunpack.c.h.b16 %v4989
        %v5664 = vunpack.c.l.b16 %v4990
        %v5665 = vunpack.c.h.b16 %v4990
        %v5666 = vunpack.c.l.b16 %v4991
        %v5667 = vunpack.c.h.b16 %v4991
        %v5668 = vunpack.c.l.b16 %v4992
        %v5669 = vunpack.c.h.b16 %v4992
        %v5670 = vunpack.c.l.b16 %v4993
        %v5671 = vunpack.c.h.b16 %v4993
        %v5672 = vunpack.c.l.b16 %v4994
        %v5673 = vunpack.c.h.b16 %v4994
        %v5674 = vunpack.c.l.b16 %v4995
        %v5675 = vunpack.c.h.b16 %v4995
        %v5676 = vunpack.c.l.b16 %v4996
        %v5677 = vunpack.c.h.b16 %v4996
        %v5678 = vunpack.c.l.b16 %v4997
        %v5679 = vunpack.c.h.b16 %v4997
        %v5680 = vunpack.c.l.b16 %v4998
        %v5681 = vunpack.c.h.b16 %v4998
        %v5682 = vunpack.c.l.b16 %v4999
        %v5683 = vunpack.c.h.b16 %v4999
        %v5684 = vunpack.c.l.b16 %v5000
        %v5685 = vunpack.c.h.b16 %v5000
        %v5686 = vunpack.c.l.b16 %v5001
        %v5687 = vunpack.c.h.b16 %v5001
        %v5688 = vunpack.c.l.b16 %v5002
        %v5689 = vunpack.c.h.b16 %v5002
        %v5690 = vunpack.c.l.b16 %v5003
        %v5691 = vunpack.c.h.b16 %v5003
        %v5692 = vunpack.c.l.b16 %v5004
        %v5693 = vunpack.c.h.b16 %v5004
        %v5694 = vunpack.c.l.b16 %v5005
        %v5695 = vunpack.c.h.b16 %v5005
        %v5696 = vunpack.c.l.b16 %v5006
        %v5697 = vunpack.c.h.b16 %v5006
        %v5698 = vunpack.c.l.b16 %v5007
        %v5699 = vunpack.c.h.b16 %v5007
        %v5700 = vunpack.c.l.b16 %v5008
        %v5701 = vunpack.c.h.b16 %v5008
        %v5702 = vunpack.c.l.b16 %v5009
        %v5703 = vunpack.c.h.b16 %v5009
        %v5704 = vunpack.c.l.b16 %v5010
        %v5705 = vunpack.c.h.b16 %v5010
        %v5706 = vunpack.c.l.b16 %v5011
        %v5707 = vunpack.c.h.b16 %v5011
        %v5708 = vunpack.c.l.b16 %v5012
        %v5709 = vunpack.c.h.b16 %v5012
        %v5710 = vunpack.c.l.b16 %v5013
        %v5711 = vunpack.c.h.b16 %v5013
        %v5712 = vunpack.c.l.b16 %v5014
        %v5713 = vunpack.c.h.b16 %v5014
        %v5714 = vunpack.c.l.b16 %v5015
        %v5715 = vunpack.c.h.b16 %v5015
        %v5716 = vunpack.c.l.b16 %v5016
        %v5717 = vunpack.c.h.b16 %v5016
        %v5718 = vunpack.c.l.b16 %v5017
        %v5719 = vunpack.c.h.b16 %v5017
        %v5720 = vunpack.c.l.b16 %v5018
        %v5721 = vunpack.c.h.b16 %v5018
        %v5722 = vunpack.c.l.b16 %v5019
        %v5723 = vunpack.c.h.b16 %v5019
        %v5724 = vunpack.c.l.b16 %v5020
        %v5725 = vunpack.c.h.b16 %v5020
        %v5726 = vunpack.c.l.b16 %v5021
        %v5727 = vunpack.c.h.b16 %v5021
        %v5728 = vunpack.c.l.b16 %v5022
        %v5729 = vunpack.c.h.b16 %v5022
        %v5730 = vunpack.c.l.b16 %v5023
        %v5731 = vunpack.c.h.b16 %v5023
        %v5732 = vunpack.c.l.b16 %v5024
        %v5733 = vunpack.c.h.b16 %v5024
        %v5734 = vunpack.c.l.b16 %v5025
        %v5735 = vunpack.c.h.b16 %v5025
        %v5736 = vunpack.c.l.b16 %v5026
        %v5737 = vunpack.c.h.b16 %v5026
        %v5738 = vunpack.c.l.b16 %v5027
        %v5739 = vunpack.c.h.b16 %v5027
        %v5740 = vunpack.c.l.b16 %v5028
        %v5741 = vunpack.c.h.b16 %v5028
        %v5742 = vunpack.c.l.b16 %v5029
        %v5743 = vunpack.c.h.b16 %v5029
        %v5744 = vunpack.c.l.b16 %v5030
        %v5745 = vunpack.c.h.b16 %v5030
        %v5746 = vunpack.c.l.b16 %v5031
        %v5747 = vunpack.c.h.b16 %v5031
        %v5748 = vunpack.c.l.b16 %v5032
        %v5749 = vunpack.c.h.b16 %v5032
        %v5750 = vunpack.c.l.b16 %v5033
        %v5751 = vunpack.c.h.b16 %v5033
        %v5752 = vunpack.c.l.b16 %v5034
        %v5753 = vunpack.c.h.b16 %v5034
        %v5754 = vunpack.c.l.b16 %v5035
        %v5755 = vunpack.c.h.b16 %v5035
        %v5756 = vunpack.c.l.b16 %v5036
        %v5757 = vunpack.c.h.b16 %v5036
        %v5758 = vunpack.c.l.b16 %v5037
        %v5759 = vunpack.c.h.b16 %v5037
        %v5760 = vunpack.c.l.b16 %v5038
        %v5761 = vunpack.c.h.b16 %v5038
        %v5762 = vunpack.c.l.b16 %v5039
        %v5763 = vunpack.c.h.b16 %v5039
        %v5764 = vunpack.c.l.b16 %v5040
        %v5765 = vunpack.c.h.b16 %v5040
        %v5766 = vunpack.c.l.b16 %v5041
        %v5767 = vunpack.c.h.b16 %v5041
        %v5768 = vunpack.c.l.b16 %v5042
        %v5769 = vunpack.c.h.b16 %v5042
        %v5770 = vunpack.c.l.b16 %v5043
        %v5771 = vunpack.c.h.b16 %v5043
        %v5772 = vunpack.c.l.b16 %v5044
        %v5773 = vunpack.c.h.b16 %v5044
        %v5774 = vunpack.c.l.b16 %v5045
        %v5775 = vunpack.c.h.b16 %v5045
        %v5776 = vunpack.c.l.b16 %v5046
        %v5777 = vunpack.c.h.b16 %v5046
        %v5778 = vunpack.c.l.b16 %v5047
        %v5779 = vunpack.c.h.b16 %v5047
        %v5780 = vunpack.c.l.b16 %v5048
        %v5781 = vunpack.c.h.b16 %v5048
        %v5782 = vunpack.c.l.b16 %v5049
        %v5783 = vunpack.c.h.b16 %v5049
        %v5784 = vunpack.c.l.b16 %v5050
        %v5785 = vunpack.c.h.b16 %v5050
        %v5786 = vunpack.c.l.b16 %v5051
        %v5787 = vunpack.c.h.b16 %v5051
        %v5788 = vunpack.c.l.b16 %v5052
        %v5789 = vunpack.c.h.b16 %v5052
        %v5790 = vunpack.c.l.b16 %v5053
        %v5791 = vunpack.c.h.b16 %v5053
        %v5792 = vunpack.c.l.b16 %v5054
        %v5793 = vunpack.c.h.b16 %v5054
        %v5794 = vunpack.c.l.b16 %v5055
        %v5795 = vunpack.c.h.b16 %v5055
        %v5796 = vunpack.c.l.b16 %v5056
        %v5797 = vunpack.c.h.b16 %v5056
        %v5798 = vunpack.c.l.b16 %v5057
        %v5799 = vunpack.c.h.b16 %v5057
        %v5800 = vunpack.c.l.b16 %v5058
        %v5801 = vunpack.c.h.b16 %v5058
        %v5802 = vunpack.c.l.b16 %v5059
        %v5803 = vunpack.c.h.b16 %v5059
        %v5804 = vunpack.c.l.b16 %v5060
        %v5805 = vunpack.c.h.b16 %v5060
        %v5806 = vunpack.c.l.b16 %v5061
        %v5807 = vunpack.c.h.b16 %v5061
        %v5808 = vunpack.c.l.b16 %v5062
        %v5809 = vunpack.c.h.b16 %v5062
        %v5810 = vunpack.c.l.b16 %v5063
        %v5811 = vunpack.c.h.b16 %v5063
        %v5812 = vunpack.c.l.b16 %v5064
        %v5813 = vunpack.c.h.b16 %v5064
        %v5814 = vunpack.c.l.b16 %v5065
        %v5815 = vunpack.c.h.b16 %v5065
        %v5816 = vunpack.c.l.b16 %v5066
        %v5817 = vunpack.c.h.b16 %v5066
        %v5818 = vunpack.c.l.b16 %v5067
        %v5819 = vunpack.c.h.b16 %v5067
        %v5820 = vunpack.c.l.b16 %v5068
        %v5821 = vunpack.c.h.b16 %v5068
        %v5822 = vunpack.c.l.b16 %v5069
        %v5823 = vunpack.c.h.b16 %v5069
        %v5824 = vunpack.c.l.b16 %v5070
        %v5825 = vunpack.c.h.b16 %v5070
        %v5826 = vunpack.c.l.b16 %v5071
        %v5827 = vunpack.c.h.b16 %v5071
        %v5828 = vunpack.c.l.b16 %v5072
        %v5829 = vunpack.c.h.b16 %v5072
        %v5830 = vunpack.c.l.b16 %v5073
        %v5831 = vunpack.c.h.b16 %v5073
        %v5832 = vunpack.c.l.b16 %v5074
        %v5833 = vunpack.c.h.b16 %v5074
        %v5834 = vunpack.c.l.b16 %v5075
        %v5835 = vunpack.c.h.b16 %v5075
        %v5836 = vunpack.c.l.b16 %v5076
        %v5837 = vunpack.c.h.b16 %v5076
        %v5838 = vunpack.c.l.b16 %v5077
        %v5839 = vunpack.c.h.b16 %v5077
        %v5840 = vunpack.c.l.b16 %v5078
        %v5841 = vunpack.c.h.b16 %v5078
        %v5842 = vunpack.c.l.b16 %v5079
        %v5843 = vunpack.c.h.b16 %v5079
        %v5844 = vunpack.c.l.b16 %v5080
        %v5845 = vunpack.c.h.b16 %v5080
        %v5846 = vunpack.c.l.b16 %v5081
        %v5847 = vunpack.c.h.b16 %v5081
        %v5848 = vunpack.c.l.b16 %v5082
        %v5849 = vunpack.c.h.b16 %v5082
        %v5850 = vunpack.c.l.b16 %v5083
        %v5851 = vunpack.c.h.b16 %v5083
        %v5852 = vunpack.c.l.b16 %v5084
        %v5853 = vunpack.c.h.b16 %v5084
        %v5854 = vunpack.c.l.b16 %v5085
        %v5855 = vunpack.c.h.b16 %v5085
        %v5856 = vunpack.c.l.b16 %v5086
        %v5857 = vunpack.c.h.b16 %v5086
        %v5858 = vunpack.c.l.b16 %v5087
        %v5859 = vunpack.c.h.b16 %v5087
        %v5860 = vunpack.c.l.b16 %v5088
        %v5861 = vunpack.c.h.b16 %v5088
        %v5862 = vunpack.c.l.b16 %v5089
        %v5863 = vunpack.c.h.b16 %v5089
        %v5864 = vunpack.c.l.b16 %v5090
        %v5865 = vunpack.c.h.b16 %v5090
        %v5866 = vunpack.c.l.b16 %v5091
        %v5867 = vunpack.c.h.b16 %v5091
        %v5868 = vunpack.c.l.b16 %v5092
        %v5869 = vunpack.c.h.b16 %v5092
        %v5870 = vunpack.c.l.b16 %v5093
        %v5871 = vunpack.c.h.b16 %v5093
        %v5872 = vunpack.c.l.b16 %v5094
        %v5873 = vunpack.c.h.b16 %v5094
        %v5874 = vunpack.c.l.b16 %v5095
        %v5875 = vunpack.c.h.b16 %v5095
        %v5876 = vunpack.c.l.b16 %v5096
        %v5877 = vunpack.c.h.b16 %v5096
        %v5878 = vunpack.c.l.b16 %v5097
        %v5879 = vunpack.c.h.b16 %v5097
        %v5880 = vunpack.c.l.b16 %v5098
        %v5881 = vunpack.c.h.b16 %v5098
        %v5882 = vunpack.c.l.b16 %v5099
        %v5883 = vunpack.c.h.b16 %v5099
        %v5884 = vunpack.c.l.b16 %v5100
        %v5885 = vunpack.c.h.b16 %v5100
        %v5886 = vunpack.c.l.b16 %v5101
        %v5887 = vunpack.c.h.b16 %v5101
        %v5888 = vunpack.c.l.b16 %v5102
        %v5889 = vunpack.c.h.b16 %v5102
        %v5890 = vunpack.c.l.b16 %v5103
        %v5891 = vunpack.c.h.b16 %v5103
        %v5892 = vunpack.c.l.b16 %v5104
        %v5893 = vunpack.c.h.b16 %v5104
        %v5894 = vunpack.c.l.b16 %v5105
        %v5895 = vunpack.c.h.b16 %v5105
        %v5896 = vpack.c.b16 %v5388, %v5384
        %v5897 = vpack.c.b16 %v5389, %v5385
        %v5898 = vpack.c.b16 %v5390, %v5386
        %v5899 = vpack.c.b16 %v5391, %v5387
        %v5900 = vpack.c.b16 %v5396, %v5392
        %v5901 = vpack.c.b16 %v5397, %v5393
        %v5902 = vpack.c.b16 %v5398, %v5394
        %v5903 = vpack.c.b16 %v5399, %v5395
        %v5904 = vpack.c.b16 %v5404, %v5400
        %v5905 = vpack.c.b16 %v5405, %v5401
        %v5906 = vpack.c.b16 %v5406, %v5402
        %v5907 = vpack.c.b16 %v5407, %v5403
        %v5908 = vpack.c.b16 %v5412, %v5408
        %v5909 = vpack.c.b16 %v5413, %v5409
        %v5910 = vpack.c.b16 %v5414, %v5410
        %v5911 = vpack.c.b16 %v5415, %v5411
        %v5912 = vpack.c.b16 %v5420, %v5416
        %v5913 = vpack.c.b16 %v5421, %v5417
        %v5914 = vpack.c.b16 %v5422, %v5418
        %v5915 = vpack.c.b16 %v5423, %v5419
        %v5916 = vpack.c.b16 %v5428, %v5424
        %v5917 = vpack.c.b16 %v5429, %v5425
        %v5918 = vpack.c.b16 %v5430, %v5426
        %v5919 = vpack.c.b16 %v5431, %v5427
        %v5920 = vpack.c.b16 %v5436, %v5432
        %v5921 = vpack.c.b16 %v5437, %v5433
        %v5922 = vpack.c.b16 %v5438, %v5434
        %v5923 = vpack.c.b16 %v5439, %v5435
        %v5924 = vpack.c.b16 %v5444, %v5440
        %v5925 = vpack.c.b16 %v5445, %v5441
        %v5926 = vpack.c.b16 %v5446, %v5442
        %v5927 = vpack.c.b16 %v5447, %v5443
        %v5928 = vpack.c.b16 %v5452, %v5448
        %v5929 = vpack.c.b16 %v5453, %v5449
        %v5930 = vpack.c.b16 %v5454, %v5450
        %v5931 = vpack.c.b16 %v5455, %v5451
        %v5932 = vpack.c.b16 %v5460, %v5456
        %v5933 = vpack.c.b16 %v5461, %v5457
        %v5934 = vpack.c.b16 %v5462, %v5458
        %v5935 = vpack.c.b16 %v5463, %v5459
        %v5936 = vpack.c.b16 %v5468, %v5464
        %v5937 = vpack.c.b16 %v5469, %v5465
        %v5938 = vpack.c.b16 %v5470, %v5466
        %v5939 = vpack.c.b16 %v5471, %v5467
        %v5940 = vpack.c.b16 %v5476, %v5472
        %v5941 = vpack.c.b16 %v5477, %v5473
        %v5942 = vpack.c.b16 %v5478, %v5474
        %v5943 = vpack.c.b16 %v5479, %v5475
        %v5944 = vpack.c.b16 %v5484, %v5480
        %v5945 = vpack.c.b16 %v5485, %v5481
        %v5946 = vpack.c.b16 %v5486, %v5482
        %v5947 = vpack.c.b16 %v5487, %v5483
        %v5948 = vpack.c.b16 %v5492, %v5488
        %v5949 = vpack.c.b16 %v5493, %v5489
        %v5950 = vpack.c.b16 %v5494, %v5490
        %v5951 = vpack.c.b16 %v5495, %v5491
        %v5952 = vpack.c.b16 %v5500, %v5496
        %v5953 = vpack.c.b16 %v5501, %v5497
        %v5954 = vpack.c.b16 %v5502, %v5498
        %v5955 = vpack.c.b16 %v5503, %v5499
        %v5956 = vpack.c.b16 %v5508, %v5504
        %v5957 = vpack.c.b16 %v5509, %v5505
        %v5958 = vpack.c.b16 %v5510, %v5506
        %v5959 = vpack.c.b16 %v5511, %v5507
        %v5960 = vpack.c.b16 %v5516, %v5512
        %v5961 = vpack.c.b16 %v5517, %v5513
        %v5962 = vpack.c.b16 %v5518, %v5514
        %v5963 = vpack.c.b16 %v5519, %v5515
        %v5964 = vpack.c.b16 %v5524, %v5520
        %v5965 = vpack.c.b16 %v5525, %v5521
        %v5966 = vpack.c.b16 %v5526, %v5522
        %v5967 = vpack.c.b16 %v5527, %v5523
        %v5968 = vpack.c.b16 %v5532, %v5528
        %v5969 = vpack.c.b16 %v5533, %v5529
        %v5970 = vpack.c.b16 %v5534, %v5530
        %v5971 = vpack.c.b16 %v5535, %v5531
        %v5972 = vpack.c.b16 %v5540, %v5536
        %v5973 = vpack.c.b16 %v5541, %v5537
        %v5974 = vpack.c.b16 %v5542, %v5538
        %v5975 = vpack.c.b16 %v5543, %v5539
        %v5976 = vpack.c.b16 %v5548, %v5544
        %v5977 = vpack.c.b16 %v5549, %v5545
        %v5978 = vpack.c.b16 %v5550, %v5546
        %v5979 = vpack.c.b16 %v5551, %v5547
        %v5980 = vpack.c.b16 %v5556, %v5552
        %v5981 = vpack.c.b16 %v5557, %v5553
        %v5982 = vpack.c.b16 %v5558, %v5554
        %v5983 = vpack.c.b16 %v5559, %v5555
        %v5984 = vpack.c.b16 %v5564, %v5560
        %v5985 = vpack.c.b16 %v5565, %v5561
        %v5986 = vpack.c.b16 %v5566, %v5562
        %v5987 = vpack.c.b16 %v5567, %v5563
        %v5988 = vpack.c.b16 %v5572, %v5568
        %v5989 = vpack.c.b16 %v5573, %v5569
        %v5990 = vpack.c.b16 %v5574, %v5570
        %v5991 = vpack.c.b16 %v5575, %v5571
        %v5992 = vpack.c.b16 %v5580, %v5576
        %v5993 = vpack.c.b16 %v5581, %v5577
        %v5994 = vpack.c.b16 %v5582, %v5578
        %v5995 = vpack.c.b16 %v5583, %v5579
        %v5996 = vpack.c.b16 %v5588, %v5584
        %v5997 = vpack.c.b16 %v5589, %v5585
        %v5998 = vpack.c.b16 %v5590, %v5586
        %v5999 = vpack.c.b16 %v5591, %v5587
        %v6000 = vpack.c.b16 %v5596, %v5592
        %v6001 = vpack.c.b16 %v5597, %v5593
        %v6002 = vpack.c.b16 %v5598, %v5594
        %v6003 = vpack.c.b16 %v5599, %v5595
        %v6004 = vpack.c.b16 %v5604, %v5600
        %v6005 = vpack.c.b16 %v5605, %v5601
        %v6006 = vpack.c.b16 %v5606, %v5602
        %v6007 = vpack.c.b16 %v5607, %v5603
        %v6008 = vpack.c.b16 %v5612, %v5608
        %v6009 = vpack.c.b16 %v5613, %v5609
        %v6010 = vpack.c.b16 %v5614, %v5610
        %v6011 = vpack.c.b16 %v5615, %v5611
        %v6012 = vpack.c.b16 %v5620, %v5616
        %v6013 = vpack.c.b16 %v5621, %v5617
        %v6014 = vpack.c.b16 %v5622, %v5618
        %v6015 = vpack.c.b16 %v5623, %v5619
        %v6016 = vpack.c.b16 %v5628, %v5624
        %v6017 = vpack.c.b16 %v5629, %v5625
        %v6018 = vpack.c.b16 %v5630, %v5626
        %v6019 = vpack.c.b16 %v5631, %v5627
        %v6020 = vpack.c.b16 %v5636, %v5632
        %v6021 = vpack.c.b16 %v5637, %v5633
        %v6022 = vpack.c.b16 %v5638, %v5634
        %v6023 = vpack.c.b16 %v5639, %v5635
        %v6024 = vpack.c.b16 %v5644, %v5640
        %v6025 = vpack.c.b16 %v5645, %v5641
        %v6026 = vpack.c.b16 %v5646, %v5642
        %v6027 = vpack.c.b16 %v5647, %v5643
        %v6028 = vpack.c.b16 %v5652, %v5648
        %v6029 = vpack.c.b16 %v5653, %v5649
        %v6030 = vpack.c.b16 %v5654, %v5650
        %v6031 = vpack.c.b16 %v5655, %v5651
        %v6032 = vpack.c.b16 %v5660, %v5656
        %v6033 = vpack.c.b16 %v5661, %v5657
        %v6034 = vpack.c.b16 %v5662, %v5658
        %v6035 = vpack.c.b16 %v5663, %v5659
        %v6036 = vpack.c.b16 %v5668, %v5664
        %v6037 = vpack.c.b16 %v5669, %v5665
        %v6038 = vpack.c.b16 %v5670, %v5666
        %v6039 = vpack.c.b16 %v5671, %v5667
        %v6040 = vpack.c.b16 %v5676, %v5672
        %v6041 = vpack.c.b16 %v5677, %v5673
        %v6042 = vpack.c.b16 %v5678, %v5674
        %v6043 = vpack.c.b16 %v5679, %v5675
        %v6044 = vpack.c.b16 %v5684, %v5680
        %v6045 = vpack.c.b16 %v5685, %v5681
        %v6046 = vpack.c.b16 %v5686, %v5682
        %v6047 = vpack.c.b16 %v5687, %v5683
        %v6048 = vpack.c.b16 %v5692, %v5688
        %v6049 = vpack.c.b16 %v5693, %v5689
        %v6050 = vpack.c.b16 %v5694, %v5690
        %v6051 = vpack.c.b16 %v5695, %v5691
        %v6052 = vpack.c.b16 %v5700, %v5696
        %v6053 = vpack.c.b16 %v5701, %v5697
        %v6054 = vpack.c.b16 %v5702, %v5698
        %v6055 = vpack.c.b16 %v5703, %v5699
        %v6056 = vpack.c.b16 %v5708, %v5704
        %v6057 = vpack.c.b16 %v5709, %v5705
        %v6058 = vpack.c.b16 %v5710, %v5706
        %v6059 = vpack.c.b16 %v5711, %v5707
        %v6060 = vpack.c.b16 %v5716, %v5712
        %v6061 = vpack.c.b16 %v5717, %v5713
        %v6062 = vpack.c.b16 %v5718, %v5714
        %v6063 = vpack.c.b16 %v5719, %v5715
        %v6064 = vpack.c.b16 %v5724, %v5720
        %v6065 = vpack.c.b16 %v5725, %v5721
        %v6066 = vpack.c.b16 %v5726, %v5722
        %v6067 = vpack.c.b16 %v5727, %v5723
        %v6068 = vpack.c.b16 %v5732, %v5728
        %v6069 = vpack.c.b16 %v5733, %v5729
        %v6070 = vpack.c.b16 %v5734, %v5730
        %v6071 = vpack.c.b16 %v5735, %v5731
        %v6072 = vpack.c.b16 %v5740, %v5736
        %v6073 = vpack.c.b16 %v5741, %v5737
        %v6074 = vpack.c.b16 %v5742, %v5738
        %v6075 = vpack.c.b16 %v5743, %v5739
        %v6076 = vpack.c.b16 %v5748, %v5744
        %v6077 = vpack.c.b16 %v5749, %v5745
        %v6078 = vpack.c.b16 %v5750, %v5746
        %v6079 = vpack.c.b16 %v5751, %v5747
        %v6080 = vpack.c.b16 %v5756, %v5752
        %v6081 = vpack.c.b16 %v5757, %v5753
        %v6082 = vpack.c.b16 %v5758, %v5754
        %v6083 = vpack.c.b16 %v5759, %v5755
        %v6084 = vpack.c.b16 %v5764, %v5760
        %v6085 = vpack.c.b16 %v5765, %v5761
        %v6086 = vpack.c.b16 %v5766, %v5762
        %v6087 = vpack.c.b16 %v5767, %v5763
        %v6088 = vpack.c.b16 %v5772, %v5768
        %v6089 = vpack.c.b16 %v5773, %v5769
        %v6090 = vpack.c.b16 %v5774, %v5770
        %v6091 = vpack.c.b16 %v5775, %v5771
        %v6092 = vpack.c.b16 %v5780, %v5776
        %v6093 = vpack.c.b16 %v5781, %v5777
        %v6094 = vpack.c.b16 %v5782, %v5778
        %v6095 = vpack.c.b16 %v5783, %v5779
        %v6096 = vpack.c.b16 %v5788, %v5784
        %v6097 = vpack.c.b16 %v5789, %v5785
        %v6098 = vpack.c.b16 %v5790, %v5786
        %v6099 = vpack.c.b16 %v5791, %v5787
        %v6100 = vpack.c.b16 %v5796, %v5792
        %v6101 = vpack.c.b16 %v5797, %v5793
        %v6102 = vpack.c.b16 %v5798, %v5794
        %v6103 = vpack.c.b16 %v5799, %v5795
        %v6104 = vpack.c.b16 %v5804, %v5800
        %v6105 = vpack.c.b16 %v5805, %v5801
        %v6106 = vpack.c.b16 %v5806, %v5802
        %v6107 = vpack.c.b16 %v5807, %v5803
        %v6108 = vpack.c.b16 %v5812, %v5808
        %v6109 = vpack.c.b16 %v5813, %v5809
        %v6110 = vpack.c.b16 %v5814, %v5810
        %v6111 = vpack.c.b16 %v5815, %v5811
        %v6112 = vpack.c.b16 %v5820, %v5816
        %v6113 = vpack.c.b16 %v5821, %v5817
        %v6114 = vpack.c.b16 %v5822, %v5818
        %v6115 = vpack.c.b16 %v5823, %v5819
        %v6116 = vpack.c.b16 %v5828, %v5824
        %v6117 = vpack.c.b16 %v5829, %v5825
        %v6118 = vpack.c.b16 %v5830, %v5826
        %v6119 = vpack.c.b16 %v5831, %v5827
        %v6120 = vpack.c.b16 %v5836, %v5832
        %v6121 = vpack.c.b16 %v5837, %v5833
        %v6122 = vpack.c.b16 %v5838, %v5834
        %v6123 = vpack.c.b16 %v5839, %v5835
        %v6124 = vpack.c.b16 %v5844, %v5840
        %v6125 = vpack.c.b16 %v5845, %v5841
        %v6126 = vpack.c.b16 %v5846, %v5842
        %v6127 = vpack.c.b16 %v5847, %v5843
        %v6128 = vpack.c.b16 %v5852, %v5848
        %v6129 = vpack.c.b16 %v5853, %v5849
        %v6130 = vpack.c.b16 %v5854, %v5850
        %v6131 = vpack.c.b16 %v5855, %v5851
        %v6132 = vpack.c.b16 %v5860, %v5856
        %v6133 = vpack.c.b16 %v5861, %v5857
        %v6134 = vpack.c.b16 %v5862, %v5858
        %v6135 = vpack.c.b16 %v5863, %v5859
        %v6136 = vpack.c.b16 %v5868, %v5864
        %v6137 = vpack.c.b16 %v5869, %v5865
        %v6138 = vpack.c.b16 %v5870, %v5866
        %v6139 = vpack.c.b16 %v5871, %v5867
        %v6140 = vpack.c.b16 %v5876, %v5872
        %v6141 = vpack.c.b16 %v5877, %v5873
        %v6142 = vpack.c.b16 %v5878, %v5874
        %v6143 = vpack.c.b16 %v5879, %v5875
        %v6144 = vpack.c.b16 %v5884, %v5880
        %v6145 = vpack.c.b16 %v5885, %v5881
        %v6146 = vpack.c.b16 %v5886, %v5882
        %v6147 = vpack.c.b16 %v5887, %v5883
        %v6148 = vpack.c.b16 %v5892, %v5888
        %v6149 = vpack.c.b16 %v5893, %v5889
        %v6150 = vpack.c.b16 %v5894, %v5890
        %v6151 = vpack.c.b16 %v5895, %v5891
        %6408 = vmatprep.subr.bf16.mxu0 %v5897
        %6409 = vmatpush1.bf16.msra.mxu0 %v5896
        %6410 = vmatprep.subr.bf16.mxu0 %v5901
        %6411 = vmatpush1.bf16.msra.mxu0 %v5900
        %6412 = vmatprep.subr.bf16.mxu0 %v5905
        %6413 = vmatpush1.bf16.msra.mxu0 %v5904
        %6414 = vmatprep.subr.bf16.mxu0 %v5909
        %6415 = vmatpush1.bf16.msra.mxu0 %v5908
        %6416 = vmatprep.subr.bf16.mxu0 %v5913
        %6417 = vmatpush1.bf16.msra.mxu0 %v5912
        %6418 = vmatprep.subr.bf16.mxu0 %v5917
        %6419 = vmatpush1.bf16.msra.mxu0 %v5916
        %6420 = vmatprep.subr.bf16.mxu0 %v5921
        %6421 = vmatpush1.bf16.msra.mxu0 %v5920
        %6422 = vmatprep.subr.bf16.mxu0 %v5925
        %6423 = vmatpush1.bf16.msra.mxu0 %v5924
        %6424 = vmatprep.subr.bf16.mxu0 %v5929
        %6425 = vmatpush1.bf16.msra.mxu0 %v5928
        %6426 = vmatprep.subr.bf16.mxu0 %v5933
        %6427 = vmatpush1.bf16.msra.mxu0 %v5932
        %6428 = vmatprep.subr.bf16.mxu0 %v5937
        %6429 = vmatpush1.bf16.msra.mxu0 %v5936
        %6430 = vmatprep.subr.bf16.mxu0 %v5941
        %6431 = vmatpush1.bf16.msra.mxu0 %v5940
        %6432 = vmatprep.subr.bf16.mxu0 %v5945
        %6433 = vmatpush1.bf16.msra.mxu0 %v5944
        %6434 = vmatprep.subr.bf16.mxu0 %v5949
        %6435 = vmatpush1.bf16.msra.mxu0 %v5948
        %6436 = vmatprep.subr.bf16.mxu0 %v5953
        %6437 = vmatpush1.bf16.msra.mxu0 %v5952
        %6438 = vmatprep.subr.bf16.mxu0 %v5957
        %6439 = vmatpush1.bf16.msra.mxu0 %v5956
        %6440 = vmatprep.mubr.bf16.mxu0 %v4843
        %6441 = vmatmul.mubr.bf16.gmra.mrb[0].mxu0 %v4842
        %v6442 = vpop.f32.mrb[0].mxu0
        %v6443 = vadd.f32 %v5111, %v6442
        %v6444 = vpop.f32.mrb[0].mxu0
        %v6445 = vadd.f32 %v5115, %v6444
        %v6446 = vpop.f32.mrb[0].mxu0
        %v6447 = vpop.f32.mrb[0].mxu0
        %6448 = vdwg.mxu0
        %6449 = vmatprep.subr.bf16.mxu0 %v5961
        %6450 = vmatpush1.bf16.msra.mxu0 %v5960
        %6451 = vmatprep.subr.bf16.mxu0 %v5965
        %6452 = vmatpush1.bf16.msra.mxu0 %v5964
        %6453 = vmatprep.subr.bf16.mxu0 %v5969
        %6454 = vmatpush1.bf16.msra.mxu0 %v5968
        %6455 = vmatprep.subr.bf16.mxu0 %v5973
        %6456 = vmatpush1.bf16.msra.mxu0 %v5972
        %6457 = vmatprep.subr.bf16.mxu0 %v5977
        %6458 = vmatpush1.bf16.msra.mxu0 %v5976
        %6459 = vmatprep.subr.bf16.mxu0 %v5981
        %6460 = vmatpush1.bf16.msra.mxu0 %v5980
        %6461 = vmatprep.subr.bf16.mxu0 %v5985
        %6462 = vmatpush1.bf16.msra.mxu0 %v5984
        %6463 = vmatprep.subr.bf16.mxu0 %v5989
        %6464 = vmatpush1.bf16.msra.mxu0 %v5988
        %6465 = vmatprep.subr.bf16.mxu0 %v5993
        %6466 = vmatpush1.bf16.msra.mxu0 %v5992
        %6467 = vmatprep.subr.bf16.mxu0 %v5997
        %6468 = vmatpush1.bf16.msra.mxu0 %v5996
        %6469 = vmatprep.subr.bf16.mxu0 %v6001
        %6470 = vmatpush1.bf16.msra.mxu0 %v6000
        %6471 = vmatprep.subr.bf16.mxu0 %v6005
        %6472 = vmatpush1.bf16.msra.mxu0 %v6004
        %6473 = vmatprep.subr.bf16.mxu0 %v6009
        %6474 = vmatpush1.bf16.msra.mxu0 %v6008
        %6475 = vmatprep.subr.bf16.mxu0 %v6013
        %6476 = vmatpush1.bf16.msra.mxu0 %v6012
        %6477 = vmatprep.subr.bf16.mxu0 %v6017
        %6478 = vmatpush1.bf16.msra.mxu0 %v6016
        %6479 = vmatprep.subr.bf16.mxu0 %v6021
        %6480 = vmatpush1.bf16.msra.mxu0 %v6020
        %6481 = vmatprep.mubr.bf16.mxu0 %v4845
        %6482 = vmatmul.mubr.bf16.gmra.mrb[0].mxu0 %v4844
        %v6483 = vpop.f32.mrb[0].mxu0
        %v6484 = vadd.f32 %v6443, %v6483
        %v6485 = vpop.f32.mrb[0].mxu0
        %v6486 = vadd.f32 %v6445, %v6485
        %v6487 = vpop.f32.mrb[0].mxu0
        %v6488 = vpop.f32.mrb[0].mxu0
        %6489 = vdwg.mxu0
        %6490 = vmatprep.subr.bf16.mxu0 %v6025
        %6491 = vmatpush1.bf16.msra.mxu0 %v6024
        %6492 = vmatprep.subr.bf16.mxu0 %v6029
        %6493 = vmatpush1.bf16.msra.mxu0 %v6028
        %6494 = vmatprep.subr.bf16.mxu0 %v6033
        %6495 = vmatpush1.bf16.msra.mxu0 %v6032
        %6496 = vmatprep.subr.bf16.mxu0 %v6037
        %6497 = vmatpush1.bf16.msra.mxu0 %v6036
        %6498 = vmatprep.subr.bf16.mxu0 %v6041
        %6499 = vmatpush1.bf16.msra.mxu0 %v6040
        %6500 = vmatprep.subr.bf16.mxu0 %v6045
        %6501 = vmatpush1.bf16.msra.mxu0 %v6044
        %6502 = vmatprep.subr.bf16.mxu0 %v6049
        %6503 = vmatpush1.bf16.msra.mxu0 %v6048
        %6504 = vmatprep.subr.bf16.mxu0 %v6053
        %6505 = vmatpush1.bf16.msra.mxu0 %v6052
        %6506 = vmatprep.subr.bf16.mxu0 %v6057
        %6507 = vmatpush1.bf16.msra.mxu0 %v6056
        %6508 = vmatprep.subr.bf16.mxu0 %v6061
        %6509 = vmatpush1.bf16.msra.mxu0 %v6060
        %6510 = vmatprep.subr.bf16.mxu0 %v6065
        %6511 = vmatpush1.bf16.msra.mxu0 %v6064
        %6512 = vmatprep.subr.bf16.mxu0 %v6069
        %6513 = vmatpush1.bf16.msra.mxu0 %v6068
        %6514 = vmatprep.subr.bf16.mxu0 %v6073
        %6515 = vmatpush1.bf16.msra.mxu0 %v6072
        %6516 = vmatprep.subr.bf16.mxu0 %v6077
        %6517 = vmatpush1.bf16.msra.mxu0 %v6076
        %6518 = vmatprep.subr.bf16.mxu0 %v6081
        %6519 = vmatpush1.bf16.msra.mxu0 %v6080
        %6520 = vmatprep.subr.bf16.mxu0 %v6085
        %6521 = vmatpush1.bf16.msra.mxu0 %v6084
        %6522 = vmatprep.mubr.bf16.mxu0 %v4847
        %6523 = vmatmul.mubr.bf16.gmra.mrb[0].mxu0 %v4846
        %v6524 = vpop.f32.mrb[0].mxu0
        %v6525 = vadd.f32 %v6484, %v6524
        %v6526 = vpop.f32.mrb[0].mxu0
        %v6527 = vadd.f32 %v6486, %v6526
        %v6528 = vpop.f32.mrb[0].mxu0
        %v6529 = vpop.f32.mrb[0].mxu0
        %6530 = vdwg.mxu0
        %6531 = vmatprep.subr.bf16.mxu0 %v6089
        %6532 = vmatpush1.bf16.msra.mxu0 %v6088
        %6533 = vmatprep.subr.bf16.mxu0 %v6093
        %6534 = vmatpush1.bf16.msra.mxu0 %v6092
        %6535 = vmatprep.subr.bf16.mxu0 %v6097
        %6536 = vmatpush1.bf16.msra.mxu0 %v6096
        %6537 = vmatprep.subr.bf16.mxu0 %v6101
        %6538 = vmatpush1.bf16.msra.mxu0 %v6100
        %6539 = vmatprep.subr.bf16.mxu0 %v6105
        %6540 = vmatpush1.bf16.msra.mxu0 %v6104
        %6541 = vmatprep.subr.bf16.mxu0 %v6109
        %6542 = vmatpush1.bf16.msra.mxu0 %v6108
        %6543 = vmatprep.subr.bf16.mxu0 %v6113
        %6544 = vmatpush1.bf16.msra.mxu0 %v6112
        %6545 = vmatprep.subr.bf16.mxu0 %v6117
        %6546 = vmatpush1.bf16.msra.mxu0 %v6116
        %6547 = vmatprep.subr.bf16.mxu0 %v6121
        %6548 = vmatpush1.bf16.msra.mxu0 %v6120
        %6549 = vmatprep.subr.bf16.mxu0 %v6125
        %6550 = vmatpush1.bf16.msra.mxu0 %v6124
        %6551 = vmatprep.subr.bf16.mxu0 %v6129
        %6552 = vmatpush1.bf16.msra.mxu0 %v6128
        %6553 = vmatprep.subr.bf16.mxu0 %v6133
        %6554 = vmatpush1.bf16.msra.mxu0 %v6132
        %6555 = vmatprep.subr.bf16.mxu0 %v6137
        %6556 = vmatpush1.bf16.msra.mxu0 %v6136
        %6557 = vmatprep.subr.bf16.mxu0 %v6141
        %6558 = vmatpush1.bf16.msra.mxu0 %v6140
        %6559 = vmatprep.subr.bf16.mxu0 %v6145
        %6560 = vmatpush1.bf16.msra.mxu0 %v6144
        %6561 = vmatprep.subr.bf16.mxu0 %v6149
        %6562 = vmatpush1.bf16.msra.mxu0 %v6148
        %6563 = vmatprep.mubr.bf16.mxu0 %v4849
        %6564 = vmatmul.mubr.bf16.gmra.mrb[0].mxu0 %v4848
        %v6565 = vpop.f32.mrb[0].mxu0
        %v6566 = vadd.f32 %v6525, %v6565
        %v6567 = vpop.f32.mrb[0].mxu0
        %v6568 = vadd.f32 %v6527, %v6567
        %v6569 = vpop.f32.mrb[0].mxu0
        %v6570 = vpop.f32.mrb[0].mxu0
        %6571 = vdwg.mxu0
        %6572 = vmatprep.subr.bf16.mxu0 %v5899
        %6573 = vmatpush1.bf16.msra.mxu0 %v5898
        %6574 = vmatprep.subr.bf16.mxu0 %v5903
        %6575 = vmatpush1.bf16.msra.mxu0 %v5902
        %6576 = vmatprep.subr.bf16.mxu0 %v5907
        %6577 = vmatpush1.bf16.msra.mxu0 %v5906
        %6578 = vmatprep.subr.bf16.mxu0 %v5911
        %6579 = vmatpush1.bf16.msra.mxu0 %v5910
        %6580 = vmatprep.subr.bf16.mxu0 %v5915
        %6581 = vmatpush1.bf16.msra.mxu0 %v5914
        %6582 = vmatprep.subr.bf16.mxu0 %v5919
        %6583 = vmatpush1.bf16.msra.mxu0 %v5918
        %6584 = vmatprep.subr.bf16.mxu0 %v5923
        %6585 = vmatpush1.bf16.msra.mxu0 %v5922
        %6586 = vmatprep.subr.bf16.mxu0 %v5927
        %6587 = vmatpush1.bf16.msra.mxu0 %v5926
        %6588 = vmatprep.subr.bf16.mxu0 %v5931
        %6589 = vmatpush1.bf16.msra.mxu0 %v5930
        %6590 = vmatprep.subr.bf16.mxu0 %v5935
        %6591 = vmatpush1.bf16.msra.mxu0 %v5934
        %6592 = vmatprep.subr.bf16.mxu0 %v5939
        %6593 = vmatpush1.bf16.msra.mxu0 %v5938
        %6594 = vmatprep.subr.bf16.mxu0 %v5943
        %6595 = vmatpush1.bf16.msra.mxu0 %v5942
        %6596 = vmatprep.subr.bf16.mxu0 %v5947
        %6597 = vmatpush1.bf16.msra.mxu0 %v5946
        %6598 = vmatprep.subr.bf16.mxu0 %v5951
        %6599 = vmatpush1.bf16.msra.mxu0 %v5950
        %6600 = vmatprep.subr.bf16.mxu0 %v5955
        %6601 = vmatpush1.bf16.msra.mxu0 %v5954
        %6602 = vmatprep.subr.bf16.mxu0 %v5959
        %6603 = vmatpush1.bf16.msra.mxu0 %v5958
        %6604 = vmatprep.mubr.bf16.mxu0 %v4843
        %6605 = vmatmul.mubr.bf16.gmra.mrb[0].mxu0 %v4842
        %v6606 = vpop.f32.mrb[0].mxu0
        %v6607 = vadd.f32 %v5119, %v6606
        %v6608 = vpop.f32.mrb[0].mxu0
        %v6609 = vadd.f32 %v5123, %v6608
        %v6610 = vpop.f32.mrb[0].mxu0
        %v6611 = vpop.f32.mrb[0].mxu0
        %6612 = vdwg.mxu0
        %6613 = vmatprep.subr.bf16.mxu0 %v5963
        %6614 = vmatpush1.bf16.msra.mxu0 %v5962
        %6615 = vmatprep.subr.bf16.mxu0 %v5967
        %6616 = vmatpush1.bf16.msra.mxu0 %v5966
        %6617 = vmatprep.subr.bf16.mxu0 %v5971
        %6618 = vmatpush1.bf16.msra.mxu0 %v5970
        %6619 = vmatprep.subr.bf16.mxu0 %v5975
        %6620 = vmatpush1.bf16.msra.mxu0 %v5974
        %6621 = vmatprep.subr.bf16.mxu0 %v5979
        %6622 = vmatpush1.bf16.msra.mxu0 %v5978
        %6623 = vmatprep.subr.bf16.mxu0 %v5983
        %6624 = vmatpush1.bf16.msra.mxu0 %v5982
        %6625 = vmatprep.subr.bf16.mxu0 %v5987
        %6626 = vmatpush1.bf16.msra.mxu0 %v5986
        %6627 = vmatprep.subr.bf16.mxu0 %v5991
        %6628 = vmatpush1.bf16.msra.mxu0 %v5990
        %6629 = vmatprep.subr.bf16.mxu0 %v5995
        %6630 = vmatpush1.bf16.msra.mxu0 %v5994
        %6631 = vmatprep.subr.bf16.mxu0 %v5999
        %6632 = vmatpush1.bf16.msra.mxu0 %v5998
        %6633 = vmatprep.subr.bf16.mxu0 %v6003
        %6634 = vmatpush1.bf16.msra.mxu0 %v6002
        %6635 = vmatprep.subr.bf16.mxu0 %v6007
        %6636 = vmatpush1.bf16.msra.mxu0 %v6006
        %6637 = vmatprep.subr.bf16.mxu0 %v6011
        %6638 = vmatpush1.bf16.msra.mxu0 %v6010
        %6639 = vmatprep.subr.bf16.mxu0 %v6015
        %6640 = vmatpush1.bf16.msra.mxu0 %v6014
        %6641 = vmatprep.subr.bf16.mxu0 %v6019
        %6642 = vmatpush1.bf16.msra.mxu0 %v6018
        %6643 = vmatprep.subr.bf16.mxu0 %v6023
        %6644 = vmatpush1.bf16.msra.mxu0 %v6022
        %6645 = vmatprep.mubr.bf16.mxu0 %v4845
        %6646 = vmatmul.mubr.bf16.gmra.mrb[0].mxu0 %v4844
        %v6647 = vpop.f32.mrb[0].mxu0
        %v6648 = vadd.f32 %v6607, %v6647
        %v6649 = vpop.f32.mrb[0].mxu0
        %v6650 = vadd.f32 %v6609, %v6649
        %v6651 = vpop.f32.mrb[0].mxu0
        %v6652 = vpop.f32.mrb[0].mxu0
        %6653 = vdwg.mxu0
        %6654 = vmatprep.subr.bf16.mxu0 %v6027
        %6655 = vmatpush1.bf16.msra.mxu0 %v6026
        %6656 = vmatprep.subr.bf16.mxu0 %v6031
        %6657 = vmatpush1.bf16.msra.mxu0 %v6030
        %6658 = vmatprep.subr.bf16.mxu0 %v6035
        %6659 = vmatpush1.bf16.msra.mxu0 %v6034
        %6660 = vmatprep.subr.bf16.mxu0 %v6039
        %6661 = vmatpush1.bf16.msra.mxu0 %v6038
        %6662 = vmatprep.subr.bf16.mxu0 %v6043
        %6663 = vmatpush1.bf16.msra.mxu0 %v6042
        %6664 = vmatprep.subr.bf16.mxu0 %v6047
        %6665 = vmatpush1.bf16.msra.mxu0 %v6046
        %6666 = vmatprep.subr.bf16.mxu0 %v6051
        %6667 = vmatpush1.bf16.msra.mxu0 %v6050
        %6668 = vmatprep.subr.bf16.mxu0 %v6055
        %6669 = vmatpush1.bf16.msra.mxu0 %v6054
        %6670 = vmatprep.subr.bf16.mxu0 %v6059
        %6671 = vmatpush1.bf16.msra.mxu0 %v6058
        %6672 = vmatprep.subr.bf16.mxu0 %v6063
        %6673 = vmatpush1.bf16.msra.mxu0 %v6062
        %6674 = vmatprep.subr.bf16.mxu0 %v6067
        %6675 = vmatpush1.bf16.msra.mxu0 %v6066
        %6676 = vmatprep.subr.bf16.mxu0 %v6071
        %6677 = vmatpush1.bf16.msra.mxu0 %v6070
        %6678 = vmatprep.subr.bf16.mxu0 %v6075
        %6679 = vmatpush1.bf16.msra.mxu0 %v6074
        %6680 = vmatprep.subr.bf16.mxu0 %v6079
        %6681 = vmatpush1.bf16.msra.mxu0 %v6078
        %6682 = vmatprep.subr.bf16.mxu0 %v6083
        %6683 = vmatpush1.bf16.msra.mxu0 %v6082
        %6684 = vmatprep.subr.bf16.mxu0 %v6087
        %6685 = vmatpush1.bf16.msra.mxu0 %v6086
        %6686 = vmatprep.mubr.bf16.mxu0 %v4847
        %6687 = vmatmul.mubr.bf16.gmra.mrb[0].mxu0 %v4846
        %v6688 = vpop.f32.mrb[0].mxu0
        %v6689 = vadd.f32 %v6648, %v6688
        %v6690 = vpop.f32.mrb[0].mxu0
        %v6691 = vadd.f32 %v6650, %v6690
        %v6692 = vpop.f32.mrb[0].mxu0
        %v6693 = vpop.f32.mrb[0].mxu0
        %6694 = vdwg.mxu0
        %6695 = vmatprep.subr.bf16.mxu0 %v6091
        %6696 = vmatpush1.bf16.msra.mxu0 %v6090
        %6697 = vmatprep.subr.bf16.mxu0 %v6095
        %6698 = vmatpush1.bf16.msra.mxu0 %v6094
        %6699 = vmatprep.subr.bf16.mxu0 %v6099
        %6700 = vmatpush1.bf16.msra.mxu0 %v6098
        %6701 = vmatprep.subr.bf16.mxu0 %v6103
        %6702 = vmatpush1.bf16.msra.mxu0 %v6102
        %6703 = vmatprep.subr.bf16.mxu0 %v6107
        %6704 = vmatpush1.bf16.msra.mxu0 %v6106
        %6705 = vmatprep.subr.bf16.mxu0 %v6111
        %6706 = vmatpush1.bf16.msra.mxu0 %v6110
        %6707 = vmatprep.subr.bf16.mxu0 %v6115
        %6708 = vmatpush1.bf16.msra.mxu0 %v6114
        %6709 = vmatprep.subr.bf16.mxu0 %v6119
        %6710 = vmatpush1.bf16.msra.mxu0 %v6118
        %6711 = vmatprep.subr.bf16.mxu0 %v6123
        %6712 = vmatpush1.bf16.msra.mxu0 %v6122
        %6713 = vmatprep.subr.bf16.mxu0 %v6127
        %6714 = vmatpush1.bf16.msra.mxu0 %v6126
        %6715 = vmatprep.subr.bf16.mxu0 %v6131
        %6716 = vmatpush1.bf16.msra.mxu0 %v6130
        %6717 = vmatprep.subr.bf16.mxu0 %v6135
        %6718 = vmatpush1.bf16.msra.mxu0 %v6134
        %6719 = vmatprep.subr.bf16.mxu0 %v6139
        %6720 = vmatpush1.bf16.msra.mxu0 %v6138
        %6721 = vmatprep.subr.bf16.mxu0 %v6143
        %6722 = vmatpush1.bf16.msra.mxu0 %v6142
        %6723 = vmatprep.subr.bf16.mxu0 %v6147
        %6724 = vmatpush1.bf16.msra.mxu0 %v6146
        %6725 = vmatprep.subr.bf16.mxu0 %v6151
        %6726 = vmatpush1.bf16.msra.mxu0 %v6150
        %6727 = vmatprep.mubr.bf16.mxu0 %v4849
        %6728 = vmatmul.mubr.bf16.gmra.mrb[0].mxu0 %v4848
        %v6729 = vpop.f32.mrb[0].mxu0
        %v6730 = vadd.f32 %v6689, %v6729
        %v6731 = vpop.f32.mrb[0].mxu0
        %v6732 = vadd.f32 %v6691, %v6731
        %v6733 = vpop.f32.mrb[0].mxu0
        %v6734 = vpop.f32.mrb[0].mxu0
        %6735 = vdwg.mxu0
        %v6736 = vmax.f32 %v6566, 0.0
        %v6737 = vmax.f32 %v6568, 0.0
        %v6738 = vmax.f32 %v6730, 0.0
        %v6739 = vmax.f32 %v6732, 0.0
        %v6740 = vpack.c.bf16 %v6736, %v6736
        %v6741 = vpack.c.bf16 %v6737, %v6737
        %v6742 = vpack.c.bf16 %v6738, %v6738
        %v6743 = vpack.c.bf16 %v6739, %v6739
        %v6744 = vld [vmem:[#allocation14] sm:$0xf]
        %v6745 = vld [vmem:[#allocation14 + $0x4] sm:$0xf]
        %v6746 = vld [vmem:[#allocation14 + $0x8] sm:$0xf]
        %v6747 = vld [vmem:[#allocation14 + $0xc] sm:$0xf]
        %v6748 = vld [vmem:[#allocation14 + $0x10] sm:$0xf]
        %v6749 = vld [vmem:[#allocation14 + $0x14] sm:$0xf]
        %v6750 = vld [vmem:[#allocation14 + $0x18] sm:$0xf]
        %v6751 = vld [vmem:[#allocation14 + $0x1c] sm:$0xf]
        %v6752 = vld [vmem:[#allocation14 + $0x20] sm:$0xf]
        %v6753 = vld [vmem:[#allocation14 + $0x24] sm:$0xf]
        %v6754 = vld [vmem:[#allocation14 + $0x28] sm:$0xf]
        %v6755 = vld [vmem:[#allocation14 + $0x2c] sm:$0xf]
        %v6756 = vld [vmem:[#allocation14 + $0x30] sm:$0xf]
        %v6757 = vld [vmem:[#allocation14 + $0x34] sm:$0xf]
        %v6758 = vld [vmem:[#allocation14 + $0x38] sm:$0xf]
        %v6759 = vld [vmem:[#allocation14 + $0x3c] sm:$0xf]
        %v6760 = vld [vmem:[#allocation14 + $0x40] sm:$0xf]
        %v6761 = vld [vmem:[#allocation14 + $0x44] sm:$0xf]
        %v6762 = vld [vmem:[#allocation14 + $0x48] sm:$0xf]
        %v6763 = vld [vmem:[#allocation14 + $0x4c] sm:$0xf]
        %v6764 = vld [vmem:[#allocation14 + $0x50] sm:$0xf]
        %v6765 = vld [vmem:[#allocation14 + $0x54] sm:$0xf]
        %v6766 = vld [vmem:[#allocation14 + $0x58] sm:$0xf]
        %v6767 = vld [vmem:[#allocation14 + $0x5c] sm:$0xf]
        %v6768 = vld [vmem:[#allocation14 + $0x60] sm:$0xf]
        %v6769 = vld [vmem:[#allocation14 + $0x64] sm:$0xf]
        %v6770 = vld [vmem:[#allocation14 + $0x68] sm:$0xf]
        %v6771 = vld [vmem:[#allocation14 + $0x6c] sm:$0xf]
        %v6772 = vld [vmem:[#allocation14 + $0x70] sm:$0xf]
        %v6773 = vld [vmem:[#allocation14 + $0x74] sm:$0xf]
        %v6774 = vld [vmem:[#allocation14 + $0x78] sm:$0xf]
        %v6775 = vld [vmem:[#allocation14 + $0x7c] sm:$0xf]
        %v6776 = vld [vmem:[#allocation14 + $0x80] sm:$0xf]
        %v6777 = vld [vmem:[#allocation14 + $0x84] sm:$0xf]
        %v6778 = vld [vmem:[#allocation14 + $0x88] sm:$0xf]
        %v6779 = vld [vmem:[#allocation14 + $0x8c] sm:$0xf]
        %v6780 = vld [vmem:[#allocation14 + $0x90] sm:$0xf]
        %v6781 = vld [vmem:[#allocation14 + $0x94] sm:$0xf]
        %v6782 = vld [vmem:[#allocation14 + $0x98] sm:$0xf]
        %v6783 = vld [vmem:[#allocation14 + $0x9c] sm:$0xf]
        %v6784 = vld [vmem:[#allocation14 + $0xa0] sm:$0xf]
        %v6785 = vld [vmem:[#allocation14 + $0xa4] sm:$0xf]
        %v6786 = vld [vmem:[#allocation14 + $0xa8] sm:$0xf]
        %v6787 = vld [vmem:[#allocation14 + $0xac] sm:$0xf]
        %v6788 = vld [vmem:[#allocation14 + $0xb0] sm:$0xf]
        %v6789 = vld [vmem:[#allocation14 + $0xb4] sm:$0xf]
        %v6790 = vld [vmem:[#allocation14 + $0xb8] sm:$0xf]
        %v6791 = vld [vmem:[#allocation14 + $0xbc] sm:$0xf]
        %v6792 = vld [vmem:[#allocation14 + $0xc0] sm:$0xf]
        %v6793 = vld [vmem:[#allocation14 + $0xc4] sm:$0xf]
        %v6794 = vld [vmem:[#allocation14 + $0xc8] sm:$0xf]
        %v6795 = vld [vmem:[#allocation14 + $0xcc] sm:$0xf]
        %v6796 = vld [vmem:[#allocation14 + $0xd0] sm:$0xf]
        %v6797 = vld [vmem:[#allocation14 + $0xd4] sm:$0xf]
        %v6798 = vld [vmem:[#allocation14 + $0xd8] sm:$0xf]
        %v6799 = vld [vmem:[#allocation14 + $0xdc] sm:$0xf]
        %v6800 = vld [vmem:[#allocation14 + $0xe0] sm:$0xf]
        %v6801 = vld [vmem:[#allocation14 + $0xe4] sm:$0xf]
        %v6802 = vld [vmem:[#allocation14 + $0xe8] sm:$0xf]
        %v6803 = vld [vmem:[#allocation14 + $0xec] sm:$0xf]
        %v6804 = vld [vmem:[#allocation14 + $0xf0] sm:$0xf]
        %v6805 = vld [vmem:[#allocation14 + $0xf4] sm:$0xf]
        %v6806 = vld [vmem:[#allocation14 + $0xf8] sm:$0xf]
        %v6807 = vld [vmem:[#allocation14 + $0xfc] sm:$0xf]
        %v6808 = vld [vmem:[#allocation16] sm:$0x1]
        %v6810 = vlaneseq
        %v6811 = vshrl.u32 %v6810, 7
        %v6812 = vsub.s32 0, %v6811
        %v6813 = vrot.slane %v6808, %v6812
        %v6879 = vunpack.c.l.b16 %v6744
        %v6880 = vunpack.c.l.b16 %v6745
        %v6881 = vunpack.c.l.b16 %v6746
        %v6882 = vunpack.c.l.b16 %v6747
        %v6883 = vunpack.c.l.b16 %v6748
        %v6884 = vunpack.c.l.b16 %v6749
        %v6885 = vunpack.c.l.b16 %v6750
        %v6886 = vunpack.c.l.b16 %v6751
        %v6887 = vunpack.c.l.b16 %v6752
        %v6888 = vunpack.c.l.b16 %v6753
        %v6889 = vunpack.c.l.b16 %v6754
        %v6890 = vunpack.c.l.b16 %v6755
        %v6891 = vunpack.c.l.b16 %v6756
        %v6892 = vunpack.c.l.b16 %v6757
        %v6893 = vunpack.c.l.b16 %v6758
        %v6894 = vunpack.c.l.b16 %v6759
        %v6895 = vunpack.c.l.b16 %v6760
        %v6896 = vunpack.c.l.b16 %v6761
        %v6897 = vunpack.c.l.b16 %v6762
        %v6898 = vunpack.c.l.b16 %v6763
        %v6899 = vunpack.c.l.b16 %v6764
        %v6900 = vunpack.c.l.b16 %v6765
        %v6901 = vunpack.c.l.b16 %v6766
        %v6902 = vunpack.c.l.b16 %v6767
        %v6903 = vunpack.c.l.b16 %v6768
        %v6904 = vunpack.c.l.b16 %v6769
        %v6905 = vunpack.c.l.b16 %v6770
        %v6906 = vunpack.c.l.b16 %v6771
        %v6907 = vunpack.c.l.b16 %v6772
        %v6908 = vunpack.c.l.b16 %v6773
        %v6909 = vunpack.c.l.b16 %v6774
        %v6910 = vunpack.c.l.b16 %v6775
        %v6911 = vunpack.c.l.b16 %v6776
        %v6912 = vunpack.c.l.b16 %v6777
        %v6913 = vunpack.c.l.b16 %v6778
        %v6914 = vunpack.c.l.b16 %v6779
        %v6915 = vunpack.c.l.b16 %v6780
        %v6916 = vunpack.c.l.b16 %v6781
        %v6917 = vunpack.c.l.b16 %v6782
        %v6918 = vunpack.c.l.b16 %v6783
        %v6919 = vunpack.c.l.b16 %v6784
        %v6920 = vunpack.c.l.b16 %v6785
        %v6921 = vunpack.c.l.b16 %v6786
        %v6922 = vunpack.c.l.b16 %v6787
        %v6923 = vunpack.c.l.b16 %v6788
        %v6924 = vunpack.c.l.b16 %v6789
        %v6925 = vunpack.c.l.b16 %v6790
        %v6926 = vunpack.c.l.b16 %v6791
        %v6927 = vunpack.c.l.b16 %v6792
        %v6928 = vunpack.c.l.b16 %v6793
        %v6929 = vunpack.c.l.b16 %v6794
        %v6930 = vunpack.c.l.b16 %v6795
        %v6931 = vunpack.c.l.b16 %v6796
        %v6932 = vunpack.c.l.b16 %v6797
        %v6933 = vunpack.c.l.b16 %v6798
        %v6934 = vunpack.c.l.b16 %v6799
        %v6935 = vunpack.c.l.b16 %v6800
        %v6936 = vunpack.c.l.b16 %v6801
        %v6937 = vunpack.c.l.b16 %v6802
        %v6938 = vunpack.c.l.b16 %v6803
        %v6939 = vunpack.c.l.b16 %v6804
        %v6940 = vunpack.c.l.b16 %v6805
        %v6941 = vunpack.c.l.b16 %v6806
        %v6942 = vunpack.c.l.b16 %v6807
        %v6943 = vpack.c.b16 %v6880, %v6879
        %v6944 = vpack.c.b16 %v6882, %v6881
        %v6945 = vpack.c.b16 %v6884, %v6883
        %v6946 = vpack.c.b16 %v6886, %v6885
        %v6947 = vpack.c.b16 %v6888, %v6887
        %v6948 = vpack.c.b16 %v6890, %v6889
        %v6949 = vpack.c.b16 %v6892, %v6891
        %v6950 = vpack.c.b16 %v6894, %v6893
        %v6951 = vpack.c.b16 %v6896, %v6895
        %v6952 = vpack.c.b16 %v6898, %v6897
        %v6953 = vpack.c.b16 %v6900, %v6899
        %v6954 = vpack.c.b16 %v6902, %v6901
        %v6955 = vpack.c.b16 %v6904, %v6903
        %v6956 = vpack.c.b16 %v6906, %v6905
        %v6957 = vpack.c.b16 %v6908, %v6907
        %v6958 = vpack.c.b16 %v6910, %v6909
        %v6959 = vpack.c.b16 %v6912, %v6911
        %v6960 = vpack.c.b16 %v6914, %v6913
        %v6961 = vpack.c.b16 %v6916, %v6915
        %v6962 = vpack.c.b16 %v6918, %v6917
        %v6963 = vpack.c.b16 %v6920, %v6919
        %v6964 = vpack.c.b16 %v6922, %v6921
        %v6965 = vpack.c.b16 %v6924, %v6923
        %v6966 = vpack.c.b16 %v6926, %v6925
        %v6967 = vpack.c.b16 %v6928, %v6927
        %v6968 = vpack.c.b16 %v6930, %v6929
        %v6969 = vpack.c.b16 %v6932, %v6931
        %v6970 = vpack.c.b16 %v6934, %v6933
        %v6971 = vpack.c.b16 %v6936, %v6935
        %v6972 = vpack.c.b16 %v6938, %v6937
        %v6973 = vpack.c.b16 %v6940, %v6939
        %v6974 = vpack.c.b16 %v6942, %v6941
        %7007 = vmatprep.subr.bf16.mxu0 0
        %7008 = vmatpush1.bf16.msra.mxu0 %v6943
        %7009 = vmatprep.subr.bf16.mxu0 0
        %7010 = vmatpush1.bf16.msra.mxu0 %v6944
        %7011 = vmatprep.subr.bf16.mxu0 0
        %7012 = vmatpush1.bf16.msra.mxu0 %v6945
        %7013 = vmatprep.subr.bf16.mxu0 0
        %7014 = vmatpush1.bf16.msra.mxu0 %v6946
        %7015 = vmatprep.subr.bf16.mxu0 0
        %7016 = vmatpush1.bf16.msra.mxu0 %v6947
        %7017 = vmatprep.subr.bf16.mxu0 0
        %7018 = vmatpush1.bf16.msra.mxu0 %v6948
        %7019 = vmatprep.subr.bf16.mxu0 0
        %7020 = vmatpush1.bf16.msra.mxu0 %v6949
        %7021 = vmatprep.subr.bf16.mxu0 0
        %7022 = vmatpush1.bf16.msra.mxu0 %v6950
        %7023 = vmatprep.subr.bf16.mxu0 0
        %7024 = vmatpush1.bf16.msra.mxu0 %v6951
        %7025 = vmatprep.subr.bf16.mxu0 0
        %7026 = vmatpush1.bf16.msra.mxu0 %v6952
        %7027 = vmatprep.subr.bf16.mxu0 0
        %7028 = vmatpush1.bf16.msra.mxu0 %v6953
        %7029 = vmatprep.subr.bf16.mxu0 0
        %7030 = vmatpush1.bf16.msra.mxu0 %v6954
        %7031 = vmatprep.subr.bf16.mxu0 0
        %7032 = vmatpush1.bf16.msra.mxu0 %v6955
        %7033 = vmatprep.subr.bf16.mxu0 0
        %7034 = vmatpush1.bf16.msra.mxu0 %v6956
        %7035 = vmatprep.subr.bf16.mxu0 0
        %7036 = vmatpush1.bf16.msra.mxu0 %v6957
        %7037 = vmatprep.subr.bf16.mxu0 0
        %7038 = vmatpush1.bf16.msra.mxu0 %v6958
        %7039 = vmatprep.mubr.bf16.mxu0 %v6741
        %7040 = vmatmul.mubr.bf16.gmra.mrb[0].mxu0 %v6740
        %v7041 = vpop.f32.mrb[0].mxu0
        %v7042 = vadd.f32 %v6813, %v7041
        %v7043 = vpop.f32.mrb[0].mxu0
        %v7044 = vpop.f32.mrb[0].mxu0
        %v7045 = vpop.f32.mrb[0].mxu0
        %7046 = vdwg.mxu0
        %7047 = vmatprep.subr.bf16.mxu0 0
        %7048 = vmatpush1.bf16.msra.mxu0 %v6959
        %7049 = vmatprep.subr.bf16.mxu0 0
        %7050 = vmatpush1.bf16.msra.mxu0 %v6960
        %7051 = vmatprep.subr.bf16.mxu0 0
        %7052 = vmatpush1.bf16.msra.mxu0 %v6961
        %7053 = vmatprep.subr.bf16.mxu0 0
        %7054 = vmatpush1.bf16.msra.mxu0 %v6962
        %7055 = vmatprep.subr.bf16.mxu0 0
        %7056 = vmatpush1.bf16.msra.mxu0 %v6963
        %7057 = vmatprep.subr.bf16.mxu0 0
        %7058 = vmatpush1.bf16.msra.mxu0 %v6964
        %7059 = vmatprep.subr.bf16.mxu0 0
        %7060 = vmatpush1.bf16.msra.mxu0 %v6965
        %7061 = vmatprep.subr.bf16.mxu0 0
        %7062 = vmatpush1.bf16.msra.mxu0 %v6966
        %7063 = vmatprep.subr.bf16.mxu0 0
        %7064 = vmatpush1.bf16.msra.mxu0 %v6967
        %7065 = vmatprep.subr.bf16.mxu0 0
        %7066 = vmatpush1.bf16.msra.mxu0 %v6968
        %7067 = vmatprep.subr.bf16.mxu0 0
        %7068 = vmatpush1.bf16.msra.mxu0 %v6969
        %7069 = vmatprep.subr.bf16.mxu0 0
        %7070 = vmatpush1.bf16.msra.mxu0 %v6970
        %7071 = vmatprep.subr.bf16.mxu0 0
        %7072 = vmatpush1.bf16.msra.mxu0 %v6971
        %7073 = vmatprep.subr.bf16.mxu0 0
        %7074 = vmatpush1.bf16.msra.mxu0 %v6972
        %7075 = vmatprep.subr.bf16.mxu0 0
        %7076 = vmatpush1.bf16.msra.mxu0 %v6973
        %7077 = vmatprep.subr.bf16.mxu0 0
        %7078 = vmatpush1.bf16.msra.mxu0 %v6974
        %7079 = vmatprep.mubr.bf16.mxu0 %v6743
        %7080 = vmatmul.mubr.bf16.gmra.mrb[0].mxu0 %v6742
        %v7081 = vpop.f32.mrb[0].mxu0
        %v7082 = vadd.f32 %v7042, %v7081
        %v7083 = vpop.f32.mrb[0].mxu0
        %v7084 = vpop.f32.mrb[0].mxu0
        %v7085 = vpop.f32.mrb[0].mxu0
        %7086 = vdwg.mxu0
        %v7087 = vmax.f32 %v7082, 0.0
        %7088 = vst [vmem:[%s455] sm:$0xff] %v7087
        %s7089 = sand.u32 %s232, 1
        %s7090 = scalar_lea.sflag [#allocation4], %s7089
        %s7091 = sand.u32 %s232, 1
        %s7092 = smul.addr %s7091, 8
        %s7093 = scalar_lea.vmem [#allocation17], %s7092
        // Predicated region
        $region93: #{tpu_custom_call.1} parent=55 // pred_check
          %p7094 = pneg %p242
        $region94: #{tpu_custom_call.1} parent=55 // pred_check_branch
          %7096 = sbr.rel (%p7094) target = $region96
        $region95: #{tpu_custom_call.1} parent=55 // pred_region
          %s7098 = ssub.s32 128, 128
          %7099 = vsyncadd %s7090, %s7098
          %s7100 = smul.addr %s30, 128
          %s7101 = scalar_lea.hbm %s9, %s7100
          %s7103 = sshll.u32 %s7093, 4
          %s7104 = int_to_ptr.vmem [resolvable:$true] %s7103
          %7106 = dma.vmem_to_hbm [thread:$0]  %s7104, 128, %s7101, %s7090
        $region96: #{tpu_custom_call.1} parent=55 // pred_fallthru
          _
      $region56: #{tpu_custom_call.1} parent=5 // pred_fallthru
        _
      %p7107 = scmp.le.s32.totalorder 2, %s25
      // Predicated region
      $region97: #{tpu_custom_call.1} parent=5 // pred_check
        %p7108 = pneg %p7107
      $region98: #{tpu_custom_call.1} parent=5 // pred_check_branch
        %7110 = sbr.rel (%p7108) target = $region100
      $region99: #{tpu_custom_call.1} parent=5 // pred_region
        %s7111 = ssub.s32 %s25, 2
        // Predicated region
        $region101: #{tpu_custom_call.1} parent=99 // pred_check
          %p7112 = pneg %p248
        $region102: #{tpu_custom_call.1} parent=99 // pred_check_branch
          %7114 = sbr.rel (%p7112) target = $region104
        $region103: #{tpu_custom_call.1} parent=99 // pred_region
          %s7115 = sand.u32 %s233, 1
          %s7116 = scalar_lea.sflag [#allocation4], %s7115
          %s7117 = sand.u32 %s233, 1
          %s7118 = smul.addr %s7117, 8
          %s7119 = scalar_lea.vmem [#allocation17], %s7118
          %7120 = dma.done %s7116, 128
        $region104: #{tpu_custom_call.1} parent=99 // pred_fallthru
          _
      $region100: #{tpu_custom_call.1} parent=5 // pred_fallthru
        _
    $region6: #{tpu_custom_call.1} parent=1 // loop_footer
      %s29 = sadd.s32 1, %s25
    $region7: #{tpu_custom_call.1} parent=1 // loop_footer_branch
      %24 = sbr.rel target = $region3
    $region8: #{tpu_custom_call.1} parent=1 // loop_exit
      _
    %7121 = vsyncpa [#allocation3], 1
    %s7122 = scalar_lea.sflag [#allocation3], 1
    %7123 = vsyncpa %s7122, 1
    %7124 = vsyncpa [#allocation6], 1
    %7125 = vsyncpa [#allocation9], 1
    %7126 = vsyncpa [#allocation12], 1
    %7127 = vsyncpa [#allocation15], 1
    %7128 = vsyncpa [#allocation4], 1
    %s7129 = scalar_lea.sflag [#allocation4], 1
    %7130 = vsyncpa %s7129, 1

</llo_original>
